<compile_context>
chip_gen: v5e
topology: v5e:2x2
jax: 0.10.0
libtpu: 0.0.40
codegen_flags: <defaults>
</compile_context>

<pallas_src>
import math

import jax
import jax.numpy as jnp
from jax.experimental import pallas as pl
from jax.experimental.pallas import tpu as pltpu


def _round_up(x, m):
    return (x + m - 1) // m * m


def _tile(dim, prefer, align):
    return prefer if dim >= prefer else _round_up(max(dim, 1), align)


# ----------------------------------------------------------------------------
# Pallas matmul kernels: out = (lrelu?)(A) @ W + bias [+ residual]
# ----------------------------------------------------------------------------
def _make_matmul_kernel(with_residual, fuse_lrelu):
    def kernel(a_ref, w_ref, b_ref, *rest):
        if with_residual:
            r_ref, o_ref, acc_ref = rest
        else:
            o_ref, acc_ref = rest
        k = pl.program_id(2)

        @pl.when(k == 0)
        def _():
            acc_ref[...] = jnp.zeros_like(acc_ref)

        a = a_ref[...]
        if fuse_lrelu:
            a = jnp.where(a >= 0, a, 0.01 * a)   # VPU op, hidden under MXU issue
        acc_ref[...] += jnp.dot(a, w_ref[...], preferred_element_type=jnp.float32)

        @pl.when(k == pl.num_programs(2) - 1)
        def _():
            out = acc_ref[...] + b_ref[...]
            if with_residual:
                out = out + r_ref[...]
            o_ref[...] = out.astype(o_ref.dtype)

    return kernel


def matmul_bias(a, w, b, residual=None, *, fuse_lrelu=False, compute_dtype=jnp.bfloat16):
    """a: (M, K), w: (K, N), b: (N,), residual: (M, N) or None -> (M, N) f32.

    A / W tiles are cast to `compute_dtype` (bf16 for convs, f32 for DFT matmuls);
    accumulation is always f32.
    """
    M, K = a.shape
    K2, N = w.shape
    assert K == K2
    TM = _tile(M, 512, 8)
    TN = _tile(N, 512, 128)
    TK = _tile(K, 512, 128)
    Mp, Kp, Np = _round_up(M, TM), _round_up(K, TK), _round_up(N, TN)

    a_p = jnp.pad(a.astype(jnp.float32), ((0, Mp - M), (0, Kp - K))).astype(compute_dtype)
    w_p = jnp.pad(w.astype(jnp.float32), ((0, Kp - K), (0, Np - N))).astype(compute_dtype)
    b_p = jnp.pad(b.astype(jnp.float32).reshape(1, N), ((0, 0), (0, Np - N)))

    with_residual = residual is not None
    inputs = [a_p, w_p, b_p]
    in_specs = [
        pl.BlockSpec((TM, TK), lambda i, j, k: (i, k)),
        pl.BlockSpec((TK, TN), lambda i, j, k: (k, j)),
        pl.BlockSpec((1, TN), lambda i, j, k: (0, j)),
    ]
    if with_residual:
        r_p = jnp.pad(residual.astype(jnp.float32), ((0, Mp - M), (0, Np - N)))
        inputs.append(r_p)
        in_specs.append(pl.BlockSpec((TM, TN), lambda i, j, k: (i, j)))

    bytes_accessed = sum(int(x.size) * x.dtype.itemsize for x in inputs) + Mp * Np * 4
    kernel = _make_matmul_kernel(with_residual, fuse_lrelu)

    out = pl.pallas_call(
        kernel,
        out_shape=jax.ShapeDtypeStruct((Mp, Np), jnp.float32),
        grid_spec=pltpu.PrefetchScalarGridSpec(
            num_scalar_prefetch=0,
            grid=(Mp // TM, Np // TN, Kp // TK),
            in_specs=in_specs,
            out_specs=pl.BlockSpec((TM, TN), lambda i, j, k: (i, j)),
            scratch_shapes=[pltpu.VMEM((TM, TN), jnp.float32)],
        ),
        compiler_params=pltpu.CompilerParams(
            dimension_semantics=("parallel", "parallel", "arbitrary"),
            vmem_limit_bytes=32 * 1024 * 1024,
        ),
        cost_estimate=pl.CostEstimate(
            flops=2 * Mp * Np * Kp, transcendentals=0, bytes_accessed=bytes_accessed),
    )(*inputs)
    return out[:M, :N]


# ----------------------------------------------------------------------------
# Pallas elementwise kernels (tiled + pipelined over row-tiles of a (rows, 128) slab)
# ----------------------------------------------------------------------------
_EW_TILE_ROWS = 1024   # 1024 x 128 f32 = 512 KiB per array per tile


def _magnitude_kernel(re_ref, im_ref, o_ref):
    re = re_ref[...]
    im = im_ref[...]
    o_ref[...] = jnp.sqrt(re * re + im * im + 1e-9)


def _softplus_mask_kernel(u_ref, re_ref, im_ref, ore_ref, oim_ref):
    u = u_ref[...]
    # F.softplus with beta=1, threshold=20
    sp = jnp.where(u > 20.0, u, jnp.log1p(jnp.exp(jnp.minimum(u, 20.0))))
    ore_ref[...] = sp * re_ref[...]
    oim_ref[...] = sp * im_ref[...]


def _elementwise_call(kernel, n_out, *arrays):
    shape = arrays[0].shape
    n = arrays[0].size
    rows = _round_up(pl.cdiv(max(n, 1), 128), 8)
    tr = min(_EW_TILE_ROWS, rows)
    rows_p = _round_up(rows, tr)
    P = rows_p * 128
    padded = tuple(
        jnp.pad(a.astype(jnp.float32).reshape(-1), (0, P - n)).reshape(rows_p, 128)
        for a in arrays)
    blk = pl.BlockSpec((tr, 128), lambda i: (i, 0))
    out_shapes = tuple(jax.ShapeDtypeStruct((rows_p, 128), jnp.float32) for _ in range(n_out))
    out_shape = out_shapes[0] if n_out == 1 else out_shapes
    out_specs = blk if n_out == 1 else tuple(blk for _ in range(n_out))
    outs = pl.pallas_call(
        kernel,
        out_shape=out_shape,
        grid_spec=pltpu.PrefetchScalarGridSpec(
            num_scalar_prefetch=0,
            grid=(rows_p // tr,),
            in_specs=[blk] * len(arrays),
            out_specs=out_specs,
        ),
        compiler_params=pltpu.CompilerParams(dimension_semantics=("parallel",)),
    )(*padded)
    if n_out == 1:
        outs = (outs,)
    return tuple(o.reshape(-1)[:n].reshape(shape) for o in outs)


def magnitude(re, im):
    return _elementwise_call(_magnitude_kernel, 1, re, im)[0]


def softplus_mask(u, re, im):
    return _elementwise_call(_softplus_mask_kernel, 2, u, re, im)


# ----------------------------------------------------------------------------
# Conv2d = im2col (glue) + Pallas matmul (bf16 A/W, f32 acc, fused bias/residual/lrelu)
# ----------------------------------------------------------------------------
def _im2col(x, kh, kw, stride, padding):
    # TODO(synk): im2col still materializes kh*kw duplicated activations in HBM;
    #             a shifted-view reduction-axis conv would avoid it but has no clean
    #             rectangular BlockSpec mapping for flattened (b, ho, wo) rows.
    B, H, W, C = x.shape
    xp = jnp.pad(x, ((0, 0), (padding, padding), (padding, padding), (0, 0)))
    Ho = (H + 2 * padding - kh) // stride + 1
    Wo = (W + 2 * padding - kw) // stride + 1
    patches = []
    for i in range(kh):
        for j in range(kw):
            patches.append(xp[:, i:i + stride * Ho:stride, j:j + stride * Wo:stride, :])
    cols = jnp.concatenate(patches, axis=-1)          # (B, Ho, Wo, kh*kw*C)
    return cols.reshape(B * Ho * Wo, kh * kw * C), (B, Ho, Wo)


def conv2d(x, w, b, stride=1, padding=0, residual=None, fuse_lrelu=False):
    """x: (B,H,W,Cin) NHWC, w: (kh,kw,Cin,Cout), b: (Cout,)."""
    kh, kw, cin, cout = w.shape
    cols, (B, Ho, Wo) = _im2col(x, kh, kw, stride, padding)
    r = residual.reshape(B * Ho * Wo, cout) if residual is not None else None
    out = matmul_bias(cols, w.reshape(kh * kw * cin, cout), b, r,
                      fuse_lrelu=fuse_lrelu, compute_dtype=jnp.bfloat16)
    return out.reshape(B, Ho, Wo, cout)


def upsample_nearest(x, scale):
    return jnp.repeat(jnp.repeat(x, scale, axis=1), scale, axis=2)


def fix_shapes_2d(x, skip):
    # TODO(synk): fix_shapes_2d is not in the provided source; assumed right/bottom zero-pad
    # of the smaller tensor so both spatial shapes match (mode='pad').
    H = max(x.shape[1], skip.shape[1])
    W = max(x.shape[2], skip.shape[2])
    x = jnp.pad(x, ((0, 0), (0, H - x.shape[1]), (0, W - x.shape[2]), (0, 0)))
    skip = jnp.pad(skip, ((0, 0), (0, H - skip.shape[1]), (0, W - skip.shape[2]), (0, 0)))
    return x, skip


# ----------------------------------------------------------------------------
# SpectralUNet
# ----------------------------------------------------------------------------
def _conv_init(key, kh, kw, cin, cout):
    k1, k2 = jax.random.split(key)
    bound = 1.0 / math.sqrt(cin * kh * kw)
    w = jax.random.uniform(k1, (kh, kw, cin, cout), jnp.float32, -bound, bound)
    b = jax.random.uniform(k2, (cout,), jnp.float32, -bound, bound)
    return w, b


def init_spectral_unet(key, cfg):
    ks = cfg["kernel_size"]
    width = cfg["width"]
    depth = cfg["block_depth"]
    scale = cfg["scale"]
    keys = iter(jax.random.split(key, 256))
    p = {}
    p["prolog"] = _conv_init(next(keys), ks, ks, cfg["in_channels"], width[0])
    p["down"] = []
    for w in width:
        blocks = [_conv_init(next(keys), ks, ks, w, w) for _ in range(depth)]
        ep = _conv_init(next(keys), scale, scale, w, 2 * w)
        p["down"].append({"blocks": blocks, "epilog": ep})
    p["up"] = []
    for w in width[::-1]:
        pro = _conv_init(next(keys), 1, 1, 2 * w, w)
        blocks = [_conv_init(next(keys), ks, ks, w, w) for _ in range(depth)]
        ep = _conv_init(next(keys), 1, 1, 2 * w, w)
        p["up"].append({"prolog": pro, "blocks": blocks, "epilog": ep})
    p["bottleneck"] = [
        _conv_init(next(keys), ks, ks, cfg["bottleneck_width"], cfg["bottleneck_width"])
        for _ in range(depth)
    ]
    p["epilog"] = _conv_init(next(keys), ks, ks, width[0], cfg["out_channels"])
    return p


def spectral_unet_forward(p, cfg, x):
    pad = cfg["padding"]
    scale = cfg["scale"]

    def block(h, bp):
        # BlockWidth: h + conv(leaky_relu(h)); lrelu fused into the matmul A-tile load
        # (valid because lrelu(0) == 0, so it commutes with zero-padded im2col).
        w, b = bp
        return conv2d(h, w, b, stride=1, padding=pad, residual=h, fuse_lrelu=True)

    out = conv2d(x, p["prolog"][0], p["prolog"][1], stride=1, padding=pad)
    skips = []
    for dp in p["down"]:
        skip = out                       # DownsampleBlock returns (epilog(blocks(x)), x)
        for bp in dp["blocks"]:
            out = block(out, bp)
        out = conv2d(out, dp["epilog"][0], dp["epilog"][1], stride=scale, padding=0)
        skips.append(skip)
    for bp in p["bottleneck"]:
        out = block(out, bp)
    for up, skip in zip(p["up"], skips[::-1]):
        out = upsample_nearest(out, scale)
        out = conv2d(out, up["prolog"][0], up["prolog"][1], stride=1, padding=0)
        for bp in up["blocks"]:
            out = block(out, bp)
        out, skip = fix_shapes_2d(out, skip)
        out = conv2d(jnp.concatenate([out, skip], axis=-1),
                     up["epilog"][0], up["epilog"][1], stride=1, padding=0)
    return conv2d(out, p["epilog"][0], p["epilog"][1], stride=1, padding=pad)


# ----------------------------------------------------------------------------
# SpectralMaskNet
# ----------------------------------------------------------------------------
def init_spectral_mask_net(key, cfg):
    k_unet, kw, kb = jax.random.split(key, 3)
    params = {"unet": init_spectral_unet(k_unet, cfg)}
    # spec_conv = nn.Conv1d(80, 513, 1): initialized deterministically but only used
    # on the spectral_out branch (not exercised here).
    bound = 1.0 / math.sqrt(80)
    params["spec_conv"] = (
        jax.random.uniform(kw, (80, 513), jnp.float32, -bound, bound),
        jax.random.uniform(kb, (513,), jnp.float32, -bound, bound),
    )
    return params


def spectral_mask_net_forward(params, x, n_fft, cfg):
    N = n_fft
    hop = N // 4
    F_ = N // 2 + 1
    B, _L = x.shape
    nn_ = jnp.arange(N, dtype=jnp.float32)
    ff = jnp.arange(F_, dtype=jnp.float32)
    window = 0.5 * (1.0 - jnp.cos(2.0 * jnp.pi * nn_ / N))  # periodic Hann

    # ---- STFT (center=True, reflect pad, hop=N//4, onesided) as a Pallas matmul ----
    xpad = jnp.pad(x, ((0, 0), (N // 2, N // 2)), mode="reflect")
    T = 1 + (xpad.shape[1] - N) // hop
    idx = jnp.arange(T)[:, None] * hop + jnp.arange(N)[None, :]     # (T, N)
    frames = xpad[:, idx]                                           # (B, T, N)
    ang = 2.0 * jnp.pi * jnp.outer(nn_, ff) / N                     # (N, F)
    fwd_basis = jnp.concatenate(
        [window[:, None] * jnp.cos(ang), -window[:, None] * jnp.sin(ang)], axis=1)  # (N, 2F)
    # DFT matmuls stay in f32 (long dense-basis reductions; bf16 would hurt reconstruction)
    spec = matmul_bias(frames.reshape(B * T, N), fwd_basis,
                       jnp.zeros((2 * F_,), jnp.float32), compute_dtype=jnp.float32)
    spec = spec.reshape(B, T, 2, F_)
    re = jnp.transpose(spec[:, :, 0, :], (0, 2, 1))                 # (B, F, T)
    im = jnp.transpose(spec[:, :, 1, :], (0, 2, 1))                 # (B, F, T)

    # magnitude = sqrt(re^2 + im^2 + 1e-9)
    mag = magnitude(re, im)
    # TODO(synk): spectral_out branch (ReflectionPad1d + spec_conv, requires n_fft=1024)
    #             not exercised; this forward implements spectral_out=None.
    unet_in = mag[..., None]                                        # NHWC (B, F, T, 1)
    unet_out = spectral_unet_forward(params["unet"], cfg, unet_in)[..., 0]  # (B, F, T)

    # mul_factor = softplus(unet_out); spectrum *= mul_factor  (fused Pallas kernel)
    re2, im2 = softplus_mask(unet_out, re, im)

    # ---- ISTFT (irfft-basis matmul in Pallas, overlap-add + window-envelope norm in glue) ----
    cfac = jnp.where((jnp.arange(F_) == 0) | (jnp.arange(F_) == N // 2), 1.0, 2.0)
    iang = 2.0 * jnp.pi * jnp.outer(ff, nn_) / N                    # (F, N)
    inv_basis = jnp.concatenate(
        [cfac[:, None] * jnp.cos(iang), -cfac[:, None] * jnp.sin(iang)], axis=0) / N
    inv_basis = inv_basis * window[None, :]                         # (2F, N), synthesis window
    spec_ri = jnp.concatenate([re2, im2], axis=1)                   # (B, 2F, T)
    A = jnp.transpose(spec_ri, (0, 2, 1)).reshape(B * T, 2 * F_)
    frames_y = matmul_bias(A, inv_basis, jnp.zeros((N,), jnp.float32),
                           compute_dtype=jnp.float32).reshape(B, T, N)

    Lp = (T - 1) * hop + N
    out_pad = jnp.zeros((B, Lp), jnp.float32).at[:, idx].add(frames_y)
    wsq = jnp.zeros((Lp,), jnp.float32).at[idx].add(jnp.broadcast_to(window ** 2, (T, N)))
    start = N // 2
    length = (T - 1) * hop
    return out_pad[:, start:start + length] / wsq[start:start + length]


# ----------------------------------------------------------------------------
if __name__ == "__main__":
    key = jax.random.PRNGKey(0)
    n_fft = 16
    spectral_params = dict(
        in_channels=1, out_channels=1, width=[4, 8], scale=2,
        bottleneck_width=16, block_depth=1, kernel_size=3, padding=1,
    )

    k_params, k_x = jax.random.split(key)
    params = init_spectral_mask_net(k_params, spectral_params)

    B, L = 2, 64   # L divisible by hop = n_fft // 4 so istft length == L
    x = jax.random.normal(k_x, (B, L), jnp.float32)

    fwd = jax.jit(lambda p, xx: spectral_mask_net_forward(p, xx, n_fft, spectral_params))
    out = fwd(params, x)
    out = jax.block_until_ready(out)
    assert out.shape == (B, L), out.shape
    assert bool(jnp.all(jnp.isfinite(out)))
    print("KERNEL_OK")
</pallas_src>

<mosaic_0001>
module attributes {stable_mosaic.version = 11 : i64} {
  func.func @kernel(%arg0: i32, %arg1: i32, %arg2: i32, %arg3: memref<40x128xf32, #tpu.memory_space<vmem>>, %arg4: memref<128x128xf32, #tpu.memory_space<vmem>>, %arg5: memref<1x128xf32, #tpu.memory_space<vmem>>, %arg6: memref<40x128xf32, #tpu.memory_space<vmem>>, %arg7: memref<40x128xf32, #tpu.memory_space<vmem>>) attributes {dimension_semantics = [#tpu.dimension_semantics<parallel>, #tpu.dimension_semantics<parallel>, #tpu.dimension_semantics<arbitrary>], iteration_bounds = array<i64: 1, 1, 1>, scalar_prefetch = 0 : i64, scratch_operands = 1 : i64, tpu.core_type = #tpu.core_type<tc>, window_params = [{transform_indices = @transform_0, window_bounds = array<i64: 40, 128>}, {transform_indices = @transform_1, window_bounds = array<i64: 128, 128>}, {transform_indices = @transform_2, window_bounds = array<i64: 1, 128>}, {transform_indices = @transform_3, window_bounds = array<i64: 40, 128>}]} {
    %c0_i32 = arith.constant 0 : i32
    %0 = arith.cmpi eq, %arg2, %c0_i32 : i32
    %1 = arith.extui %0 : i1 to i32
    %c0_i32_0 = arith.constant 0 : i32
    %2 = arith.cmpi ne, %1, %c0_i32_0 : i32
    scf.if %2 {
      %cst_10 = arith.constant 0.000000e+00 : f32
      %12 = vector.broadcast %cst_10 : f32 to vector<40x128xf32>
      %c0_11 = arith.constant 0 : index
      %c0_12 = arith.constant 0 : index
      %13 = vector.load %arg7[%c0_11, %c0_12] : memref<40x128xf32, #tpu.memory_space<vmem>>, vector<40x128xf32>
      tpu.vector_store %arg7[%c0_11, %c0_12], %12 {strides = array<i32>} : memref<40x128xf32, #tpu.memory_space<vmem>>, vector<40x128xf32>,
    } else {
    }
    %c0 = arith.constant 0 : index
    %c0_1 = arith.constant 0 : index
    %3 = vector.load %arg3[%c0, %c0_1] : memref<40x128xf32, #tpu.memory_space<vmem>>, vector<40x128xf32>
    %c0_2 = arith.constant 0 : index
    %c0_3 = arith.constant 0 : index
    %4 = vector.load %arg7[%c0_2, %c0_3] : memref<40x128xf32, #tpu.memory_space<vmem>>, vector<40x128xf32>
    %c0_4 = arith.constant 0 : index
    %c0_5 = arith.constant 0 : index
    %5 = vector.load %arg4[%c0_4, %c0_5] : memref<128x128xf32, #tpu.memory_space<vmem>>, vector<128x128xf32>
    %cst = arith.constant dense<0.000000e+00> : vector<40x128xf32>
    %6 = tpu.matmul %3, %5, %cst {dimension_numbers = #tpu.dot_dimension_numbers<[1], [0], [0], [1], [0, 0, 1, 1], [], []>} : vector<40x128xf32>, vector<128x128xf32>, vector<40x128xf32> -> vector<40x128xf32>
    %7 = arith.addf %4, %6 : vector<40x128xf32>
    %c0_6 = arith.constant 0 : index
    %c0_7 = arith.constant 0 : index
    %8 = vector.load %arg7[%c0_6, %c0_7] : memref<40x128xf32, #tpu.memory_space<vmem>>, vector<40x128xf32>
    tpu.vector_store %arg7[%c0_6, %c0_7], %7 {strides = array<i32>} : memref<40x128xf32, #tpu.memory_space<vmem>>, vector<40x128xf32>,
    %c0_i32_8 = arith.constant 0 : i32
    %9 = arith.cmpi eq, %arg2, %c0_i32_8 : i32
    %10 = arith.extui %9 : i1 to i32
    %c0_i32_9 = arith.constant 0 : i32
    %11 = arith.cmpi ne, %10, %c0_i32_9 : i32
    scf.if %11 {
      %c0_10 = arith.constant 0 : index
      %c0_11 = arith.constant 0 : index
      %12 = vector.load %arg7[%c0_10, %c0_11] : memref<40x128xf32, #tpu.memory_space<vmem>>, vector<40x128xf32>
      %c0_12 = arith.constant 0 : index
      %c0_13 = arith.constant 0 : index
      %13 = vector.load %arg5[%c0_12, %c0_13] : memref<1x128xf32, #tpu.memory_space<vmem>>, vector<1x128xf32>
      %14 = vector.broadcast %13 : vector<1x128xf32> to vector<40x128xf32>
      %15 = arith.addf %12, %14 : vector<40x128xf32>
      %c0_14 = arith.constant 0 : index
      %c0_15 = arith.constant 0 : index
      %16 = vector.load %arg6[%c0_14, %c0_15] : memref<40x128xf32, #tpu.memory_space<vmem>>, vector<40x128xf32>
      tpu.vector_store %arg6[%c0_14, %c0_15], %15 {strides = array<i32>} : memref<40x128xf32, #tpu.memory_space<vmem>>, vector<40x128xf32>,
    } else {
    }
    return
  }
  func.func @transform_0(%arg0: i32, %arg1: i32, %arg2: i32) -> (i32, i32) {
    %c0_i32 = arith.constant 0 : i32
    return %arg0, %arg2 : i32, i32
  }
  func.func @transform_1(%arg0: i32, %arg1: i32, %arg2: i32) -> (i32, i32) {
    %c0_i32 = arith.constant 0 : i32
    return %arg2, %arg1 : i32, i32
  }
  func.func @transform_2(%arg0: i32, %arg1: i32, %arg2: i32) -> (i32, i32) {
    %c0_i32 = arith.constant 0 : i32
    %c0_i32_0 = arith.constant 0 : i32
    return %c0_i32, %arg1 : i32, i32
  }
  func.func @transform_3(%arg0: i32, %arg1: i32, %arg2: i32) -> (i32, i32) {
    %c0_i32 = arith.constant 0 : i32
    return %arg0, %arg1 : i32, i32
  }
}

module attributes {stable_mosaic.version = 11 : i64} {
  func.func @_magnitude_kernel(%arg0: i32, %arg1: memref<8x128xf32, #tpu.memory_space<vmem>>, %arg2: memref<8x128xf32, #tpu.memory_space<vmem>>, %arg3: memref<8x128xf32, #tpu.memory_space<vmem>>) attributes {dimension_semantics = [#tpu.dimension_semantics<parallel>], iteration_bounds = array<i64: 1>, scalar_prefetch = 0 : i64, scratch_operands = 0 : i64, tpu.core_type = #tpu.core_type<tc>, window_params = [{transform_indices = @transform_0, window_bounds = array<i64: 8, 128>}, {transform_indices = @transform_1, window_bounds = array<i64: 8, 128>}, {transform_indices = @transform_2, window_bounds = array<i64: 8, 128>}]} {
    %c0 = arith.constant 0 : index
    %c0_0 = arith.constant 0 : index
    %0 = vector.load %arg1[%c0, %c0_0] : memref<8x128xf32, #tpu.memory_space<vmem>>, vector<8x128xf32>
    %c0_1 = arith.constant 0 : index
    %c0_2 = arith.constant 0 : index
    %1 = vector.load %arg2[%c0_1, %c0_2] : memref<8x128xf32, #tpu.memory_space<vmem>>, vector<8x128xf32>
    %2 = arith.mulf %0, %0 : vector<8x128xf32>
    %3 = arith.mulf %1, %1 : vector<8x128xf32>
    %4 = arith.addf %2, %3 : vector<8x128xf32>
    %cst = arith.constant 9.99999971E-10 : f32
    %5 = vector.broadcast %cst : f32 to vector<8x128xf32>
    %6 = arith.addf %4, %5 : vector<8x128xf32>
    %7 = math.sqrt %6 : vector<8x128xf32>
    %c0_3 = arith.constant 0 : index
    %c0_4 = arith.constant 0 : index
    %8 = vector.load %arg3[%c0_3, %c0_4] : memref<8x128xf32, #tpu.memory_space<vmem>>, vector<8x128xf32>
    tpu.vector_store %arg3[%c0_3, %c0_4], %7 {strides = array<i32>} : memref<8x128xf32, #tpu.memory_space<vmem>>, vector<8x128xf32>,
    return
  }
  func.func @transform_0(%arg0: i32) -> (i32, i32) {
    %c0_i32 = arith.constant 0 : i32
    %c0_i32_0 = arith.constant 0 : i32
    return %arg0, %c0_i32 : i32, i32
  }
  func.func @transform_1(%arg0: i32) -> (i32, i32) {
    %c0_i32 = arith.constant 0 : i32
    %c0_i32_0 = arith.constant 0 : i32
    return %arg0, %c0_i32 : i32, i32
  }
  func.func @transform_2(%arg0: i32) -> (i32, i32) {
    %c0_i32 = arith.constant 0 : i32
    %c0_i32_0 = arith.constant 0 : i32
    return %arg0, %c0_i32 : i32, i32
  }
}

module attributes {stable_mosaic.version = 11 : i64} {
  func.func @kernel(%arg0: i32, %arg1: i32, %arg2: i32, %arg3: memref<312x128xbf16, #tpu.memory_space<vmem>>, %arg4: memref<128x128xbf16, #tpu.memory_space<vmem>>, %arg5: memref<1x128xf32, #tpu.memory_space<vmem>>, %arg6: memref<312x128xf32, #tpu.memory_space<vmem>>, %arg7: memref<312x128xf32, #tpu.memory_space<vmem>>) attributes {dimension_semantics = [#tpu.dimension_semantics<parallel>, #tpu.dimension_semantics<parallel>, #tpu.dimension_semantics<arbitrary>], iteration_bounds = array<i64: 1, 1, 1>, scalar_prefetch = 0 : i64, scratch_operands = 1 : i64, tpu.core_type = #tpu.core_type<tc>, window_params = [{transform_indices = @transform_0, window_bounds = array<i64: 312, 128>}, {transform_indices = @transform_1, window_bounds = array<i64: 128, 128>}, {transform_indices = @transform_2, window_bounds = array<i64: 1, 128>}, {transform_indices = @transform_3, window_bounds = array<i64: 312, 128>}]} {
    %c0_i32 = arith.constant 0 : i32
    %0 = arith.cmpi eq, %arg2, %c0_i32 : i32
    %1 = arith.extui %0 : i1 to i32
    %c0_i32_0 = arith.constant 0 : i32
    %2 = arith.cmpi ne, %1, %c0_i32_0 : i32
    scf.if %2 {
      %cst_10 = arith.constant 0.000000e+00 : f32
      %12 = vector.broadcast %cst_10 : f32 to vector<312x128xf32>
      %c0_11 = arith.constant 0 : index
      %c0_12 = arith.constant 0 : index
      %13 = vector.load %arg7[%c0_11, %c0_12] : memref<312x128xf32, #tpu.memory_space<vmem>>, vector<312x128xf32>
      tpu.vector_store %arg7[%c0_11, %c0_12], %12 {strides = array<i32>} : memref<312x128xf32, #tpu.memory_space<vmem>>, vector<312x128xf32>,
    } else {
    }
    %c0 = arith.constant 0 : index
    %c0_1 = arith.constant 0 : index
    %3 = vector.load %arg3[%c0, %c0_1] : memref<312x128xbf16, #tpu.memory_space<vmem>>, vector<312x128xbf16>
    %c0_2 = arith.constant 0 : index
    %c0_3 = arith.constant 0 : index
    %4 = vector.load %arg7[%c0_2, %c0_3] : memref<312x128xf32, #tpu.memory_space<vmem>>, vector<312x128xf32>
    %c0_4 = arith.constant 0 : index
    %c0_5 = arith.constant 0 : index
    %5 = vector.load %arg4[%c0_4, %c0_5] : memref<128x128xbf16, #tpu.memory_space<vmem>>, vector<128x128xbf16>
    %cst = arith.constant dense<0.000000e+00> : vector<312x128xf32>
    %6 = tpu.matmul %3, %5, %cst {dimension_numbers = #tpu.dot_dimension_numbers<[1], [0], [0], [1], [0, 0, 1, 1], [], []>} : vector<312x128xbf16>, vector<128x128xbf16>, vector<312x128xf32> -> vector<312x128xf32>
    %7 = arith.addf %4, %6 : vector<312x128xf32>
    %c0_6 = arith.constant 0 : index
    %c0_7 = arith.constant 0 : index
    %8 = vector.load %arg7[%c0_6, %c0_7] : memref<312x128xf32, #tpu.memory_space<vmem>>, vector<312x128xf32>
    tpu.vector_store %arg7[%c0_6, %c0_7], %7 {strides = array<i32>} : memref<312x128xf32, #tpu.memory_space<vmem>>, vector<312x128xf32>,
    %c0_i32_8 = arith.constant 0 : i32
    %9 = arith.cmpi eq, %arg2, %c0_i32_8 : i32
    %10 = arith.extui %9 : i1 to i32
    %c0_i32_9 = arith.constant 0 : i32
    %11 = arith.cmpi ne, %10, %c0_i32_9 : i32
    scf.if %11 {
      %c0_10 = arith.constant 0 : index
      %c0_11 = arith.constant 0 : index
      %12 = vector.load %arg7[%c0_10, %c0_11] : memref<312x128xf32, #tpu.memory_space<vmem>>, vector<312x128xf32>
      %c0_12 = arith.constant 0 : index
      %c0_13 = arith.constant 0 : index
      %13 = vector.load %arg5[%c0_12, %c0_13] : memref<1x128xf32, #tpu.memory_space<vmem>>, vector<1x128xf32>
      %14 = vector.broadcast %13 : vector<1x128xf32> to vector<312x128xf32>
      %15 = arith.addf %12, %14 : vector<312x128xf32>
      %c0_14 = arith.constant 0 : index
      %c0_15 = arith.constant 0 : index
      %16 = vector.load %arg6[%c0_14, %c0_15] : memref<312x128xf32, #tpu.memory_space<vmem>>, vector<312x128xf32>
      tpu.vector_store %arg6[%c0_14, %c0_15], %15 {strides = array<i32>} : memref<312x128xf32, #tpu.memory_space<vmem>>, vector<312x128xf32>,
    } else {
    }
    return
  }
  func.func @transform_0(%arg0: i32, %arg1: i32, %arg2: i32) -> (i32, i32) {
    %c0_i32 = arith.constant 0 : i32
    return %arg0, %arg2 : i32, i32
  }
  func.func @transform_1(%arg0: i32, %arg1: i32, %arg2: i32) -> (i32, i32) {
    %c0_i32 = arith.constant 0 : i32
    return %arg2, %arg1 : i32, i32
  }
  func.func @transform_2(%arg0: i32, %arg1: i32, %arg2: i32) -> (i32, i32) {
    %c0_i32 = arith.constant 0 : i32
    %c0_i32_0 = arith.constant 0 : i32
    return %c0_i32, %arg1 : i32, i32
  }
  func.func @transform_3(%arg0: i32, %arg1: i32, %arg2: i32) -> (i32, i32) {
    %c0_i32 = arith.constant 0 : i32
    return %arg0, %arg1 : i32, i32
  }
}

module attributes {stable_mosaic.version = 11 : i64} {
  func.func @kernel(%arg0: i32, %arg1: i32, %arg2: i32, %arg3: memref<312x128xbf16, #tpu.memory_space<vmem>>, %arg4: memref<128x128xbf16, #tpu.memory_space<vmem>>, %arg5: memref<1x128xf32, #tpu.memory_space<vmem>>, %arg6: memref<312x128xf32, #tpu.memory_space<vmem>>, %arg7: memref<312x128xf32, #tpu.memory_space<vmem>>, %arg8: memref<312x128xf32, #tpu.memory_space<vmem>>) attributes {dimension_semantics = [#tpu.dimension_semantics<parallel>, #tpu.dimension_semantics<parallel>, #tpu.dimension_semantics<arbitrary>], iteration_bounds = array<i64: 1, 1, 1>, scalar_prefetch = 0 : i64, scratch_operands = 1 : i64, tpu.core_type = #tpu.core_type<tc>, window_params = [{transform_indices = @transform_0, window_bounds = array<i64: 312, 128>}, {transform_indices = @transform_1, window_bounds = array<i64: 128, 128>}, {transform_indices = @transform_2, window_bounds = array<i64: 1, 128>}, {transform_indices = @transform_3, window_bounds = array<i64: 312, 128>}, {transform_indices = @transform_4, window_bounds = array<i64: 312, 128>}]} {
    %c0_i32 = arith.constant 0 : i32
    %0 = arith.cmpi eq, %arg2, %c0_i32 : i32
    %1 = arith.extui %0 : i1 to i32
    %c0_i32_0 = arith.constant 0 : i32
    %2 = arith.cmpi ne, %1, %c0_i32_0 : i32
    scf.if %2 {
      %cst_12 = arith.constant 0.000000e+00 : f32
      %17 = vector.broadcast %cst_12 : f32 to vector<312x128xf32>
      %c0_13 = arith.constant 0 : index
      %c0_14 = arith.constant 0 : index
      %18 = vector.load %arg8[%c0_13, %c0_14] : memref<312x128xf32, #tpu.memory_space<vmem>>, vector<312x128xf32>
      tpu.vector_store %arg8[%c0_13, %c0_14], %17 {strides = array<i32>} : memref<312x128xf32, #tpu.memory_space<vmem>>, vector<312x128xf32>,
    } else {
    }
    %c0 = arith.constant 0 : index
    %c0_1 = arith.constant 0 : index
    %3 = vector.load %arg3[%c0, %c0_1] : memref<312x128xbf16, #tpu.memory_space<vmem>>, vector<312x128xbf16>
    %cst = arith.constant 0.000000e+00 : bf16
    %4 = vector.broadcast %cst : bf16 to vector<312x128xbf16>
    %5 = arith.cmpf oge, %3, %4 : vector<312x128xbf16>
    %cst_2 = arith.constant 1.000980e-02 : bf16
    %6 = vector.broadcast %cst_2 : bf16 to vector<312x128xbf16>
    %7 = arith.mulf %6, %3 : vector<312x128xbf16>
    %8 = arith.select %5, %3, %7 : vector<312x128xi1>, vector<312x128xbf16>
    %c0_3 = arith.constant 0 : index
    %c0_4 = arith.constant 0 : index
    %9 = vector.load %arg8[%c0_3, %c0_4] : memref<312x128xf32, #tpu.memory_space<vmem>>, vector<312x128xf32>
    %c0_5 = arith.constant 0 : index
    %c0_6 = arith.constant 0 : index
    %10 = vector.load %arg4[%c0_5, %c0_6] : memref<128x128xbf16, #tpu.memory_space<vmem>>, vector<128x128xbf16>
    %cst_7 = arith.constant dense<0.000000e+00> : vector<312x128xf32>
    %11 = tpu.matmul %8, %10, %cst_7 {dimension_numbers = #tpu.dot_dimension_numbers<[1], [0], [0], [1], [0, 0, 1, 1], [], []>} : vector<312x128xbf16>, vector<128x128xbf16>, vector<312x128xf32> -> vector<312x128xf32>
    %12 = arith.addf %9, %11 : vector<312x128xf32>
    %c0_8 = arith.constant 0 : index
    %c0_9 = arith.constant 0 : index
    %13 = vector.load %arg8[%c0_8, %c0_9] : memref<312x128xf32, #tpu.memory_space<vmem>>, vector<312x128xf32>
    tpu.vector_store %arg8[%c0_8, %c0_9], %12 {strides = array<i32>} : memref<312x128xf32, #tpu.memory_space<vmem>>, vector<312x128xf32>,
    %c0_i32_10 = arith.constant 0 : i32
    %14 = arith.cmpi eq, %arg2, %c0_i32_10 : i32
    %15 = arith.extui %14 : i1 to i32
    %c0_i32_11 = arith.constant 0 : i32
    %16 = arith.cmpi ne, %15, %c0_i32_11 : i32
    scf.if %16 {
      %c0_12 = arith.constant 0 : index
      %c0_13 = arith.constant 0 : index
      %17 = vector.load %arg8[%c0_12, %c0_13] : memref<312x128xf32, #tpu.memory_space<vmem>>, vector<312x128xf32>
      %c0_14 = arith.constant 0 : index
      %c0_15 = arith.constant 0 : index
      %18 = vector.load %arg5[%c0_14, %c0_15] : memref<1x128xf32, #tpu.memory_space<vmem>>, vector<1x128xf32>
      %19 = vector.broadcast %18 : vector<1x128xf32> to vector<312x128xf32>
      %20 = arith.addf %17, %19 : vector<312x128xf32>
      %c0_16 = arith.constant 0 : index
      %c0_17 = arith.constant 0 : index
      %21 = vector.load %arg6[%c0_16, %c0_17] : memref<312x128xf32, #tpu.memory_space<vmem>>, vector<312x128xf32>
      %22 = arith.addf %20, %21 : vector<312x128xf32>
      %c0_18 = arith.constant 0 : index
      %c0_19 = arith.constant 0 : index
      %23 = vector.load %arg7[%c0_18, %c0_19] : memref<312x128xf32, #tpu.memory_space<vmem>>, vector<312x128xf32>
      tpu.vector_store %arg7[%c0_18, %c0_19], %22 {strides = array<i32>} : memref<312x128xf32, #tpu.memory_space<vmem>>, vector<312x128xf32>,
    } else {
    }
    return
  }
  func.func @transform_0(%arg0: i32, %arg1: i32, %arg2: i32) -> (i32, i32) {
    %c0_i32 = arith.constant 0 : i32
    return %arg0, %arg2 : i32, i32
  }
  func.func @transform_1(%arg0: i32, %arg1: i32, %arg2: i32) -> (i32, i32) {
    %c0_i32 = arith.constant 0 : i32
    return %arg2, %arg1 : i32, i32
  }
  func.func @transform_2(%arg0: i32, %arg1: i32, %arg2: i32) -> (i32, i32) {
    %c0_i32 = arith.constant 0 : i32
    %c0_i32_0 = arith.constant 0 : i32
    return %c0_i32, %arg1 : i32, i32
  }
  func.func @transform_3(%arg0: i32, %arg1: i32, %arg2: i32) -> (i32, i32) {
    %c0_i32 = arith.constant 0 : i32
    return %arg0, %arg1 : i32, i32
  }
  func.func @transform_4(%arg0: i32, %arg1: i32, %arg2: i32) -> (i32, i32) {
    %c0_i32 = arith.constant 0 : i32
    return %arg0, %arg1 : i32, i32
  }
}

module attributes {stable_mosaic.version = 11 : i64} {
  func.func @kernel(%arg0: i32, %arg1: i32, %arg2: i32, %arg3: memref<64x128xbf16, #tpu.memory_space<vmem>>, %arg4: memref<128x128xbf16, #tpu.memory_space<vmem>>, %arg5: memref<1x128xf32, #tpu.memory_space<vmem>>, %arg6: memref<64x128xf32, #tpu.memory_space<vmem>>, %arg7: memref<64x128xf32, #tpu.memory_space<vmem>>) attributes {dimension_semantics = [#tpu.dimension_semantics<parallel>, #tpu.dimension_semantics<parallel>, #tpu.dimension_semantics<arbitrary>], iteration_bounds = array<i64: 1, 1, 1>, scalar_prefetch = 0 : i64, scratch_operands = 1 : i64, tpu.core_type = #tpu.core_type<tc>, window_params = [{transform_indices = @transform_0, window_bounds = array<i64: 64, 128>}, {transform_indices = @transform_1, window_bounds = array<i64: 128, 128>}, {transform_indices = @transform_2, window_bounds = array<i64: 1, 128>}, {transform_indices = @transform_3, window_bounds = array<i64: 64, 128>}]} {
    %c0_i32 = arith.constant 0 : i32
    %0 = arith.cmpi eq, %arg2, %c0_i32 : i32
    %1 = arith.extui %0 : i1 to i32
    %c0_i32_0 = arith.constant 0 : i32
    %2 = arith.cmpi ne, %1, %c0_i32_0 : i32
    scf.if %2 {
      %cst_10 = arith.constant 0.000000e+00 : f32
      %12 = vector.broadcast %cst_10 : f32 to vector<64x128xf32>
      %c0_11 = arith.constant 0 : index
      %c0_12 = arith.constant 0 : index
      %13 = vector.load %arg7[%c0_11, %c0_12] : memref<64x128xf32, #tpu.memory_space<vmem>>, vector<64x128xf32>
      tpu.vector_store %arg7[%c0_11, %c0_12], %12 {strides = array<i32>} : memref<64x128xf32, #tpu.memory_space<vmem>>, vector<64x128xf32>,
    } else {
    }
    %c0 = arith.constant 0 : index
    %c0_1 = arith.constant 0 : index
    %3 = vector.load %arg3[%c0, %c0_1] : memref<64x128xbf16, #tpu.memory_space<vmem>>, vector<64x128xbf16>
    %c0_2 = arith.constant 0 : index
    %c0_3 = arith.constant 0 : index
    %4 = vector.load %arg7[%c0_2, %c0_3] : memref<64x128xf32, #tpu.memory_space<vmem>>, vector<64x128xf32>
    %c0_4 = arith.constant 0 : index
    %c0_5 = arith.constant 0 : index
    %5 = vector.load %arg4[%c0_4, %c0_5] : memref<128x128xbf16, #tpu.memory_space<vmem>>, vector<128x128xbf16>
    %cst = arith.constant dense<0.000000e+00> : vector<64x128xf32>
    %6 = tpu.matmul %3, %5, %cst {dimension_numbers = #tpu.dot_dimension_numbers<[1], [0], [0], [1], [0, 0, 1, 1], [], []>} : vector<64x128xbf16>, vector<128x128xbf16>, vector<64x128xf32> -> vector<64x128xf32>
    %7 = arith.addf %4, %6 : vector<64x128xf32>
    %c0_6 = arith.constant 0 : index
    %c0_7 = arith.constant 0 : index
    %8 = vector.load %arg7[%c0_6, %c0_7] : memref<64x128xf32, #tpu.memory_space<vmem>>, vector<64x128xf32>
    tpu.vector_store %arg7[%c0_6, %c0_7], %7 {strides = array<i32>} : memref<64x128xf32, #tpu.memory_space<vmem>>, vector<64x128xf32>,
    %c0_i32_8 = arith.constant 0 : i32
    %9 = arith.cmpi eq, %arg2, %c0_i32_8 : i32
    %10 = arith.extui %9 : i1 to i32
    %c0_i32_9 = arith.constant 0 : i32
    %11 = arith.cmpi ne, %10, %c0_i32_9 : i32
    scf.if %11 {
      %c0_10 = arith.constant 0 : index
      %c0_11 = arith.constant 0 : index
      %12 = vector.load %arg7[%c0_10, %c0_11] : memref<64x128xf32, #tpu.memory_space<vmem>>, vector<64x128xf32>
      %c0_12 = arith.constant 0 : index
      %c0_13 = arith.constant 0 : index
      %13 = vector.load %arg5[%c0_12, %c0_13] : memref<1x128xf32, #tpu.memory_space<vmem>>, vector<1x128xf32>
      %14 = vector.broadcast %13 : vector<1x128xf32> to vector<64x128xf32>
      %15 = arith.addf %12, %14 : vector<64x128xf32>
      %c0_14 = arith.constant 0 : index
      %c0_15 = arith.constant 0 : index
      %16 = vector.load %arg6[%c0_14, %c0_15] : memref<64x128xf32, #tpu.memory_space<vmem>>, vector<64x128xf32>
      tpu.vector_store %arg6[%c0_14, %c0_15], %15 {strides = array<i32>} : memref<64x128xf32, #tpu.memory_space<vmem>>, vector<64x128xf32>,
    } else {
    }
    return
  }
  func.func @transform_0(%arg0: i32, %arg1: i32, %arg2: i32) -> (i32, i32) {
    %c0_i32 = arith.constant 0 : i32
    return %arg0, %arg2 : i32, i32
  }
  func.func @transform_1(%arg0: i32, %arg1: i32, %arg2: i32) -> (i32, i32) {
    %c0_i32 = arith.constant 0 : i32
    return %arg2, %arg1 : i32, i32
  }
  func.func @transform_2(%arg0: i32, %arg1: i32, %arg2: i32) -> (i32, i32) {
    %c0_i32 = arith.constant 0 : i32
    %c0_i32_0 = arith.constant 0 : i32
    return %c0_i32, %arg1 : i32, i32
  }
  func.func @transform_3(%arg0: i32, %arg1: i32, %arg2: i32) -> (i32, i32) {
    %c0_i32 = arith.constant 0 : i32
    return %arg0, %arg1 : i32, i32
  }
}

module attributes {stable_mosaic.version = 11 : i64} {
  func.func @kernel(%arg0: i32, %arg1: i32, %arg2: i32, %arg3: memref<64x128xbf16, #tpu.memory_space<vmem>>, %arg4: memref<128x128xbf16, #tpu.memory_space<vmem>>, %arg5: memref<1x128xf32, #tpu.memory_space<vmem>>, %arg6: memref<64x128xf32, #tpu.memory_space<vmem>>, %arg7: memref<64x128xf32, #tpu.memory_space<vmem>>, %arg8: memref<64x128xf32, #tpu.memory_space<vmem>>) attributes {dimension_semantics = [#tpu.dimension_semantics<parallel>, #tpu.dimension_semantics<parallel>, #tpu.dimension_semantics<arbitrary>], iteration_bounds = array<i64: 1, 1, 1>, scalar_prefetch = 0 : i64, scratch_operands = 1 : i64, tpu.core_type = #tpu.core_type<tc>, window_params = [{transform_indices = @transform_0, window_bounds = array<i64: 64, 128>}, {transform_indices = @transform_1, window_bounds = array<i64: 128, 128>}, {transform_indices = @transform_2, window_bounds = array<i64: 1, 128>}, {transform_indices = @transform_3, window_bounds = array<i64: 64, 128>}, {transform_indices = @transform_4, window_bounds = array<i64: 64, 128>}]} {
    %c0_i32 = arith.constant 0 : i32
    %0 = arith.cmpi eq, %arg2, %c0_i32 : i32
    %1 = arith.extui %0 : i1 to i32
    %c0_i32_0 = arith.constant 0 : i32
    %2 = arith.cmpi ne, %1, %c0_i32_0 : i32
    scf.if %2 {
      %cst_12 = arith.constant 0.000000e+00 : f32
      %17 = vector.broadcast %cst_12 : f32 to vector<64x128xf32>
      %c0_13 = arith.constant 0 : index
      %c0_14 = arith.constant 0 : index
      %18 = vector.load %arg8[%c0_13, %c0_14] : memref<64x128xf32, #tpu.memory_space<vmem>>, vector<64x128xf32>
      tpu.vector_store %arg8[%c0_13, %c0_14], %17 {strides = array<i32>} : memref<64x128xf32, #tpu.memory_space<vmem>>, vector<64x128xf32>,
    } else {
    }
    %c0 = arith.constant 0 : index
    %c0_1 = arith.constant 0 : index
    %3 = vector.load %arg3[%c0, %c0_1] : memref<64x128xbf16, #tpu.memory_space<vmem>>, vector<64x128xbf16>
    %cst = arith.constant 0.000000e+00 : bf16
    %4 = vector.broadcast %cst : bf16 to vector<64x128xbf16>
    %5 = arith.cmpf oge, %3, %4 : vector<64x128xbf16>
    %cst_2 = arith.constant 1.000980e-02 : bf16
    %6 = vector.broadcast %cst_2 : bf16 to vector<64x128xbf16>
    %7 = arith.mulf %6, %3 : vector<64x128xbf16>
    %8 = arith.select %5, %3, %7 : vector<64x128xi1>, vector<64x128xbf16>
    %c0_3 = arith.constant 0 : index
    %c0_4 = arith.constant 0 : index
    %9 = vector.load %arg8[%c0_3, %c0_4] : memref<64x128xf32, #tpu.memory_space<vmem>>, vector<64x128xf32>
    %c0_5 = arith.constant 0 : index
    %c0_6 = arith.constant 0 : index
    %10 = vector.load %arg4[%c0_5, %c0_6] : memref<128x128xbf16, #tpu.memory_space<vmem>>, vector<128x128xbf16>
    %cst_7 = arith.constant dense<0.000000e+00> : vector<64x128xf32>
    %11 = tpu.matmul %8, %10, %cst_7 {dimension_numbers = #tpu.dot_dimension_numbers<[1], [0], [0], [1], [0, 0, 1, 1], [], []>} : vector<64x128xbf16>, vector<128x128xbf16>, vector<64x128xf32> -> vector<64x128xf32>
    %12 = arith.addf %9, %11 : vector<64x128xf32>
    %c0_8 = arith.constant 0 : index
    %c0_9 = arith.constant 0 : index
    %13 = vector.load %arg8[%c0_8, %c0_9] : memref<64x128xf32, #tpu.memory_space<vmem>>, vector<64x128xf32>
    tpu.vector_store %arg8[%c0_8, %c0_9], %12 {strides = array<i32>} : memref<64x128xf32, #tpu.memory_space<vmem>>, vector<64x128xf32>,
    %c0_i32_10 = arith.constant 0 : i32
    %14 = arith.cmpi eq, %arg2, %c0_i32_10 : i32
    %15 = arith.extui %14 : i1 to i32
    %c0_i32_11 = arith.constant 0 : i32
    %16 = arith.cmpi ne, %15, %c0_i32_11 : i32
    scf.if %16 {
      %c0_12 = arith.constant 0 : index
      %c0_13 = arith.constant 0 : index
      %17 = vector.load %arg8[%c0_12, %c0_13] : memref<64x128xf32, #tpu.memory_space<vmem>>, vector<64x128xf32>
      %c0_14 = arith.constant 0 : index
      %c0_15 = arith.constant 0 : index
      %18 = vector.load %arg5[%c0_14, %c0_15] : memref<1x128xf32, #tpu.memory_space<vmem>>, vector<1x128xf32>
      %19 = vector.broadcast %18 : vector<1x128xf32> to vector<64x128xf32>
      %20 = arith.addf %17, %19 : vector<64x128xf32>
      %c0_16 = arith.constant 0 : index
      %c0_17 = arith.constant 0 : index
      %21 = vector.load %arg6[%c0_16, %c0_17] : memref<64x128xf32, #tpu.memory_space<vmem>>, vector<64x128xf32>
      %22 = arith.addf %20, %21 : vector<64x128xf32>
      %c0_18 = arith.constant 0 : index
      %c0_19 = arith.constant 0 : index
      %23 = vector.load %arg7[%c0_18, %c0_19] : memref<64x128xf32, #tpu.memory_space<vmem>>, vector<64x128xf32>
      tpu.vector_store %arg7[%c0_18, %c0_19], %22 {strides = array<i32>} : memref<64x128xf32, #tpu.memory_space<vmem>>, vector<64x128xf32>,
    } else {
    }
    return
  }
  func.func @transform_0(%arg0: i32, %arg1: i32, %arg2: i32) -> (i32, i32) {
    %c0_i32 = arith.constant 0 : i32
    return %arg0, %arg2 : i32, i32
  }
  func.func @transform_1(%arg0: i32, %arg1: i32, %arg2: i32) -> (i32, i32) {
    %c0_i32 = arith.constant 0 : i32
    return %arg2, %arg1 : i32, i32
  }
  func.func @transform_2(%arg0: i32, %arg1: i32, %arg2: i32) -> (i32, i32) {
    %c0_i32 = arith.constant 0 : i32
    %c0_i32_0 = arith.constant 0 : i32
    return %c0_i32, %arg1 : i32, i32
  }
  func.func @transform_3(%arg0: i32, %arg1: i32, %arg2: i32) -> (i32, i32) {
    %c0_i32 = arith.constant 0 : i32
    return %arg0, %arg1 : i32, i32
  }
  func.func @transform_4(%arg0: i32, %arg1: i32, %arg2: i32) -> (i32, i32) {
    %c0_i32 = arith.constant 0 : i32
    return %arg0, %arg1 : i32, i32
  }
}

module attributes {stable_mosaic.version = 11 : i64} {
  func.func @kernel(%arg0: i32, %arg1: i32, %arg2: i32, %arg3: memref<16x128xbf16, #tpu.memory_space<vmem>>, %arg4: memref<128x128xbf16, #tpu.memory_space<vmem>>, %arg5: memref<1x128xf32, #tpu.memory_space<vmem>>, %arg6: memref<16x128xf32, #tpu.memory_space<vmem>>, %arg7: memref<16x128xf32, #tpu.memory_space<vmem>>) attributes {dimension_semantics = [#tpu.dimension_semantics<parallel>, #tpu.dimension_semantics<parallel>, #tpu.dimension_semantics<arbitrary>], iteration_bounds = array<i64: 1, 1, 1>, scalar_prefetch = 0 : i64, scratch_operands = 1 : i64, tpu.core_type = #tpu.core_type<tc>, window_params = [{transform_indices = @transform_0, window_bounds = array<i64: 16, 128>}, {transform_indices = @transform_1, window_bounds = array<i64: 128, 128>}, {transform_indices = @transform_2, window_bounds = array<i64: 1, 128>}, {transform_indices = @transform_3, window_bounds = array<i64: 16, 128>}]} {
    %c0_i32 = arith.constant 0 : i32
    %0 = arith.cmpi eq, %arg2, %c0_i32 : i32
    %1 = arith.extui %0 : i1 to i32
    %c0_i32_0 = arith.constant 0 : i32
    %2 = arith.cmpi ne, %1, %c0_i32_0 : i32
    scf.if %2 {
      %cst_10 = arith.constant 0.000000e+00 : f32
      %12 = vector.broadcast %cst_10 : f32 to vector<16x128xf32>
      %c0_11 = arith.constant 0 : index
      %c0_12 = arith.constant 0 : index
      %13 = vector.load %arg7[%c0_11, %c0_12] : memref<16x128xf32, #tpu.memory_space<vmem>>, vector<16x128xf32>
      tpu.vector_store %arg7[%c0_11, %c0_12], %12 {strides = array<i32>} : memref<16x128xf32, #tpu.memory_space<vmem>>, vector<16x128xf32>,
    } else {
    }
    %c0 = arith.constant 0 : index
    %c0_1 = arith.constant 0 : index
    %3 = vector.load %arg3[%c0, %c0_1] : memref<16x128xbf16, #tpu.memory_space<vmem>>, vector<16x128xbf16>
    %c0_2 = arith.constant 0 : index
    %c0_3 = arith.constant 0 : index
    %4 = vector.load %arg7[%c0_2, %c0_3] : memref<16x128xf32, #tpu.memory_space<vmem>>, vector<16x128xf32>
    %c0_4 = arith.constant 0 : index
    %c0_5 = arith.constant 0 : index
    %5 = vector.load %arg4[%c0_4, %c0_5] : memref<128x128xbf16, #tpu.memory_space<vmem>>, vector<128x128xbf16>
    %cst = arith.constant dense<0.000000e+00> : vector<16x128xf32>
    %6 = tpu.matmul %3, %5, %cst {dimension_numbers = #tpu.dot_dimension_numbers<[1], [0], [0], [1], [0, 0, 1, 1], [], []>} : vector<16x128xbf16>, vector<128x128xbf16>, vector<16x128xf32> -> vector<16x128xf32>
    %7 = arith.addf %4, %6 : vector<16x128xf32>
    %c0_6 = arith.constant 0 : index
    %c0_7 = arith.constant 0 : index
    %8 = vector.load %arg7[%c0_6, %c0_7] : memref<16x128xf32, #tpu.memory_space<vmem>>, vector<16x128xf32>
    tpu.vector_store %arg7[%c0_6, %c0_7], %7 {strides = array<i32>} : memref<16x128xf32, #tpu.memory_space<vmem>>, vector<16x128xf32>,
    %c0_i32_8 = arith.constant 0 : i32
    %9 = arith.cmpi eq, %arg2, %c0_i32_8 : i32
    %10 = arith.extui %9 : i1 to i32
    %c0_i32_9 = arith.constant 0 : i32
    %11 = arith.cmpi ne, %10, %c0_i32_9 : i32
    scf.if %11 {
      %c0_10 = arith.constant 0 : index
      %c0_11 = arith.constant 0 : index
      %12 = vector.load %arg7[%c0_10, %c0_11] : memref<16x128xf32, #tpu.memory_space<vmem>>, vector<16x128xf32>
      %c0_12 = arith.constant 0 : index
      %c0_13 = arith.constant 0 : index
      %13 = vector.load %arg5[%c0_12, %c0_13] : memref<1x128xf32, #tpu.memory_space<vmem>>, vector<1x128xf32>
      %14 = vector.broadcast %13 : vector<1x128xf32> to vector<16x128xf32>
      %15 = arith.addf %12, %14 : vector<16x128xf32>
      %c0_14 = arith.constant 0 : index
      %c0_15 = arith.constant 0 : index
      %16 = vector.load %arg6[%c0_14, %c0_15] : memref<16x128xf32, #tpu.memory_space<vmem>>, vector<16x128xf32>
      tpu.vector_store %arg6[%c0_14, %c0_15], %15 {strides = array<i32>} : memref<16x128xf32, #tpu.memory_space<vmem>>, vector<16x128xf32>,
    } else {
    }
    return
  }
  func.func @transform_0(%arg0: i32, %arg1: i32, %arg2: i32) -> (i32, i32) {
    %c0_i32 = arith.constant 0 : i32
    return %arg0, %arg2 : i32, i32
  }
  func.func @transform_1(%arg0: i32, %arg1: i32, %arg2: i32) -> (i32, i32) {
    %c0_i32 = arith.constant 0 : i32
    return %arg2, %arg1 : i32, i32
  }
  func.func @transform_2(%arg0: i32, %arg1: i32, %arg2: i32) -> (i32, i32) {
    %c0_i32 = arith.constant 0 : i32
    %c0_i32_0 = arith.constant 0 : i32
    return %c0_i32, %arg1 : i32, i32
  }
  func.func @transform_3(%arg0: i32, %arg1: i32, %arg2: i32) -> (i32, i32) {
    %c0_i32 = arith.constant 0 : i32
    return %arg0, %arg1 : i32, i32
  }
}

module attributes {stable_mosaic.version = 11 : i64} {
  func.func @kernel(%arg0: i32, %arg1: i32, %arg2: i32, %arg3: memref<16x256xbf16, #tpu.memory_space<vmem>>, %arg4: memref<256x128xbf16, #tpu.memory_space<vmem>>, %arg5: memref<1x128xf32, #tpu.memory_space<vmem>>, %arg6: memref<16x128xf32, #tpu.memory_space<vmem>>, %arg7: memref<16x128xf32, #tpu.memory_space<vmem>>, %arg8: memref<16x128xf32, #tpu.memory_space<vmem>>) attributes {dimension_semantics = [#tpu.dimension_semantics<parallel>, #tpu.dimension_semantics<parallel>, #tpu.dimension_semantics<arbitrary>], iteration_bounds = array<i64: 1, 1, 1>, scalar_prefetch = 0 : i64, scratch_operands = 1 : i64, tpu.core_type = #tpu.core_type<tc>, window_params = [{transform_indices = @transform_0, window_bounds = array<i64: 16, 256>}, {transform_indices = @transform_1, window_bounds = array<i64: 256, 128>}, {transform_indices = @transform_2, window_bounds = array<i64: 1, 128>}, {transform_indices = @transform_3, window_bounds = array<i64: 16, 128>}, {transform_indices = @transform_4, window_bounds = array<i64: 16, 128>}]} {
    %c0_i32 = arith.constant 0 : i32
    %0 = arith.cmpi eq, %arg2, %c0_i32 : i32
    %1 = arith.extui %0 : i1 to i32
    %c0_i32_0 = arith.constant 0 : i32
    %2 = arith.cmpi ne, %1, %c0_i32_0 : i32
    scf.if %2 {
      %cst_12 = arith.constant 0.000000e+00 : f32
      %17 = vector.broadcast %cst_12 : f32 to vector<16x128xf32>
      %c0_13 = arith.constant 0 : index
      %c0_14 = arith.constant 0 : index
      %18 = vector.load %arg8[%c0_13, %c0_14] : memref<16x128xf32, #tpu.memory_space<vmem>>, vector<16x128xf32>
      tpu.vector_store %arg8[%c0_13, %c0_14], %17 {strides = array<i32>} : memref<16x128xf32, #tpu.memory_space<vmem>>, vector<16x128xf32>,
    } else {
    }
    %c0 = arith.constant 0 : index
    %c0_1 = arith.constant 0 : index
    %3 = vector.load %arg3[%c0, %c0_1] : memref<16x256xbf16, #tpu.memory_space<vmem>>, vector<16x256xbf16>
    %cst = arith.constant 0.000000e+00 : bf16
    %4 = vector.broadcast %cst : bf16 to vector<16x256xbf16>
    %5 = arith.cmpf oge, %3, %4 : vector<16x256xbf16>
    %cst_2 = arith.constant 1.000980e-02 : bf16
    %6 = vector.broadcast %cst_2 : bf16 to vector<16x256xbf16>
    %7 = arith.mulf %6, %3 : vector<16x256xbf16>
    %8 = arith.select %5, %3, %7 : vector<16x256xi1>, vector<16x256xbf16>
    %c0_3 = arith.constant 0 : index
    %c0_4 = arith.constant 0 : index
    %9 = vector.load %arg8[%c0_3, %c0_4] : memref<16x128xf32, #tpu.memory_space<vmem>>, vector<16x128xf32>
    %c0_5 = arith.constant 0 : index
    %c0_6 = arith.constant 0 : index
    %10 = vector.load %arg4[%c0_5, %c0_6] : memref<256x128xbf16, #tpu.memory_space<vmem>>, vector<256x128xbf16>
    %cst_7 = arith.constant dense<0.000000e+00> : vector<16x128xf32>
    %11 = tpu.matmul %8, %10, %cst_7 {dimension_numbers = #tpu.dot_dimension_numbers<[1], [0], [0], [1], [0, 0, 1, 1], [], []>} : vector<16x256xbf16>, vector<256x128xbf16>, vector<16x128xf32> -> vector<16x128xf32>
    %12 = arith.addf %9, %11 : vector<16x128xf32>
    %c0_8 = arith.constant 0 : index
    %c0_9 = arith.constant 0 : index
    %13 = vector.load %arg8[%c0_8, %c0_9] : memref<16x128xf32, #tpu.memory_space<vmem>>, vector<16x128xf32>
    tpu.vector_store %arg8[%c0_8, %c0_9], %12 {strides = array<i32>} : memref<16x128xf32, #tpu.memory_space<vmem>>, vector<16x128xf32>,
    %c0_i32_10 = arith.constant 0 : i32
    %14 = arith.cmpi eq, %arg2, %c0_i32_10 : i32
    %15 = arith.extui %14 : i1 to i32
    %c0_i32_11 = arith.constant 0 : i32
    %16 = arith.cmpi ne, %15, %c0_i32_11 : i32
    scf.if %16 {
      %c0_12 = arith.constant 0 : index
      %c0_13 = arith.constant 0 : index
      %17 = vector.load %arg8[%c0_12, %c0_13] : memref<16x128xf32, #tpu.memory_space<vmem>>, vector<16x128xf32>
      %c0_14 = arith.constant 0 : index
      %c0_15 = arith.constant 0 : index
      %18 = vector.load %arg5[%c0_14, %c0_15] : memref<1x128xf32, #tpu.memory_space<vmem>>, vector<1x128xf32>
      %19 = vector.broadcast %18 : vector<1x128xf32> to vector<16x128xf32>
      %20 = arith.addf %17, %19 : vector<16x128xf32>
      %c0_16 = arith.constant 0 : index
      %c0_17 = arith.constant 0 : index
      %21 = vector.load %arg6[%c0_16, %c0_17] : memref<16x128xf32, #tpu.memory_space<vmem>>, vector<16x128xf32>
      %22 = arith.addf %20, %21 : vector<16x128xf32>
      %c0_18 = arith.constant 0 : index
      %c0_19 = arith.constant 0 : index
      %23 = vector.load %arg7[%c0_18, %c0_19] : memref<16x128xf32, #tpu.memory_space<vmem>>, vector<16x128xf32>
      tpu.vector_store %arg7[%c0_18, %c0_19], %22 {strides = array<i32>} : memref<16x128xf32, #tpu.memory_space<vmem>>, vector<16x128xf32>,
    } else {
    }
    return
  }
  func.func @transform_0(%arg0: i32, %arg1: i32, %arg2: i32) -> (i32, i32) {
    %c0_i32 = arith.constant 0 : i32
    return %arg0, %arg2 : i32, i32
  }
  func.func @transform_1(%arg0: i32, %arg1: i32, %arg2: i32) -> (i32, i32) {
    %c0_i32 = arith.constant 0 : i32
    return %arg2, %arg1 : i32, i32
  }
  func.func @transform_2(%arg0: i32, %arg1: i32, %arg2: i32) -> (i32, i32) {
    %c0_i32 = arith.constant 0 : i32
    %c0_i32_0 = arith.constant 0 : i32
    return %c0_i32, %arg1 : i32, i32
  }
  func.func @transform_3(%arg0: i32, %arg1: i32, %arg2: i32) -> (i32, i32) {
    %c0_i32 = arith.constant 0 : i32
    return %arg0, %arg1 : i32, i32
  }
  func.func @transform_4(%arg0: i32, %arg1: i32, %arg2: i32) -> (i32, i32) {
    %c0_i32 = arith.constant 0 : i32
    return %arg0, %arg1 : i32, i32
  }
}

module attributes {stable_mosaic.version = 11 : i64} {
  func.func @kernel(%arg0: i32, %arg1: i32, %arg2: i32, %arg3: memref<256x128xbf16, #tpu.memory_space<vmem>>, %arg4: memref<128x128xbf16, #tpu.memory_space<vmem>>, %arg5: memref<1x128xf32, #tpu.memory_space<vmem>>, %arg6: memref<256x128xf32, #tpu.memory_space<vmem>>, %arg7: memref<256x128xf32, #tpu.memory_space<vmem>>) attributes {dimension_semantics = [#tpu.dimension_semantics<parallel>, #tpu.dimension_semantics<parallel>, #tpu.dimension_semantics<arbitrary>], iteration_bounds = array<i64: 1, 1, 1>, scalar_prefetch = 0 : i64, scratch_operands = 1 : i64, tpu.core_type = #tpu.core_type<tc>, window_params = [{transform_indices = @transform_0, window_bounds = array<i64: 256, 128>}, {transform_indices = @transform_1, window_bounds = array<i64: 128, 128>}, {transform_indices = @transform_2, window_bounds = array<i64: 1, 128>}, {transform_indices = @transform_3, window_bounds = array<i64: 256, 128>}]} {
    %c0_i32 = arith.constant 0 : i32
    %0 = arith.cmpi eq, %arg2, %c0_i32 : i32
    %1 = arith.extui %0 : i1 to i32
    %c0_i32_0 = arith.constant 0 : i32
    %2 = arith.cmpi ne, %1, %c0_i32_0 : i32
    scf.if %2 {
      %cst_10 = arith.constant 0.000000e+00 : f32
      %12 = vector.broadcast %cst_10 : f32 to vector<256x128xf32>
      %c0_11 = arith.constant 0 : index
      %c0_12 = arith.constant 0 : index
      %13 = vector.load %arg7[%c0_11, %c0_12] : memref<256x128xf32, #tpu.memory_space<vmem>>, vector<256x128xf32>
      tpu.vector_store %arg7[%c0_11, %c0_12], %12 {strides = array<i32>} : memref<256x128xf32, #tpu.memory_space<vmem>>, vector<256x128xf32>,
    } else {
    }
    %c0 = arith.constant 0 : index
    %c0_1 = arith.constant 0 : index
    %3 = vector.load %arg3[%c0, %c0_1] : memref<256x128xbf16, #tpu.memory_space<vmem>>, vector<256x128xbf16>
    %c0_2 = arith.constant 0 : index
    %c0_3 = arith.constant 0 : index
    %4 = vector.load %arg7[%c0_2, %c0_3] : memref<256x128xf32, #tpu.memory_space<vmem>>, vector<256x128xf32>
    %c0_4 = arith.constant 0 : index
    %c0_5 = arith.constant 0 : index
    %5 = vector.load %arg4[%c0_4, %c0_5] : memref<128x128xbf16, #tpu.memory_space<vmem>>, vector<128x128xbf16>
    %cst = arith.constant dense<0.000000e+00> : vector<256x128xf32>
    %6 = tpu.matmul %3, %5, %cst {dimension_numbers = #tpu.dot_dimension_numbers<[1], [0], [0], [1], [0, 0, 1, 1], [], []>} : vector<256x128xbf16>, vector<128x128xbf16>, vector<256x128xf32> -> vector<256x128xf32>
    %7 = arith.addf %4, %6 : vector<256x128xf32>
    %c0_6 = arith.constant 0 : index
    %c0_7 = arith.constant 0 : index
    %8 = vector.load %arg7[%c0_6, %c0_7] : memref<256x128xf32, #tpu.memory_space<vmem>>, vector<256x128xf32>
    tpu.vector_store %arg7[%c0_6, %c0_7], %7 {strides = array<i32>} : memref<256x128xf32, #tpu.memory_space<vmem>>, vector<256x128xf32>,
    %c0_i32_8 = arith.constant 0 : i32
    %9 = arith.cmpi eq, %arg2, %c0_i32_8 : i32
    %10 = arith.extui %9 : i1 to i32
    %c0_i32_9 = arith.constant 0 : i32
    %11 = arith.cmpi ne, %10, %c0_i32_9 : i32
    scf.if %11 {
      %c0_10 = arith.constant 0 : index
      %c0_11 = arith.constant 0 : index
      %12 = vector.load %arg7[%c0_10, %c0_11] : memref<256x128xf32, #tpu.memory_space<vmem>>, vector<256x128xf32>
      %c0_12 = arith.constant 0 : index
      %c0_13 = arith.constant 0 : index
      %13 = vector.load %arg5[%c0_12, %c0_13] : memref<1x128xf32, #tpu.memory_space<vmem>>, vector<1x128xf32>
      %14 = vector.broadcast %13 : vector<1x128xf32> to vector<256x128xf32>
      %15 = arith.addf %12, %14 : vector<256x128xf32>
      %c0_14 = arith.constant 0 : index
      %c0_15 = arith.constant 0 : index
      %16 = vector.load %arg6[%c0_14, %c0_15] : memref<256x128xf32, #tpu.memory_space<vmem>>, vector<256x128xf32>
      tpu.vector_store %arg6[%c0_14, %c0_15], %15 {strides = array<i32>} : memref<256x128xf32, #tpu.memory_space<vmem>>, vector<256x128xf32>,
    } else {
    }
    return
  }
  func.func @transform_0(%arg0: i32, %arg1: i32, %arg2: i32) -> (i32, i32) {
    %c0_i32 = arith.constant 0 : i32
    return %arg0, %arg2 : i32, i32
  }
  func.func @transform_1(%arg0: i32, %arg1: i32, %arg2: i32) -> (i32, i32) {
    %c0_i32 = arith.constant 0 : i32
    return %arg2, %arg1 : i32, i32
  }
  func.func @transform_2(%arg0: i32, %arg1: i32, %arg2: i32) -> (i32, i32) {
    %c0_i32 = arith.constant 0 : i32
    %c0_i32_0 = arith.constant 0 : i32
    return %c0_i32, %arg1 : i32, i32
  }
  func.func @transform_3(%arg0: i32, %arg1: i32, %arg2: i32) -> (i32, i32) {
    %c0_i32 = arith.constant 0 : i32
    return %arg0, %arg1 : i32, i32
  }
}

module attributes {stable_mosaic.version = 11 : i64} {
  func.func @kernel(%arg0: i32, %arg1: i32, %arg2: i32, %arg3: memref<256x128xbf16, #tpu.memory_space<vmem>>, %arg4: memref<128x128xbf16, #tpu.memory_space<vmem>>, %arg5: memref<1x128xf32, #tpu.memory_space<vmem>>, %arg6: memref<256x128xf32, #tpu.memory_space<vmem>>, %arg7: memref<256x128xf32, #tpu.memory_space<vmem>>, %arg8: memref<256x128xf32, #tpu.memory_space<vmem>>) attributes {dimension_semantics = [#tpu.dimension_semantics<parallel>, #tpu.dimension_semantics<parallel>, #tpu.dimension_semantics<arbitrary>], iteration_bounds = array<i64: 1, 1, 1>, scalar_prefetch = 0 : i64, scratch_operands = 1 : i64, tpu.core_type = #tpu.core_type<tc>, window_params = [{transform_indices = @transform_0, window_bounds = array<i64: 256, 128>}, {transform_indices = @transform_1, window_bounds = array<i64: 128, 128>}, {transform_indices = @transform_2, window_bounds = array<i64: 1, 128>}, {transform_indices = @transform_3, window_bounds = array<i64: 256, 128>}, {transform_indices = @transform_4, window_bounds = array<i64: 256, 128>}]} {
    %c0_i32 = arith.constant 0 : i32
    %0 = arith.cmpi eq, %arg2, %c0_i32 : i32
    %1 = arith.extui %0 : i1 to i32
    %c0_i32_0 = arith.constant 0 : i32
    %2 = arith.cmpi ne, %1, %c0_i32_0 : i32
    scf.if %2 {
      %cst_12 = arith.constant 0.000000e+00 : f32
      %17 = vector.broadcast %cst_12 : f32 to vector<256x128xf32>
      %c0_13 = arith.constant 0 : index
      %c0_14 = arith.constant 0 : index
      %18 = vector.load %arg8[%c0_13, %c0_14] : memref<256x128xf32, #tpu.memory_space<vmem>>, vector<256x128xf32>
      tpu.vector_store %arg8[%c0_13, %c0_14], %17 {strides = array<i32>} : memref<256x128xf32, #tpu.memory_space<vmem>>, vector<256x128xf32>,
    } else {
    }
    %c0 = arith.constant 0 : index
    %c0_1 = arith.constant 0 : index
    %3 = vector.load %arg3[%c0, %c0_1] : memref<256x128xbf16, #tpu.memory_space<vmem>>, vector<256x128xbf16>
    %cst = arith.constant 0.000000e+00 : bf16
    %4 = vector.broadcast %cst : bf16 to vector<256x128xbf16>
    %5 = arith.cmpf oge, %3, %4 : vector<256x128xbf16>
    %cst_2 = arith.constant 1.000980e-02 : bf16
    %6 = vector.broadcast %cst_2 : bf16 to vector<256x128xbf16>
    %7 = arith.mulf %6, %3 : vector<256x128xbf16>
    %8 = arith.select %5, %3, %7 : vector<256x128xi1>, vector<256x128xbf16>
    %c0_3 = arith.constant 0 : index
    %c0_4 = arith.constant 0 : index
    %9 = vector.load %arg8[%c0_3, %c0_4] : memref<256x128xf32, #tpu.memory_space<vmem>>, vector<256x128xf32>
    %c0_5 = arith.constant 0 : index
    %c0_6 = arith.constant 0 : index
    %10 = vector.load %arg4[%c0_5, %c0_6] : memref<128x128xbf16, #tpu.memory_space<vmem>>, vector<128x128xbf16>
    %cst_7 = arith.constant dense<0.000000e+00> : vector<256x128xf32>
    %11 = tpu.matmul %8, %10, %cst_7 {dimension_numbers = #tpu.dot_dimension_numbers<[1], [0], [0], [1], [0, 0, 1, 1], [], []>} : vector<256x128xbf16>, vector<128x128xbf16>, vector<256x128xf32> -> vector<256x128xf32>
    %12 = arith.addf %9, %11 : vector<256x128xf32>
    %c0_8 = arith.constant 0 : index
    %c0_9 = arith.constant 0 : index
    %13 = vector.load %arg8[%c0_8, %c0_9] : memref<256x128xf32, #tpu.memory_space<vmem>>, vector<256x128xf32>
    tpu.vector_store %arg8[%c0_8, %c0_9], %12 {strides = array<i32>} : memref<256x128xf32, #tpu.memory_space<vmem>>, vector<256x128xf32>,
    %c0_i32_10 = arith.constant 0 : i32
    %14 = arith.cmpi eq, %arg2, %c0_i32_10 : i32
    %15 = arith.extui %14 : i1 to i32
    %c0_i32_11 = arith.constant 0 : i32
    %16 = arith.cmpi ne, %15, %c0_i32_11 : i32
    scf.if %16 {
      %c0_12 = arith.constant 0 : index
      %c0_13 = arith.constant 0 : index
      %17 = vector.load %arg8[%c0_12, %c0_13] : memref<256x128xf32, #tpu.memory_space<vmem>>, vector<256x128xf32>
      %c0_14 = arith.constant 0 : index
      %c0_15 = arith.constant 0 : index
      %18 = vector.load %arg5[%c0_14, %c0_15] : memref<1x128xf32, #tpu.memory_space<vmem>>, vector<1x128xf32>
      %19 = vector.broadcast %18 : vector<1x128xf32> to vector<256x128xf32>
      %20 = arith.addf %17, %19 : vector<256x128xf32>
      %c0_16 = arith.constant 0 : index
      %c0_17 = arith.constant 0 : index
      %21 = vector.load %arg6[%c0_16, %c0_17] : memref<256x128xf32, #tpu.memory_space<vmem>>, vector<256x128xf32>
      %22 = arith.addf %20, %21 : vector<256x128xf32>
      %c0_18 = arith.constant 0 : index
      %c0_19 = arith.constant 0 : index
      %23 = vector.load %arg7[%c0_18, %c0_19] : memref<256x128xf32, #tpu.memory_space<vmem>>, vector<256x128xf32>
      tpu.vector_store %arg7[%c0_18, %c0_19], %22 {strides = array<i32>} : memref<256x128xf32, #tpu.memory_space<vmem>>, vector<256x128xf32>,
    } else {
    }
    return
  }
  func.func @transform_0(%arg0: i32, %arg1: i32, %arg2: i32) -> (i32, i32) {
    %c0_i32 = arith.constant 0 : i32
    return %arg0, %arg2 : i32, i32
  }
  func.func @transform_1(%arg0: i32, %arg1: i32, %arg2: i32) -> (i32, i32) {
    %c0_i32 = arith.constant 0 : i32
    return %arg2, %arg1 : i32, i32
  }
  func.func @transform_2(%arg0: i32, %arg1: i32, %arg2: i32) -> (i32, i32) {
    %c0_i32 = arith.constant 0 : i32
    %c0_i32_0 = arith.constant 0 : i32
    return %c0_i32, %arg1 : i32, i32
  }
  func.func @transform_3(%arg0: i32, %arg1: i32, %arg2: i32) -> (i32, i32) {
    %c0_i32 = arith.constant 0 : i32
    return %arg0, %arg1 : i32, i32
  }
  func.func @transform_4(%arg0: i32, %arg1: i32, %arg2: i32) -> (i32, i32) {
    %c0_i32 = arith.constant 0 : i32
    return %arg0, %arg1 : i32, i32
  }
}

module attributes {stable_mosaic.version = 11 : i64} {
  func.func @_softplus_mask_kernel(%arg0: i32, %arg1: memref<8x128xf32, #tpu.memory_space<vmem>>, %arg2: memref<8x128xf32, #tpu.memory_space<vmem>>, %arg3: memref<8x128xf32, #tpu.memory_space<vmem>>, %arg4: memref<8x128xf32, #tpu.memory_space<vmem>>, %arg5: memref<8x128xf32, #tpu.memory_space<vmem>>) attributes {dimension_semantics = [#tpu.dimension_semantics<parallel>], iteration_bounds = array<i64: 1>, scalar_prefetch = 0 : i64, scratch_operands = 0 : i64, tpu.core_type = #tpu.core_type<tc>, window_params = [{transform_indices = @transform_0, window_bounds = array<i64: 8, 128>}, {transform_indices = @transform_1, window_bounds = array<i64: 8, 128>}, {transform_indices = @transform_2, window_bounds = array<i64: 8, 128>}, {transform_indices = @transform_3, window_bounds = array<i64: 8, 128>}, {transform_indices = @transform_4, window_bounds = array<i64: 8, 128>}]} {
    %c0 = arith.constant 0 : index
    %c0_0 = arith.constant 0 : index
    %0 = vector.load %arg1[%c0, %c0_0] : memref<8x128xf32, #tpu.memory_space<vmem>>, vector<8x128xf32>
    %cst = arith.constant 2.000000e+01 : f32
    %1 = vector.broadcast %cst : f32 to vector<8x128xf32>
    %2 = arith.cmpf ogt, %0, %1 : vector<8x128xf32>
    %cst_1 = arith.constant 2.000000e+01 : f32
    %3 = vector.broadcast %cst_1 : f32 to vector<8x128xf32>
    %4 = arith.minimumf %0, %3 : vector<8x128xf32>
    %5 = math.exp %4 : vector<8x128xf32>
    %6 = math.log1p %5 : vector<8x128xf32>
    %7 = arith.select %2, %0, %6 : vector<8x128xi1>, vector<8x128xf32>
    %c0_2 = arith.constant 0 : index
    %c0_3 = arith.constant 0 : index
    %8 = vector.load %arg2[%c0_2, %c0_3] : memref<8x128xf32, #tpu.memory_space<vmem>>, vector<8x128xf32>
    %9 = arith.mulf %7, %8 : vector<8x128xf32>
    %c0_4 = arith.constant 0 : index
    %c0_5 = arith.constant 0 : index
    %10 = vector.load %arg4[%c0_4, %c0_5] : memref<8x128xf32, #tpu.memory_space<vmem>>, vector<8x128xf32>
    tpu.vector_store %arg4[%c0_4, %c0_5], %9 {strides = array<i32>} : memref<8x128xf32, #tpu.memory_space<vmem>>, vector<8x128xf32>,
    %c0_6 = arith.constant 0 : index
    %c0_7 = arith.constant 0 : index
    %11 = vector.load %arg3[%c0_6, %c0_7] : memref<8x128xf32, #tpu.memory_space<vmem>>, vector<8x128xf32>
    %12 = arith.mulf %7, %11 : vector<8x128xf32>
    %c0_8 = arith.constant 0 : index
    %c0_9 = arith.constant 0 : index
    %13 = vector.load %arg5[%c0_8, %c0_9] : memref<8x128xf32, #tpu.memory_space<vmem>>, vector<8x128xf32>
    tpu.vector_store %arg5[%c0_8, %c0_9], %12 {strides = array<i32>} : memref<8x128xf32, #tpu.memory_space<vmem>>, vector<8x128xf32>,
    return
  }
  func.func @transform_0(%arg0: i32) -> (i32, i32) {
    %c0_i32 = arith.constant 0 : i32
    %c0_i32_0 = arith.constant 0 : i32
    return %arg0, %c0_i32 : i32, i32
  }
  func.func @transform_1(%arg0: i32) -> (i32, i32) {
    %c0_i32 = arith.constant 0 : i32
    %c0_i32_0 = arith.constant 0 : i32
    return %arg0, %c0_i32 : i32, i32
  }
  func.func @transform_2(%arg0: i32) -> (i32, i32) {
    %c0_i32 = arith.constant 0 : i32
    %c0_i32_0 = arith.constant 0 : i32
    return %arg0, %c0_i32 : i32, i32
  }
  func.func @transform_3(%arg0: i32) -> (i32, i32) {
    %c0_i32 = arith.constant 0 : i32
    %c0_i32_0 = arith.constant 0 : i32
    return %arg0, %c0_i32 : i32, i32
  }
  func.func @transform_4(%arg0: i32) -> (i32, i32) {
    %c0_i32 = arith.constant 0 : i32
    %c0_i32_0 = arith.constant 0 : i32
    return %arg0, %c0_i32 : i32, i32
  }
}

</mosaic_0001>

<llo_original>
// kernel: _lambda_.18
$region0: #{_lambda_.18}
  #allocation0 [shape = 'u32[]', space=smem, size = 0x4, offset = 0x4, fixed_abs, tag = 'smem constant byte address 0x4 - core index']
  #allocation1 [shape = 'u32[72,128]{1,0:T(1,128)}', space=vmem, size = 0x9000, scoped, tag = 'internal scratch']
  %s0 = inlined_call_operand.vmem [shape: f32[8,128], index: 0, kind: input, shape index: {}]
  %s1 = inlined_call_operand.vmem [shape: f32[8,128], index: 1, kind: input, shape index: {}]
  %s2 = inlined_call_operand.vmem [shape: f32[8,128], index: 2, kind: output, shape index: {}]
  %s3 = sld [smem:[#allocation0]]
  $region18: #{_lambda_.18} parent=0
    _
  %s5 = ssub.s32 1, %s3
  %s6 = scalar_select 0, %s5, %s3
  // Predicated region
  $region2: #{_lambda_.18} parent=0 // pred_check
    _
  $region3: #{_lambda_.18} parent=0 // pred_check_branch
    %8 = sbr.rel (0) target = $region5
  $region4: #{_lambda_.18} parent=0 // pred_region
    _
  $region5: #{_lambda_.18} parent=0 // pred_fallthru
    _
  // Predicated region
  $region6: #{_lambda_.18} parent=0 // pred_check
    _
  $region7: #{_lambda_.18} parent=0 // pred_check_branch
    %10 = sbr.rel (0) target = $region9
  $region8: #{_lambda_.18} parent=0 // pred_region
    _
  $region9: #{_lambda_.18} parent=0 // pred_fallthru
    _
  %v11 = vld [vmem:[%s0] sm:$0xff]
  %v12 = vld [vmem:[%s1] sm:$0xff]
  %v13 = vmul.f32 %v11, %v11
  %v14 = vmul.f32 %v12, %v12
  %v15 = vadd.f32 %v13, %v14
  %v16 = vadd.f32 %v15, 1e-09
  %v17 = vrsqrt.pop %v16
  %v18 = vmul.f32 %v17, %v16
  %v19 = vmul.f32 %v18, %v17
  %v20 = vmul.f32 0.5, %v19
  %v21 = vsub.f32 1.5, %v20
  %v22 = vmul.f32 %v17, %v21
  %v23 = vmul.f32 %v16, %v22
  %vm24 = vcmp.eq.f32.partialorder %v16, inf
  %v25 = vsel %vm24, %v16, %v23
  %vm26 = vcmp.eq.f32.partialorder %v16, 0.0
  %v27 = vand.u32 %v16, 2147483648
  %v28 = vsel %vm26, %v27, %v25
  %29 = vst [vmem:[%s2] sm:$0xff] %v28
  // Predicated region
  $region10: #{_lambda_.18} parent=0 // pred_check
    _
  $region11: #{_lambda_.18} parent=0 // pred_check_branch
    %31 = sbr.rel (0) target = $region13
  $region12: #{_lambda_.18} parent=0 // pred_region
    _
  $region13: #{_lambda_.18} parent=0 // pred_fallthru
    _
  // Predicated region
  $region14: #{_lambda_.18} parent=0 // pred_check
    _
  $region15: #{_lambda_.18} parent=0 // pred_check_branch
    %33 = sbr.rel (0) target = $region17
  $region16: #{_lambda_.18} parent=0 // pred_region
    _
  $region17: #{_lambda_.18} parent=0 // pred_fallthru
    _

// kernel: _lambda_.17
$region0: #{_lambda_.17}
  #allocation0 [shape = 'u32[]', space=smem, size = 0x4, offset = 0x4, fixed_abs, tag = 'smem constant byte address 0x4 - core index']
  #allocation1 [shape = 'u32[72,128]{1,0:T(1,128)}', space=vmem, size = 0x9000, scoped, tag = 'internal scratch']
  #allocation2 [shape = 'f32[40,128]{1,0:T(8,128)}', space=vmem, size = 0x5000, scoped, tag = 'scratch operand']
  %s0 = inlined_call_operand.vmem [shape: f32[40,128], index: 0, kind: input, shape index: {}]
  %s1 = inlined_call_operand.vmem [shape: f32[128,128], index: 1, kind: input, shape index: {}]
  %s2 = inlined_call_operand.vmem [shape: f32[1,128], index: 2, kind: input, shape index: {}]
  %s3 = inlined_call_operand.vmem [shape: f32[40,128], index: 3, kind: output, shape index: {}]
  %s4 = sld [smem:[#allocation0]]
  $region30: #{_lambda_.17} parent=0
    _
  %s6 = ssub.s32 1, %s4
  %s7 = scalar_select 0, %s6, %s4
  // Predicated region
  $region2: #{_lambda_.17} parent=0 // pred_check
    _
  $region3: #{_lambda_.17} parent=0 // pred_check_branch
    %9 = sbr.rel (0) target = $region5
  $region4: #{_lambda_.17} parent=0 // pred_region
    _
  $region5: #{_lambda_.17} parent=0 // pred_fallthru
    _
  // Predicated region
  $region6: #{_lambda_.17} parent=0 // pred_check
    _
  $region7: #{_lambda_.17} parent=0 // pred_check_branch
    %11 = sbr.rel (0) target = $region9
  $region8: #{_lambda_.17} parent=0 // pred_region
    _
  $region9: #{_lambda_.17} parent=0 // pred_fallthru
    _
  // Predicated region
  $region10: #{_lambda_.17} parent=0 // pred_check
    _
  $region11: #{_lambda_.17} parent=0 // pred_check_branch
    %13 = sbr.rel (0) target = $region13
  $region12: #{_lambda_.17} parent=0 // pred_region
    _
  $region13: #{_lambda_.17} parent=0 // pred_fallthru
    _
  %p14 = scmp.eq.s32.totalorder 0, 0
  // Predicated region
  $region14: #{_lambda_.17} parent=0 // pred_check
    %p15 = pneg %p14
  $region15: #{_lambda_.17} parent=0 // pred_check_branch
    %17 = sbr.rel (%p15) target = $region17
  $region16: #{_lambda_.17} parent=0 // pred_region
    %18 = vst [vmem:[#allocation2] sm:$0xff] 0.0
    %19 = vst [vmem:[#allocation2 + $0x8] sm:$0xff] 0.0
    %20 = vst [vmem:[#allocation2 + $0x10] sm:$0xff] 0.0
    %21 = vst [vmem:[#allocation2 + $0x18] sm:$0xff] 0.0
    %22 = vst [vmem:[#allocation2 + $0x20] sm:$0xff] 0.0
  $region17: #{_lambda_.17} parent=0 // pred_fallthru
    _
  %v23 = vld [vmem:[%s0] sm:$0xff]
  %v24 = vld [vmem:[%s0 + $0x8] sm:$0xff]
  %v25 = vld [vmem:[%s0 + $0x10] sm:$0xff]
  %v26 = vld [vmem:[%s0 + $0x18] sm:$0xff]
  %v27 = vld [vmem:[%s0 + $0x20] sm:$0xff]
  %v28 = vld [vmem:[#allocation2] sm:$0xff]
  %v29 = vld [vmem:[#allocation2 + $0x8] sm:$0xff]
  %v30 = vld [vmem:[#allocation2 + $0x10] sm:$0xff]
  %v31 = vld [vmem:[#allocation2 + $0x18] sm:$0xff]
  %v32 = vld [vmem:[#allocation2 + $0x20] sm:$0xff]
  %v33 = vld [vmem:[%s1] sm:$0xff]
  %v34 = vld [vmem:[%s1 + $0x8] sm:$0xff]
  %v35 = vld [vmem:[%s1 + $0x10] sm:$0xff]
  %v36 = vld [vmem:[%s1 + $0x18] sm:$0xff]
  %v37 = vld [vmem:[%s1 + $0x20] sm:$0xff]
  %v38 = vld [vmem:[%s1 + $0x28] sm:$0xff]
  %v39 = vld [vmem:[%s1 + $0x30] sm:$0xff]
  %v40 = vld [vmem:[%s1 + $0x38] sm:$0xff]
  %v41 = vld [vmem:[%s1 + $0x40] sm:$0xff]
  %v42 = vld [vmem:[%s1 + $0x48] sm:$0xff]
  %v43 = vld [vmem:[%s1 + $0x50] sm:$0xff]
  %v44 = vld [vmem:[%s1 + $0x58] sm:$0xff]
  %v45 = vld [vmem:[%s1 + $0x60] sm:$0xff]
  %v46 = vld [vmem:[%s1 + $0x68] sm:$0xff]
  %v47 = vld [vmem:[%s1 + $0x70] sm:$0xff]
  %v48 = vld [vmem:[%s1 + $0x78] sm:$0xff]
  %49 = vmatpush.msra.mxu0 %v48
  %50 = vmatpush.msra.mxu0 %v47
  %51 = vmatpush.msra.mxu0 %v46
  %52 = vmatpush.msra.mxu0 %v45
  %53 = vmatpush.msra.mxu0 %v44
  %54 = vmatpush.msra.mxu0 %v43
  %55 = vmatpush.msra.mxu0 %v42
  %56 = vmatpush.msra.mxu0 %v41
  %57 = vmatpush.msra.mxu0 %v40
  %58 = vmatpush.msra.mxu0 %v39
  %59 = vmatpush.msra.mxu0 %v38
  %60 = vmatpush.msra.mxu0 %v37
  %61 = vmatpush.msra.mxu0 %v36
  %62 = vmatpush.msra.mxu0 %v35
  %63 = vmatpush.msra.mxu0 %v34
  %64 = vmatpush.msra.mxu0 %v33
  %65 = vmatmul.f32.gmra.mxu0 %v23
  %v66 = vpop.f32.mrf.mxu0
  %v67 = vadd.f32 0.0, %v66
  %68 = vmatmul.f32.gmra.mxu0 %v24
  %v69 = vpop.f32.mrf.mxu0
  %v70 = vadd.f32 0.0, %v69
  %71 = vmatmul.f32.gmra.mxu0 %v25
  %v72 = vpop.f32.mrf.mxu0
  %v73 = vadd.f32 0.0, %v72
  %74 = vmatmul.f32.gmra.mxu0 %v26
  %v75 = vpop.f32.mrf.mxu0
  %v76 = vadd.f32 0.0, %v75
  %77 = vmatmul.f32.gmra.mxu0 %v27
  %v78 = vpop.f32.mrf.mxu0
  %v79 = vadd.f32 0.0, %v78
  %80 = vdwg.mxu0
  %v81 = vadd.f32 %v28, %v67
  %v82 = vadd.f32 %v29, %v70
  %v83 = vadd.f32 %v30, %v73
  %v84 = vadd.f32 %v31, %v76
  %v85 = vadd.f32 %v32, %v79
  %86 = vst [vmem:[#allocation2] sm:$0xff] %v81
  %87 = vst [vmem:[#allocation2 + $0x8] sm:$0xff] %v82
  %88 = vst [vmem:[#allocation2 + $0x10] sm:$0xff] %v83
  %89 = vst [vmem:[#allocation2 + $0x18] sm:$0xff] %v84
  %90 = vst [vmem:[#allocation2 + $0x20] sm:$0xff] %v85
  // Predicated region
  $region18: #{_lambda_.17} parent=0 // pred_check
    %p91 = pneg %p14
  $region19: #{_lambda_.17} parent=0 // pred_check_branch
    %93 = sbr.rel (%p91) target = $region21
  $region20: #{_lambda_.17} parent=0 // pred_region
    %v94 = vld [vmem:[#allocation2] sm:$0xff]
    %v95 = vld [vmem:[#allocation2 + $0x8] sm:$0xff]
    %v96 = vld [vmem:[#allocation2 + $0x10] sm:$0xff]
    %v97 = vld [vmem:[#allocation2 + $0x18] sm:$0xff]
    %v98 = vld [vmem:[#allocation2 + $0x20] sm:$0xff]
    %v99 = vld [vmem:[%s2] sm:$0x1]
    %v101 = vperm.slane %v99, 0
    %v103 = vadd.f32 %v94, %v101
    %v104 = vadd.f32 %v95, %v101
    %v105 = vadd.f32 %v96, %v101
    %v106 = vadd.f32 %v97, %v101
    %v107 = vadd.f32 %v98, %v101
    %108 = vst [vmem:[%s3] sm:$0xff] %v103
    %109 = vst [vmem:[%s3 + $0x8] sm:$0xff] %v104
    %110 = vst [vmem:[%s3 + $0x10] sm:$0xff] %v105
    %111 = vst [vmem:[%s3 + $0x18] sm:$0xff] %v106
    %112 = vst [vmem:[%s3 + $0x20] sm:$0xff] %v107
  $region21: #{_lambda_.17} parent=0 // pred_fallthru
    _
  // Predicated region
  $region22: #{_lambda_.17} parent=0 // pred_check
    _
  $region23: #{_lambda_.17} parent=0 // pred_check_branch
    %114 = sbr.rel (0) target = $region25
  $region24: #{_lambda_.17} parent=0 // pred_region
    _
  $region25: #{_lambda_.17} parent=0 // pred_fallthru
    _
  // Predicated region
  $region26: #{_lambda_.17} parent=0 // pred_check
    _
  $region27: #{_lambda_.17} parent=0 // pred_check_branch
    %116 = sbr.rel (0) target = $region29
  $region28: #{_lambda_.17} parent=0 // pred_region
    _
  $region29: #{_lambda_.17} parent=0 // pred_fallthru
    _

// kernel: _lambda_.19
$region0: #{_lambda_.19}
  #allocation0 [shape = 'u32[]', space=smem, size = 0x4, offset = 0x4, fixed_abs, tag = 'smem constant byte address 0x4 - core index']
  #allocation1 [shape = 'u32[72,128]{1,0:T(1,128)}', space=vmem, size = 0x9000, scoped, tag = 'internal scratch']
  #allocation2 [shape = 'f32[312,128]{1,0:T(8,128)}', space=vmem, size = 0x27000, scoped, tag = 'scratch operand']
  %s0 = inlined_call_operand.vmem [shape: bf16[312,128], index: 0, kind: input, shape index: {}]
  %s1 = inlined_call_operand.vmem [shape: bf16[128,128], index: 1, kind: input, shape index: {}]
  %s2 = inlined_call_operand.vmem [shape: f32[1,128], index: 2, kind: input, shape index: {}]
  %s3 = inlined_call_operand.vmem [shape: f32[312,128], index: 3, kind: output, shape index: {}]
  %s4 = sld [smem:[#allocation0]]
  $region30: #{_lambda_.19} parent=0
    _
  %s6 = ssub.s32 1, %s4
  %s7 = scalar_select 0, %s6, %s4
  // Predicated region
  $region2: #{_lambda_.19} parent=0 // pred_check
    _
  $region3: #{_lambda_.19} parent=0 // pred_check_branch
    %9 = sbr.rel (0) target = $region5
  $region4: #{_lambda_.19} parent=0 // pred_region
    _
  $region5: #{_lambda_.19} parent=0 // pred_fallthru
    _
  // Predicated region
  $region6: #{_lambda_.19} parent=0 // pred_check
    _
  $region7: #{_lambda_.19} parent=0 // pred_check_branch
    %11 = sbr.rel (0) target = $region9
  $region8: #{_lambda_.19} parent=0 // pred_region
    _
  $region9: #{_lambda_.19} parent=0 // pred_fallthru
    _
  // Predicated region
  $region10: #{_lambda_.19} parent=0 // pred_check
    _
  $region11: #{_lambda_.19} parent=0 // pred_check_branch
    %13 = sbr.rel (0) target = $region13
  $region12: #{_lambda_.19} parent=0 // pred_region
    _
  $region13: #{_lambda_.19} parent=0 // pred_fallthru
    _
  %p14 = scmp.eq.s32.totalorder 0, 0
  // Predicated region
  $region14: #{_lambda_.19} parent=0 // pred_check
    %p15 = pneg %p14
  $region15: #{_lambda_.19} parent=0 // pred_check_branch
    %17 = sbr.rel (%p15) target = $region17
  $region16: #{_lambda_.19} parent=0 // pred_region
    %18 = vst [vmem:[#allocation2] sm:$0xff] 0.0
    %19 = vst [vmem:[#allocation2 + $0x8] sm:$0xff] 0.0
    %20 = vst [vmem:[#allocation2 + $0x10] sm:$0xff] 0.0
    %21 = vst [vmem:[#allocation2 + $0x18] sm:$0xff] 0.0
    %22 = vst [vmem:[#allocation2 + $0x20] sm:$0xff] 0.0
    %23 = vst [vmem:[#allocation2 + $0x28] sm:$0xff] 0.0
    %24 = vst [vmem:[#allocation2 + $0x30] sm:$0xff] 0.0
    %25 = vst [vmem:[#allocation2 + $0x38] sm:$0xff] 0.0
    %26 = vst [vmem:[#allocation2 + $0x40] sm:$0xff] 0.0
    %27 = vst [vmem:[#allocation2 + $0x48] sm:$0xff] 0.0
    %28 = vst [vmem:[#allocation2 + $0x50] sm:$0xff] 0.0
    %29 = vst [vmem:[#allocation2 + $0x58] sm:$0xff] 0.0
    %30 = vst [vmem:[#allocation2 + $0x60] sm:$0xff] 0.0
    %31 = vst [vmem:[#allocation2 + $0x68] sm:$0xff] 0.0
    %32 = vst [vmem:[#allocation2 + $0x70] sm:$0xff] 0.0
    %33 = vst [vmem:[#allocation2 + $0x78] sm:$0xff] 0.0
    %34 = vst [vmem:[#allocation2 + $0x80] sm:$0xff] 0.0
    %35 = vst [vmem:[#allocation2 + $0x88] sm:$0xff] 0.0
    %36 = vst [vmem:[#allocation2 + $0x90] sm:$0xff] 0.0
    %37 = vst [vmem:[#allocation2 + $0x98] sm:$0xff] 0.0
    %38 = vst [vmem:[#allocation2 + $0xa0] sm:$0xff] 0.0
    %39 = vst [vmem:[#allocation2 + $0xa8] sm:$0xff] 0.0
    %40 = vst [vmem:[#allocation2 + $0xb0] sm:$0xff] 0.0
    %41 = vst [vmem:[#allocation2 + $0xb8] sm:$0xff] 0.0
    %42 = vst [vmem:[#allocation2 + $0xc0] sm:$0xff] 0.0
    %43 = vst [vmem:[#allocation2 + $0xc8] sm:$0xff] 0.0
    %44 = vst [vmem:[#allocation2 + $0xd0] sm:$0xff] 0.0
    %45 = vst [vmem:[#allocation2 + $0xd8] sm:$0xff] 0.0
    %46 = vst [vmem:[#allocation2 + $0xe0] sm:$0xff] 0.0
    %47 = vst [vmem:[#allocation2 + $0xe8] sm:$0xff] 0.0
    %48 = vst [vmem:[#allocation2 + $0xf0] sm:$0xff] 0.0
    %49 = vst [vmem:[#allocation2 + $0xf8] sm:$0xff] 0.0
    %50 = vst [vmem:[#allocation2 + $0x100] sm:$0xff] 0.0
    %51 = vst [vmem:[#allocation2 + $0x108] sm:$0xff] 0.0
    %52 = vst [vmem:[#allocation2 + $0x110] sm:$0xff] 0.0
    %53 = vst [vmem:[#allocation2 + $0x118] sm:$0xff] 0.0
    %54 = vst [vmem:[#allocation2 + $0x120] sm:$0xff] 0.0
    %55 = vst [vmem:[#allocation2 + $0x128] sm:$0xff] 0.0
    %56 = vst [vmem:[#allocation2 + $0x130] sm:$0xff] 0.0
  $region17: #{_lambda_.19} parent=0 // pred_fallthru
    _
  %v57 = vld [vmem:[%s0] sm:$0xf]
  %v58 = vld [vmem:[%s0 + $0x4] sm:$0xf]
  %v59 = vld [vmem:[%s0 + $0x8] sm:$0xf]
  %v60 = vld [vmem:[%s0 + $0xc] sm:$0xf]
  %v61 = vld [vmem:[%s0 + $0x10] sm:$0xf]
  %v62 = vld [vmem:[%s0 + $0x14] sm:$0xf]
  %v63 = vld [vmem:[%s0 + $0x18] sm:$0xf]
  %v64 = vld [vmem:[%s0 + $0x1c] sm:$0xf]
  %v65 = vld [vmem:[%s0 + $0x20] sm:$0xf]
  %v66 = vld [vmem:[%s0 + $0x24] sm:$0xf]
  %v67 = vld [vmem:[%s0 + $0x28] sm:$0xf]
  %v68 = vld [vmem:[%s0 + $0x2c] sm:$0xf]
  %v69 = vld [vmem:[%s0 + $0x30] sm:$0xf]
  %v70 = vld [vmem:[%s0 + $0x34] sm:$0xf]
  %v71 = vld [vmem:[%s0 + $0x38] sm:$0xf]
  %v72 = vld [vmem:[%s0 + $0x3c] sm:$0xf]
  %v73 = vld [vmem:[%s0 + $0x40] sm:$0xf]
  %v74 = vld [vmem:[%s0 + $0x44] sm:$0xf]
  %v75 = vld [vmem:[%s0 + $0x48] sm:$0xf]
  %v76 = vld [vmem:[%s0 + $0x4c] sm:$0xf]
  %v77 = vld [vmem:[%s0 + $0x50] sm:$0xf]
  %v78 = vld [vmem:[%s0 + $0x54] sm:$0xf]
  %v79 = vld [vmem:[%s0 + $0x58] sm:$0xf]
  %v80 = vld [vmem:[%s0 + $0x5c] sm:$0xf]
  %v81 = vld [vmem:[%s0 + $0x60] sm:$0xf]
  %v82 = vld [vmem:[%s0 + $0x64] sm:$0xf]
  %v83 = vld [vmem:[%s0 + $0x68] sm:$0xf]
  %v84 = vld [vmem:[%s0 + $0x6c] sm:$0xf]
  %v85 = vld [vmem:[%s0 + $0x70] sm:$0xf]
  %v86 = vld [vmem:[%s0 + $0x74] sm:$0xf]
  %v87 = vld [vmem:[%s0 + $0x78] sm:$0xf]
  %v88 = vld [vmem:[%s0 + $0x7c] sm:$0xf]
  %v89 = vld [vmem:[%s0 + $0x80] sm:$0xf]
  %v90 = vld [vmem:[%s0 + $0x84] sm:$0xf]
  %v91 = vld [vmem:[%s0 + $0x88] sm:$0xf]
  %v92 = vld [vmem:[%s0 + $0x8c] sm:$0xf]
  %v93 = vld [vmem:[%s0 + $0x90] sm:$0xf]
  %v94 = vld [vmem:[%s0 + $0x94] sm:$0xf]
  %v95 = vld [vmem:[%s0 + $0x98] sm:$0xf]
  %v96 = vld [vmem:[#allocation2] sm:$0xff]
  %v97 = vld [vmem:[#allocation2 + $0x8] sm:$0xff]
  %v98 = vld [vmem:[#allocation2 + $0x10] sm:$0xff]
  %v99 = vld [vmem:[#allocation2 + $0x18] sm:$0xff]
  %v100 = vld [vmem:[#allocation2 + $0x20] sm:$0xff]
  %v101 = vld [vmem:[#allocation2 + $0x28] sm:$0xff]
  %v102 = vld [vmem:[#allocation2 + $0x30] sm:$0xff]
  %v103 = vld [vmem:[#allocation2 + $0x38] sm:$0xff]
  %v104 = vld [vmem:[#allocation2 + $0x40] sm:$0xff]
  %v105 = vld [vmem:[#allocation2 + $0x48] sm:$0xff]
  %v106 = vld [vmem:[#allocation2 + $0x50] sm:$0xff]
  %v107 = vld [vmem:[#allocation2 + $0x58] sm:$0xff]
  %v108 = vld [vmem:[#allocation2 + $0x60] sm:$0xff]
  %v109 = vld [vmem:[#allocation2 + $0x68] sm:$0xff]
  %v110 = vld [vmem:[#allocation2 + $0x70] sm:$0xff]
  %v111 = vld [vmem:[#allocation2 + $0x78] sm:$0xff]
  %v112 = vld [vmem:[#allocation2 + $0x80] sm:$0xff]
  %v113 = vld [vmem:[#allocation2 + $0x88] sm:$0xff]
  %v114 = vld [vmem:[#allocation2 + $0x90] sm:$0xff]
  %v115 = vld [vmem:[#allocation2 + $0x98] sm:$0xff]
  %v116 = vld [vmem:[#allocation2 + $0xa0] sm:$0xff]
  %v117 = vld [vmem:[#allocation2 + $0xa8] sm:$0xff]
  %v118 = vld [vmem:[#allocation2 + $0xb0] sm:$0xff]
  %v119 = vld [vmem:[#allocation2 + $0xb8] sm:$0xff]
  %v120 = vld [vmem:[#allocation2 + $0xc0] sm:$0xff]
  %v121 = vld [vmem:[#allocation2 + $0xc8] sm:$0xff]
  %v122 = vld [vmem:[#allocation2 + $0xd0] sm:$0xff]
  %v123 = vld [vmem:[#allocation2 + $0xd8] sm:$0xff]
  %v124 = vld [vmem:[#allocation2 + $0xe0] sm:$0xff]
  %v125 = vld [vmem:[#allocation2 + $0xe8] sm:$0xff]
  %v126 = vld [vmem:[#allocation2 + $0xf0] sm:$0xff]
  %v127 = vld [vmem:[#allocation2 + $0xf8] sm:$0xff]
  %v128 = vld [vmem:[#allocation2 + $0x100] sm:$0xff]
  %v129 = vld [vmem:[#allocation2 + $0x108] sm:$0xff]
  %v130 = vld [vmem:[#allocation2 + $0x110] sm:$0xff]
  %v131 = vld [vmem:[#allocation2 + $0x118] sm:$0xff]
  %v132 = vld [vmem:[#allocation2 + $0x120] sm:$0xff]
  %v133 = vld [vmem:[#allocation2 + $0x128] sm:$0xff]
  %v134 = vld [vmem:[#allocation2 + $0x130] sm:$0xff]
  %v135 = vld [vmem:[%s1] sm:$0xf]
  %v136 = vld [vmem:[%s1 + $0x4] sm:$0xf]
  %v137 = vld [vmem:[%s1 + $0x8] sm:$0xf]
  %v138 = vld [vmem:[%s1 + $0xc] sm:$0xf]
  %v139 = vld [vmem:[%s1 + $0x10] sm:$0xf]
  %v140 = vld [vmem:[%s1 + $0x14] sm:$0xf]
  %v141 = vld [vmem:[%s1 + $0x18] sm:$0xf]
  %v142 = vld [vmem:[%s1 + $0x1c] sm:$0xf]
  %v143 = vld [vmem:[%s1 + $0x20] sm:$0xf]
  %v144 = vld [vmem:[%s1 + $0x24] sm:$0xf]
  %v145 = vld [vmem:[%s1 + $0x28] sm:$0xf]
  %v146 = vld [vmem:[%s1 + $0x2c] sm:$0xf]
  %v147 = vld [vmem:[%s1 + $0x30] sm:$0xf]
  %v148 = vld [vmem:[%s1 + $0x34] sm:$0xf]
  %v149 = vld [vmem:[%s1 + $0x38] sm:$0xf]
  %v150 = vld [vmem:[%s1 + $0x3c] sm:$0xf]
  %v190 = vunpack.c.l.b16 %v57
  %v191 = vunpack.c.l.b16 %v58
  %v192 = vunpack.c.l.b16 %v59
  %v193 = vunpack.c.l.b16 %v60
  %v194 = vunpack.c.l.b16 %v61
  %v195 = vunpack.c.l.b16 %v62
  %v196 = vunpack.c.l.b16 %v63
  %v197 = vunpack.c.l.b16 %v64
  %v198 = vunpack.c.l.b16 %v65
  %v199 = vunpack.c.l.b16 %v66
  %v200 = vunpack.c.l.b16 %v67
  %v201 = vunpack.c.l.b16 %v68
  %v202 = vunpack.c.l.b16 %v69
  %v203 = vunpack.c.l.b16 %v70
  %v204 = vunpack.c.l.b16 %v71
  %v205 = vunpack.c.l.b16 %v72
  %v206 = vunpack.c.l.b16 %v73
  %v207 = vunpack.c.l.b16 %v74
  %v208 = vunpack.c.l.b16 %v75
  %v209 = vunpack.c.l.b16 %v76
  %v210 = vunpack.c.l.b16 %v77
  %v211 = vunpack.c.l.b16 %v78
  %v212 = vunpack.c.l.b16 %v79
  %v213 = vunpack.c.l.b16 %v80
  %v214 = vunpack.c.l.b16 %v81
  %v215 = vunpack.c.l.b16 %v82
  %v216 = vunpack.c.l.b16 %v83
  %v217 = vunpack.c.l.b16 %v84
  %v218 = vunpack.c.l.b16 %v85
  %v219 = vunpack.c.l.b16 %v86
  %v220 = vunpack.c.l.b16 %v87
  %v221 = vunpack.c.l.b16 %v88
  %v222 = vunpack.c.l.b16 %v89
  %v223 = vunpack.c.l.b16 %v90
  %v224 = vunpack.c.l.b16 %v91
  %v225 = vunpack.c.l.b16 %v92
  %v226 = vunpack.c.l.b16 %v93
  %v227 = vunpack.c.l.b16 %v94
  %v228 = vunpack.c.l.b16 %v95
  %v229 = vpack.c.b16 %v191, %v190
  %v230 = vpack.c.b16 %v193, %v192
  %v231 = vpack.c.b16 %v195, %v194
  %v232 = vpack.c.b16 %v197, %v196
  %v233 = vpack.c.b16 %v199, %v198
  %v234 = vpack.c.b16 %v201, %v200
  %v235 = vpack.c.b16 %v203, %v202
  %v236 = vpack.c.b16 %v205, %v204
  %v237 = vpack.c.b16 %v207, %v206
  %v238 = vpack.c.b16 %v209, %v208
  %v239 = vpack.c.b16 %v211, %v210
  %v240 = vpack.c.b16 %v213, %v212
  %v241 = vpack.c.b16 %v215, %v214
  %v242 = vpack.c.b16 %v217, %v216
  %v243 = vpack.c.b16 %v219, %v218
  %v244 = vpack.c.b16 %v221, %v220
  %v245 = vpack.c.b16 %v223, %v222
  %v246 = vpack.c.b16 %v225, %v224
  %v247 = vpack.c.b16 %v227, %v226
  %v248 = vpack.c.b16 %v228, %v228
  %v285 = vunpack.c.l.b16 %v135
  %v286 = vunpack.c.l.b16 %v136
  %v287 = vunpack.c.l.b16 %v137
  %v288 = vunpack.c.l.b16 %v138
  %v289 = vunpack.c.l.b16 %v139
  %v290 = vunpack.c.l.b16 %v140
  %v291 = vunpack.c.l.b16 %v141
  %v292 = vunpack.c.l.b16 %v142
  %v293 = vunpack.c.l.b16 %v143
  %v294 = vunpack.c.l.b16 %v144
  %v295 = vunpack.c.l.b16 %v145
  %v296 = vunpack.c.l.b16 %v146
  %v297 = vunpack.c.l.b16 %v147
  %v298 = vunpack.c.l.b16 %v148
  %v299 = vunpack.c.l.b16 %v149
  %v300 = vunpack.c.l.b16 %v150
  %v301 = vpack.c.b16 %v286, %v285
  %v302 = vpack.c.b16 %v288, %v287
  %v303 = vpack.c.b16 %v290, %v289
  %v304 = vpack.c.b16 %v292, %v291
  %v305 = vpack.c.b16 %v294, %v293
  %v306 = vpack.c.b16 %v296, %v295
  %v307 = vpack.c.b16 %v298, %v297
  %v308 = vpack.c.b16 %v300, %v299
  %317 = vmatpush.bf16.msra.mxu0 %v308
  %318 = vmatpush.bf16.msra.mxu0 %v307
  %319 = vmatpush.bf16.msra.mxu0 %v306
  %320 = vmatpush.bf16.msra.mxu0 %v305
  %321 = vmatpush.bf16.msra.mxu0 %v304
  %322 = vmatpush.bf16.msra.mxu0 %v303
  %323 = vmatpush.bf16.msra.mxu0 %v302
  %324 = vmatpush.bf16.msra.mxu0 %v301
  %325 = vmatmul.bf16.gmra.mxu0 %v229
  %v326 = vpop.f32.mrf.mxu0
  %v327 = vadd.f32 0.0, %v326
  %v328 = vpop.f32.mrf.mxu0
  %v329 = vadd.f32 0.0, %v328
  %330 = vmatmul.bf16.gmra.mxu0 %v230
  %v331 = vpop.f32.mrf.mxu0
  %v332 = vadd.f32 0.0, %v331
  %v333 = vpop.f32.mrf.mxu0
  %v334 = vadd.f32 0.0, %v333
  %335 = vmatmul.bf16.gmra.mxu0 %v231
  %v336 = vpop.f32.mrf.mxu0
  %v337 = vadd.f32 0.0, %v336
  %v338 = vpop.f32.mrf.mxu0
  %v339 = vadd.f32 0.0, %v338
  %340 = vmatmul.bf16.gmra.mxu0 %v232
  %v341 = vpop.f32.mrf.mxu0
  %v342 = vadd.f32 0.0, %v341
  %v343 = vpop.f32.mrf.mxu0
  %v344 = vadd.f32 0.0, %v343
  %345 = vmatmul.bf16.gmra.mxu0 %v233
  %v346 = vpop.f32.mrf.mxu0
  %v347 = vadd.f32 0.0, %v346
  %v348 = vpop.f32.mrf.mxu0
  %v349 = vadd.f32 0.0, %v348
  %350 = vmatmul.bf16.gmra.mxu0 %v234
  %v351 = vpop.f32.mrf.mxu0
  %v352 = vadd.f32 0.0, %v351
  %v353 = vpop.f32.mrf.mxu0
  %v354 = vadd.f32 0.0, %v353
  %355 = vmatmul.bf16.gmra.mxu0 %v235
  %v356 = vpop.f32.mrf.mxu0
  %v357 = vadd.f32 0.0, %v356
  %v358 = vpop.f32.mrf.mxu0
  %v359 = vadd.f32 0.0, %v358
  %360 = vmatmul.bf16.gmra.mxu0 %v236
  %v361 = vpop.f32.mrf.mxu0
  %v362 = vadd.f32 0.0, %v361
  %v363 = vpop.f32.mrf.mxu0
  %v364 = vadd.f32 0.0, %v363
  %365 = vmatmul.bf16.gmra.mxu0 %v237
  %v366 = vpop.f32.mrf.mxu0
  %v367 = vadd.f32 0.0, %v366
  %v368 = vpop.f32.mrf.mxu0
  %v369 = vadd.f32 0.0, %v368
  %370 = vmatmul.bf16.gmra.mxu0 %v238
  %v371 = vpop.f32.mrf.mxu0
  %v372 = vadd.f32 0.0, %v371
  %v373 = vpop.f32.mrf.mxu0
  %v374 = vadd.f32 0.0, %v373
  %375 = vmatmul.bf16.gmra.mxu0 %v239
  %v376 = vpop.f32.mrf.mxu0
  %v377 = vadd.f32 0.0, %v376
  %v378 = vpop.f32.mrf.mxu0
  %v379 = vadd.f32 0.0, %v378
  %380 = vmatmul.bf16.gmra.mxu0 %v240
  %v381 = vpop.f32.mrf.mxu0
  %v382 = vadd.f32 0.0, %v381
  %v383 = vpop.f32.mrf.mxu0
  %v384 = vadd.f32 0.0, %v383
  %385 = vmatmul.bf16.gmra.mxu0 %v241
  %v386 = vpop.f32.mrf.mxu0
  %v387 = vadd.f32 0.0, %v386
  %v388 = vpop.f32.mrf.mxu0
  %v389 = vadd.f32 0.0, %v388
  %390 = vmatmul.bf16.gmra.mxu0 %v242
  %v391 = vpop.f32.mrf.mxu0
  %v392 = vadd.f32 0.0, %v391
  %v393 = vpop.f32.mrf.mxu0
  %v394 = vadd.f32 0.0, %v393
  %395 = vmatmul.bf16.gmra.mxu0 %v243
  %v396 = vpop.f32.mrf.mxu0
  %v397 = vadd.f32 0.0, %v396
  %v398 = vpop.f32.mrf.mxu0
  %v399 = vadd.f32 0.0, %v398
  %400 = vmatmul.bf16.gmra.mxu0 %v244
  %v401 = vpop.f32.mrf.mxu0
  %v402 = vadd.f32 0.0, %v401
  %v403 = vpop.f32.mrf.mxu0
  %v404 = vadd.f32 0.0, %v403
  %405 = vmatmul.bf16.gmra.mxu0 %v245
  %v406 = vpop.f32.mrf.mxu0
  %v407 = vadd.f32 0.0, %v406
  %v408 = vpop.f32.mrf.mxu0
  %v409 = vadd.f32 0.0, %v408
  %410 = vmatmul.bf16.gmra.mxu0 %v246
  %v411 = vpop.f32.mrf.mxu0
  %v412 = vadd.f32 0.0, %v411
  %v413 = vpop.f32.mrf.mxu0
  %v414 = vadd.f32 0.0, %v413
  %415 = vmatmul.bf16.gmra.mxu0 %v247
  %v416 = vpop.f32.mrf.mxu0
  %v417 = vadd.f32 0.0, %v416
  %v418 = vpop.f32.mrf.mxu0
  %v419 = vadd.f32 0.0, %v418
  %420 = vmatmul.bf16.gmra.mxu0 %v248
  %v421 = vpop.f32.mrf.mxu0
  %v422 = vadd.f32 0.0, %v421
  %v423 = vpop.f32.mrf.mxu0
  %424 = vdwg.mxu0
  %v425 = vadd.f32 %v96, %v327
  %v426 = vadd.f32 %v97, %v329
  %v427 = vadd.f32 %v98, %v332
  %v428 = vadd.f32 %v99, %v334
  %v429 = vadd.f32 %v100, %v337
  %v430 = vadd.f32 %v101, %v339
  %v431 = vadd.f32 %v102, %v342
  %v432 = vadd.f32 %v103, %v344
  %v433 = vadd.f32 %v104, %v347
  %v434 = vadd.f32 %v105, %v349
  %v435 = vadd.f32 %v106, %v352
  %v436 = vadd.f32 %v107, %v354
  %v437 = vadd.f32 %v108, %v357
  %v438 = vadd.f32 %v109, %v359
  %v439 = vadd.f32 %v110, %v362
  %v440 = vadd.f32 %v111, %v364
  %v441 = vadd.f32 %v112, %v367
  %v442 = vadd.f32 %v113, %v369
  %v443 = vadd.f32 %v114, %v372
  %v444 = vadd.f32 %v115, %v374
  %v445 = vadd.f32 %v116, %v377
  %v446 = vadd.f32 %v117, %v379
  %v447 = vadd.f32 %v118, %v382
  %v448 = vadd.f32 %v119, %v384
  %v449 = vadd.f32 %v120, %v387
  %v450 = vadd.f32 %v121, %v389
  %v451 = vadd.f32 %v122, %v392
  %v452 = vadd.f32 %v123, %v394
  %v453 = vadd.f32 %v124, %v397
  %v454 = vadd.f32 %v125, %v399
  %v455 = vadd.f32 %v126, %v402
  %v456 = vadd.f32 %v127, %v404
  %v457 = vadd.f32 %v128, %v407
  %v458 = vadd.f32 %v129, %v409
  %v459 = vadd.f32 %v130, %v412
  %v460 = vadd.f32 %v131, %v414
  %v461 = vadd.f32 %v132, %v417
  %v462 = vadd.f32 %v133, %v419
  %v463 = vadd.f32 %v134, %v422
  %464 = vst [vmem:[#allocation2] sm:$0xff] %v425
  %465 = vst [vmem:[#allocation2 + $0x8] sm:$0xff] %v426
  %466 = vst [vmem:[#allocation2 + $0x10] sm:$0xff] %v427
  %467 = vst [vmem:[#allocation2 + $0x18] sm:$0xff] %v428
  %468 = vst [vmem:[#allocation2 + $0x20] sm:$0xff] %v429
  %469 = vst [vmem:[#allocation2 + $0x28] sm:$0xff] %v430
  %470 = vst [vmem:[#allocation2 + $0x30] sm:$0xff] %v431
  %471 = vst [vmem:[#allocation2 + $0x38] sm:$0xff] %v432
  %472 = vst [vmem:[#allocation2 + $0x40] sm:$0xff] %v433
  %473 = vst [vmem:[#allocation2 + $0x48] sm:$0xff] %v434
  %474 = vst [vmem:[#allocation2 + $0x50] sm:$0xff] %v435
  %475 = vst [vmem:[#allocation2 + $0x58] sm:$0xff] %v436
  %476 = vst [vmem:[#allocation2 + $0x60] sm:$0xff] %v437
  %477 = vst [vmem:[#allocation2 + $0x68] sm:$0xff] %v438
  %478 = vst [vmem:[#allocation2 + $0x70] sm:$0xff] %v439
  %479 = vst [vmem:[#allocation2 + $0x78] sm:$0xff] %v440
  %480 = vst [vmem:[#allocation2 + $0x80] sm:$0xff] %v441
  %481 = vst [vmem:[#allocation2 + $0x88] sm:$0xff] %v442
  %482 = vst [vmem:[#allocation2 + $0x90] sm:$0xff] %v443
  %483 = vst [vmem:[#allocation2 + $0x98] sm:$0xff] %v444
  %484 = vst [vmem:[#allocation2 + $0xa0] sm:$0xff] %v445
  %485 = vst [vmem:[#allocation2 + $0xa8] sm:$0xff] %v446
  %486 = vst [vmem:[#allocation2 + $0xb0] sm:$0xff] %v447
  %487 = vst [vmem:[#allocation2 + $0xb8] sm:$0xff] %v448
  %488 = vst [vmem:[#allocation2 + $0xc0] sm:$0xff] %v449
  %489 = vst [vmem:[#allocation2 + $0xc8] sm:$0xff] %v450
  %490 = vst [vmem:[#allocation2 + $0xd0] sm:$0xff] %v451
  %491 = vst [vmem:[#allocation2 + $0xd8] sm:$0xff] %v452
  %492 = vst [vmem:[#allocation2 + $0xe0] sm:$0xff] %v453
  %493 = vst [vmem:[#allocation2 + $0xe8] sm:$0xff] %v454
  %494 = vst [vmem:[#allocation2 + $0xf0] sm:$0xff] %v455
  %495 = vst [vmem:[#allocation2 + $0xf8] sm:$0xff] %v456
  %496 = vst [vmem:[#allocation2 + $0x100] sm:$0xff] %v457
  %497 = vst [vmem:[#allocation2 + $0x108] sm:$0xff] %v458
  %498 = vst [vmem:[#allocation2 + $0x110] sm:$0xff] %v459
  %499 = vst [vmem:[#allocation2 + $0x118] sm:$0xff] %v460
  %500 = vst [vmem:[#allocation2 + $0x120] sm:$0xff] %v461
  %501 = vst [vmem:[#allocation2 + $0x128] sm:$0xff] %v462
  %502 = vst [vmem:[#allocation2 + $0x130] sm:$0xff] %v463
  // Predicated region
  $region18: #{_lambda_.19} parent=0 // pred_check
    %p503 = pneg %p14
  $region19: #{_lambda_.19} parent=0 // pred_check_branch
    %505 = sbr.rel (%p503) target = $region21
  $region20: #{_lambda_.19} parent=0 // pred_region
    %v506 = vld [vmem:[#allocation2] sm:$0xff]
    %v507 = vld [vmem:[#allocation2 + $0x8] sm:$0xff]
    %v508 = vld [vmem:[#allocation2 + $0x10] sm:$0xff]
    %v509 = vld [vmem:[#allocation2 + $0x18] sm:$0xff]
    %v510 = vld [vmem:[#allocation2 + $0x20] sm:$0xff]
    %v511 = vld [vmem:[#allocation2 + $0x28] sm:$0xff]
    %v512 = vld [vmem:[#allocation2 + $0x30] sm:$0xff]
    %v513 = vld [vmem:[#allocation2 + $0x38] sm:$0xff]
    %v514 = vld [vmem:[#allocation2 + $0x40] sm:$0xff]
    %v515 = vld [vmem:[#allocation2 + $0x48] sm:$0xff]
    %v516 = vld [vmem:[#allocation2 + $0x50] sm:$0xff]
    %v517 = vld [vmem:[#allocation2 + $0x58] sm:$0xff]
    %v518 = vld [vmem:[#allocation2 + $0x60] sm:$0xff]
    %v519 = vld [vmem:[#allocation2 + $0x68] sm:$0xff]
    %v520 = vld [vmem:[#allocation2 + $0x70] sm:$0xff]
    %v521 = vld [vmem:[#allocation2 + $0x78] sm:$0xff]
    %v522 = vld [vmem:[#allocation2 + $0x80] sm:$0xff]
    %v523 = vld [vmem:[#allocation2 + $0x88] sm:$0xff]
    %v524 = vld [vmem:[#allocation2 + $0x90] sm:$0xff]
    %v525 = vld [vmem:[#allocation2 + $0x98] sm:$0xff]
    %v526 = vld [vmem:[#allocation2 + $0xa0] sm:$0xff]
    %v527 = vld [vmem:[#allocation2 + $0xa8] sm:$0xff]
    %v528 = vld [vmem:[#allocation2 + $0xb0] sm:$0xff]
    %v529 = vld [vmem:[#allocation2 + $0xb8] sm:$0xff]
    %v530 = vld [vmem:[#allocation2 + $0xc0] sm:$0xff]
    %v531 = vld [vmem:[#allocation2 + $0xc8] sm:$0xff]
    %v532 = vld [vmem:[#allocation2 + $0xd0] sm:$0xff]
    %v533 = vld [vmem:[#allocation2 + $0xd8] sm:$0xff]
    %v534 = vld [vmem:[#allocation2 + $0xe0] sm:$0xff]
    %v535 = vld [vmem:[#allocation2 + $0xe8] sm:$0xff]
    %v536 = vld [vmem:[#allocation2 + $0xf0] sm:$0xff]
    %v537 = vld [vmem:[#allocation2 + $0xf8] sm:$0xff]
    %v538 = vld [vmem:[#allocation2 + $0x100] sm:$0xff]
    %v539 = vld [vmem:[#allocation2 + $0x108] sm:$0xff]
    %v540 = vld [vmem:[#allocation2 + $0x110] sm:$0xff]
    %v541 = vld [vmem:[#allocation2 + $0x118] sm:$0xff]
    %v542 = vld [vmem:[#allocation2 + $0x120] sm:$0xff]
    %v543 = vld [vmem:[#allocation2 + $0x128] sm:$0xff]
    %v544 = vld [vmem:[#allocation2 + $0x130] sm:$0xff]
    %v545 = vld [vmem:[%s2] sm:$0x1]
    %v547 = vperm.slane %v545, 0
    %v549 = vadd.f32 %v506, %v547
    %v550 = vadd.f32 %v507, %v547
    %v551 = vadd.f32 %v508, %v547
    %v552 = vadd.f32 %v509, %v547
    %v553 = vadd.f32 %v510, %v547
    %v554 = vadd.f32 %v511, %v547
    %v555 = vadd.f32 %v512, %v547
    %v556 = vadd.f32 %v513, %v547
    %v557 = vadd.f32 %v514, %v547
    %v558 = vadd.f32 %v515, %v547
    %v559 = vadd.f32 %v516, %v547
    %v560 = vadd.f32 %v517, %v547
    %v561 = vadd.f32 %v518, %v547
    %v562 = vadd.f32 %v519, %v547
    %v563 = vadd.f32 %v520, %v547
    %v564 = vadd.f32 %v521, %v547
    %v565 = vadd.f32 %v522, %v547
    %v566 = vadd.f32 %v523, %v547
    %v567 = vadd.f32 %v524, %v547
    %v568 = vadd.f32 %v525, %v547
    %v569 = vadd.f32 %v526, %v547
    %v570 = vadd.f32 %v527, %v547
    %v571 = vadd.f32 %v528, %v547
    %v572 = vadd.f32 %v529, %v547
    %v573 = vadd.f32 %v530, %v547
    %v574 = vadd.f32 %v531, %v547
    %v575 = vadd.f32 %v532, %v547
    %v576 = vadd.f32 %v533, %v547
    %v577 = vadd.f32 %v534, %v547
    %v578 = vadd.f32 %v535, %v547
    %v579 = vadd.f32 %v536, %v547
    %v580 = vadd.f32 %v537, %v547
    %v581 = vadd.f32 %v538, %v547
    %v582 = vadd.f32 %v539, %v547
    %v583 = vadd.f32 %v540, %v547
    %v584 = vadd.f32 %v541, %v547
    %v585 = vadd.f32 %v542, %v547
    %v586 = vadd.f32 %v543, %v547
    %v587 = vadd.f32 %v544, %v547
    %588 = vst [vmem:[%s3] sm:$0xff] %v549
    %589 = vst [vmem:[%s3 + $0x8] sm:$0xff] %v550
    %590 = vst [vmem:[%s3 + $0x10] sm:$0xff] %v551
    %591 = vst [vmem:[%s3 + $0x18] sm:$0xff] %v552
    %592 = vst [vmem:[%s3 + $0x20] sm:$0xff] %v553
    %593 = vst [vmem:[%s3 + $0x28] sm:$0xff] %v554
    %594 = vst [vmem:[%s3 + $0x30] sm:$0xff] %v555
    %595 = vst [vmem:[%s3 + $0x38] sm:$0xff] %v556
    %596 = vst [vmem:[%s3 + $0x40] sm:$0xff] %v557
    %597 = vst [vmem:[%s3 + $0x48] sm:$0xff] %v558
    %598 = vst [vmem:[%s3 + $0x50] sm:$0xff] %v559
    %599 = vst [vmem:[%s3 + $0x58] sm:$0xff] %v560
    %600 = vst [vmem:[%s3 + $0x60] sm:$0xff] %v561
    %601 = vst [vmem:[%s3 + $0x68] sm:$0xff] %v562
    %602 = vst [vmem:[%s3 + $0x70] sm:$0xff] %v563
    %603 = vst [vmem:[%s3 + $0x78] sm:$0xff] %v564
    %604 = vst [vmem:[%s3 + $0x80] sm:$0xff] %v565
    %605 = vst [vmem:[%s3 + $0x88] sm:$0xff] %v566
    %606 = vst [vmem:[%s3 + $0x90] sm:$0xff] %v567
    %607 = vst [vmem:[%s3 + $0x98] sm:$0xff] %v568
    %608 = vst [vmem:[%s3 + $0xa0] sm:$0xff] %v569
    %609 = vst [vmem:[%s3 + $0xa8] sm:$0xff] %v570
    %610 = vst [vmem:[%s3 + $0xb0] sm:$0xff] %v571
    %611 = vst [vmem:[%s3 + $0xb8] sm:$0xff] %v572
    %612 = vst [vmem:[%s3 + $0xc0] sm:$0xff] %v573
    %613 = vst [vmem:[%s3 + $0xc8] sm:$0xff] %v574
    %614 = vst [vmem:[%s3 + $0xd0] sm:$0xff] %v575
    %615 = vst [vmem:[%s3 + $0xd8] sm:$0xff] %v576
    %616 = vst [vmem:[%s3 + $0xe0] sm:$0xff] %v577
    %617 = vst [vmem:[%s3 + $0xe8] sm:$0xff] %v578
    %618 = vst [vmem:[%s3 + $0xf0] sm:$0xff] %v579
    %619 = vst [vmem:[%s3 + $0xf8] sm:$0xff] %v580
    %620 = vst [vmem:[%s3 + $0x100] sm:$0xff] %v581
    %621 = vst [vmem:[%s3 + $0x108] sm:$0xff] %v582
    %622 = vst [vmem:[%s3 + $0x110] sm:$0xff] %v583
    %623 = vst [vmem:[%s3 + $0x118] sm:$0xff] %v584
    %624 = vst [vmem:[%s3 + $0x120] sm:$0xff] %v585
    %625 = vst [vmem:[%s3 + $0x128] sm:$0xff] %v586
    %626 = vst [vmem:[%s3 + $0x130] sm:$0xff] %v587
  $region21: #{_lambda_.19} parent=0 // pred_fallthru
    _
  // Predicated region
  $region22: #{_lambda_.19} parent=0 // pred_check
    _
  $region23: #{_lambda_.19} parent=0 // pred_check_branch
    %628 = sbr.rel (0) target = $region25
  $region24: #{_lambda_.19} parent=0 // pred_region
    _
  $region25: #{_lambda_.19} parent=0 // pred_fallthru
    _
  // Predicated region
  $region26: #{_lambda_.19} parent=0 // pred_check
    _
  $region27: #{_lambda_.19} parent=0 // pred_check_branch
    %630 = sbr.rel (0) target = $region29
  $region28: #{_lambda_.19} parent=0 // pred_region
    _
  $region29: #{_lambda_.19} parent=0 // pred_fallthru
    _

// kernel: _lambda_.20
$region0: #{_lambda_.20}
  #allocation0 [shape = 'u32[]', space=smem, size = 0x4, offset = 0x4, fixed_abs, tag = 'smem constant byte address 0x4 - core index']
  #allocation1 [shape = 'u32[72,128]{1,0:T(1,128)}', space=vmem, size = 0x9000, scoped, tag = 'internal scratch']
  #allocation2 [shape = 'f32[312,128]{1,0:T(8,128)}', space=vmem, size = 0x27000, scoped, tag = 'scratch operand']
  %s0 = inlined_call_operand.vmem [shape: bf16[312,128], index: 0, kind: input, shape index: {}]
  %s1 = inlined_call_operand.vmem [shape: bf16[128,128], index: 1, kind: input, shape index: {}]
  %s2 = inlined_call_operand.vmem [shape: f32[1,128], index: 2, kind: input, shape index: {}]
  %s3 = inlined_call_operand.vmem [shape: f32[312,128], index: 3, kind: input, shape index: {}]
  %s4 = inlined_call_operand.vmem [shape: f32[312,128], index: 4, kind: output, shape index: {}]
  %s5 = sld [smem:[#allocation0]]
  $region34: #{_lambda_.20} parent=0
    _
  %s7 = ssub.s32 1, %s5
  %s8 = scalar_select 0, %s7, %s5
  // Predicated region
  $region2: #{_lambda_.20} parent=0 // pred_check
    _
  $region3: #{_lambda_.20} parent=0 // pred_check_branch
    %10 = sbr.rel (0) target = $region5
  $region4: #{_lambda_.20} parent=0 // pred_region
    _
  $region5: #{_lambda_.20} parent=0 // pred_fallthru
    _
  // Predicated region
  $region6: #{_lambda_.20} parent=0 // pred_check
    _
  $region7: #{_lambda_.20} parent=0 // pred_check_branch
    %12 = sbr.rel (0) target = $region9
  $region8: #{_lambda_.20} parent=0 // pred_region
    _
  $region9: #{_lambda_.20} parent=0 // pred_fallthru
    _
  // Predicated region
  $region10: #{_lambda_.20} parent=0 // pred_check
    _
  $region11: #{_lambda_.20} parent=0 // pred_check_branch
    %14 = sbr.rel (0) target = $region13
  $region12: #{_lambda_.20} parent=0 // pred_region
    _
  $region13: #{_lambda_.20} parent=0 // pred_fallthru
    _
  // Predicated region
  $region14: #{_lambda_.20} parent=0 // pred_check
    _
  $region15: #{_lambda_.20} parent=0 // pred_check_branch
    %16 = sbr.rel (0) target = $region17
  $region16: #{_lambda_.20} parent=0 // pred_region
    _
  $region17: #{_lambda_.20} parent=0 // pred_fallthru
    _
  %p17 = scmp.eq.s32.totalorder 0, 0
  // Predicated region
  $region18: #{_lambda_.20} parent=0 // pred_check
    %p18 = pneg %p17
  $region19: #{_lambda_.20} parent=0 // pred_check_branch
    %20 = sbr.rel (%p18) target = $region21
  $region20: #{_lambda_.20} parent=0 // pred_region
    %21 = vst [vmem:[#allocation2] sm:$0xff] 0.0
    %22 = vst [vmem:[#allocation2 + $0x8] sm:$0xff] 0.0
    %23 = vst [vmem:[#allocation2 + $0x10] sm:$0xff] 0.0
    %24 = vst [vmem:[#allocation2 + $0x18] sm:$0xff] 0.0
    %25 = vst [vmem:[#allocation2 + $0x20] sm:$0xff] 0.0
    %26 = vst [vmem:[#allocation2 + $0x28] sm:$0xff] 0.0
    %27 = vst [vmem:[#allocation2 + $0x30] sm:$0xff] 0.0
    %28 = vst [vmem:[#allocation2 + $0x38] sm:$0xff] 0.0
    %29 = vst [vmem:[#allocation2 + $0x40] sm:$0xff] 0.0
    %30 = vst [vmem:[#allocation2 + $0x48] sm:$0xff] 0.0
    %31 = vst [vmem:[#allocation2 + $0x50] sm:$0xff] 0.0
    %32 = vst [vmem:[#allocation2 + $0x58] sm:$0xff] 0.0
    %33 = vst [vmem:[#allocation2 + $0x60] sm:$0xff] 0.0
    %34 = vst [vmem:[#allocation2 + $0x68] sm:$0xff] 0.0
    %35 = vst [vmem:[#allocation2 + $0x70] sm:$0xff] 0.0
    %36 = vst [vmem:[#allocation2 + $0x78] sm:$0xff] 0.0
    %37 = vst [vmem:[#allocation2 + $0x80] sm:$0xff] 0.0
    %38 = vst [vmem:[#allocation2 + $0x88] sm:$0xff] 0.0
    %39 = vst [vmem:[#allocation2 + $0x90] sm:$0xff] 0.0
    %40 = vst [vmem:[#allocation2 + $0x98] sm:$0xff] 0.0
    %41 = vst [vmem:[#allocation2 + $0xa0] sm:$0xff] 0.0
    %42 = vst [vmem:[#allocation2 + $0xa8] sm:$0xff] 0.0
    %43 = vst [vmem:[#allocation2 + $0xb0] sm:$0xff] 0.0
    %44 = vst [vmem:[#allocation2 + $0xb8] sm:$0xff] 0.0
    %45 = vst [vmem:[#allocation2 + $0xc0] sm:$0xff] 0.0
    %46 = vst [vmem:[#allocation2 + $0xc8] sm:$0xff] 0.0
    %47 = vst [vmem:[#allocation2 + $0xd0] sm:$0xff] 0.0
    %48 = vst [vmem:[#allocation2 + $0xd8] sm:$0xff] 0.0
    %49 = vst [vmem:[#allocation2 + $0xe0] sm:$0xff] 0.0
    %50 = vst [vmem:[#allocation2 + $0xe8] sm:$0xff] 0.0
    %51 = vst [vmem:[#allocation2 + $0xf0] sm:$0xff] 0.0
    %52 = vst [vmem:[#allocation2 + $0xf8] sm:$0xff] 0.0
    %53 = vst [vmem:[#allocation2 + $0x100] sm:$0xff] 0.0
    %54 = vst [vmem:[#allocation2 + $0x108] sm:$0xff] 0.0
    %55 = vst [vmem:[#allocation2 + $0x110] sm:$0xff] 0.0
    %56 = vst [vmem:[#allocation2 + $0x118] sm:$0xff] 0.0
    %57 = vst [vmem:[#allocation2 + $0x120] sm:$0xff] 0.0
    %58 = vst [vmem:[#allocation2 + $0x128] sm:$0xff] 0.0
    %59 = vst [vmem:[#allocation2 + $0x130] sm:$0xff] 0.0
  $region21: #{_lambda_.20} parent=0 // pred_fallthru
    _
  %v60 = vld [vmem:[%s0] sm:$0xf]
  %v61 = vld [vmem:[%s0 + $0x4] sm:$0xf]
  %v62 = vld [vmem:[%s0 + $0x8] sm:$0xf]
  %v63 = vld [vmem:[%s0 + $0xc] sm:$0xf]
  %v64 = vld [vmem:[%s0 + $0x10] sm:$0xf]
  %v65 = vld [vmem:[%s0 + $0x14] sm:$0xf]
  %v66 = vld [vmem:[%s0 + $0x18] sm:$0xf]
  %v67 = vld [vmem:[%s0 + $0x1c] sm:$0xf]
  %v68 = vld [vmem:[%s0 + $0x20] sm:$0xf]
  %v69 = vld [vmem:[%s0 + $0x24] sm:$0xf]
  %v70 = vld [vmem:[%s0 + $0x28] sm:$0xf]
  %v71 = vld [vmem:[%s0 + $0x2c] sm:$0xf]
  %v72 = vld [vmem:[%s0 + $0x30] sm:$0xf]
  %v73 = vld [vmem:[%s0 + $0x34] sm:$0xf]
  %v74 = vld [vmem:[%s0 + $0x38] sm:$0xf]
  %v75 = vld [vmem:[%s0 + $0x3c] sm:$0xf]
  %v76 = vld [vmem:[%s0 + $0x40] sm:$0xf]
  %v77 = vld [vmem:[%s0 + $0x44] sm:$0xf]
  %v78 = vld [vmem:[%s0 + $0x48] sm:$0xf]
  %v79 = vld [vmem:[%s0 + $0x4c] sm:$0xf]
  %v80 = vld [vmem:[%s0 + $0x50] sm:$0xf]
  %v81 = vld [vmem:[%s0 + $0x54] sm:$0xf]
  %v82 = vld [vmem:[%s0 + $0x58] sm:$0xf]
  %v83 = vld [vmem:[%s0 + $0x5c] sm:$0xf]
  %v84 = vld [vmem:[%s0 + $0x60] sm:$0xf]
  %v85 = vld [vmem:[%s0 + $0x64] sm:$0xf]
  %v86 = vld [vmem:[%s0 + $0x68] sm:$0xf]
  %v87 = vld [vmem:[%s0 + $0x6c] sm:$0xf]
  %v88 = vld [vmem:[%s0 + $0x70] sm:$0xf]
  %v89 = vld [vmem:[%s0 + $0x74] sm:$0xf]
  %v90 = vld [vmem:[%s0 + $0x78] sm:$0xf]
  %v91 = vld [vmem:[%s0 + $0x7c] sm:$0xf]
  %v92 = vld [vmem:[%s0 + $0x80] sm:$0xf]
  %v93 = vld [vmem:[%s0 + $0x84] sm:$0xf]
  %v94 = vld [vmem:[%s0 + $0x88] sm:$0xf]
  %v95 = vld [vmem:[%s0 + $0x8c] sm:$0xf]
  %v96 = vld [vmem:[%s0 + $0x90] sm:$0xf]
  %v97 = vld [vmem:[%s0 + $0x94] sm:$0xf]
  %v98 = vld [vmem:[%s0 + $0x98] sm:$0xf]
  %v99 = vunpack.c.l.bf16 %v60
  %v100 = vunpack.c.l.bf16 %v61
  %v101 = vunpack.c.l.bf16 %v62
  %v102 = vunpack.c.l.bf16 %v63
  %v103 = vunpack.c.l.bf16 %v64
  %v104 = vunpack.c.l.bf16 %v65
  %v105 = vunpack.c.l.bf16 %v66
  %v106 = vunpack.c.l.bf16 %v67
  %v107 = vunpack.c.l.bf16 %v68
  %v108 = vunpack.c.l.bf16 %v69
  %v109 = vunpack.c.l.bf16 %v70
  %v110 = vunpack.c.l.bf16 %v71
  %v111 = vunpack.c.l.bf16 %v72
  %v112 = vunpack.c.l.bf16 %v73
  %v113 = vunpack.c.l.bf16 %v74
  %v114 = vunpack.c.l.bf16 %v75
  %v115 = vunpack.c.l.bf16 %v76
  %v116 = vunpack.c.l.bf16 %v77
  %v117 = vunpack.c.l.bf16 %v78
  %v118 = vunpack.c.l.bf16 %v79
  %v119 = vunpack.c.l.bf16 %v80
  %v120 = vunpack.c.l.bf16 %v81
  %v121 = vunpack.c.l.bf16 %v82
  %v122 = vunpack.c.l.bf16 %v83
  %v123 = vunpack.c.l.bf16 %v84
  %v124 = vunpack.c.l.bf16 %v85
  %v125 = vunpack.c.l.bf16 %v86
  %v126 = vunpack.c.l.bf16 %v87
  %v127 = vunpack.c.l.bf16 %v88
  %v128 = vunpack.c.l.bf16 %v89
  %v129 = vunpack.c.l.bf16 %v90
  %v130 = vunpack.c.l.bf16 %v91
  %v131 = vunpack.c.l.bf16 %v92
  %v132 = vunpack.c.l.bf16 %v93
  %v133 = vunpack.c.l.bf16 %v94
  %v134 = vunpack.c.l.bf16 %v95
  %v135 = vunpack.c.l.bf16 %v96
  %v136 = vunpack.c.l.bf16 %v97
  %v137 = vunpack.c.l.bf16 %v98
  %vm138 = vcmp.ge.f32.partialorder %v99, 0.0
  %vm139 = vcmp.ge.f32.partialorder %v100, 0.0
  %vm140 = vcmp.ge.f32.partialorder %v101, 0.0
  %vm141 = vcmp.ge.f32.partialorder %v102, 0.0
  %vm142 = vcmp.ge.f32.partialorder %v103, 0.0
  %vm143 = vcmp.ge.f32.partialorder %v104, 0.0
  %vm144 = vcmp.ge.f32.partialorder %v105, 0.0
  %vm145 = vcmp.ge.f32.partialorder %v106, 0.0
  %vm146 = vcmp.ge.f32.partialorder %v107, 0.0
  %vm147 = vcmp.ge.f32.partialorder %v108, 0.0
  %vm148 = vcmp.ge.f32.partialorder %v109, 0.0
  %vm149 = vcmp.ge.f32.partialorder %v110, 0.0
  %vm150 = vcmp.ge.f32.partialorder %v111, 0.0
  %vm151 = vcmp.ge.f32.partialorder %v112, 0.0
  %vm152 = vcmp.ge.f32.partialorder %v113, 0.0
  %vm153 = vcmp.ge.f32.partialorder %v114, 0.0
  %vm154 = vcmp.ge.f32.partialorder %v115, 0.0
  %vm155 = vcmp.ge.f32.partialorder %v116, 0.0
  %vm156 = vcmp.ge.f32.partialorder %v117, 0.0
  %vm157 = vcmp.ge.f32.partialorder %v118, 0.0
  %vm158 = vcmp.ge.f32.partialorder %v119, 0.0
  %vm159 = vcmp.ge.f32.partialorder %v120, 0.0
  %vm160 = vcmp.ge.f32.partialorder %v121, 0.0
  %vm161 = vcmp.ge.f32.partialorder %v122, 0.0
  %vm162 = vcmp.ge.f32.partialorder %v123, 0.0
  %vm163 = vcmp.ge.f32.partialorder %v124, 0.0
  %vm164 = vcmp.ge.f32.partialorder %v125, 0.0
  %vm165 = vcmp.ge.f32.partialorder %v126, 0.0
  %vm166 = vcmp.ge.f32.partialorder %v127, 0.0
  %vm167 = vcmp.ge.f32.partialorder %v128, 0.0
  %vm168 = vcmp.ge.f32.partialorder %v129, 0.0
  %vm169 = vcmp.ge.f32.partialorder %v130, 0.0
  %vm170 = vcmp.ge.f32.partialorder %v131, 0.0
  %vm171 = vcmp.ge.f32.partialorder %v132, 0.0
  %vm172 = vcmp.ge.f32.partialorder %v133, 0.0
  %vm173 = vcmp.ge.f32.partialorder %v134, 0.0
  %vm174 = vcmp.ge.f32.partialorder %v135, 0.0
  %vm175 = vcmp.ge.f32.partialorder %v136, 0.0
  %vm176 = vcmp.ge.f32.partialorder %v137, 0.0
  %v177 = vmul.f32 %v99, 0.010009766
  %v178 = vmul.f32 %v100, 0.010009766
  %v179 = vmul.f32 %v101, 0.010009766
  %v180 = vmul.f32 %v102, 0.010009766
  %v181 = vmul.f32 %v103, 0.010009766
  %v182 = vmul.f32 %v104, 0.010009766
  %v183 = vmul.f32 %v105, 0.010009766
  %v184 = vmul.f32 %v106, 0.010009766
  %v185 = vmul.f32 %v107, 0.010009766
  %v186 = vmul.f32 %v108, 0.010009766
  %v187 = vmul.f32 %v109, 0.010009766
  %v188 = vmul.f32 %v110, 0.010009766
  %v189 = vmul.f32 %v111, 0.010009766
  %v190 = vmul.f32 %v112, 0.010009766
  %v191 = vmul.f32 %v113, 0.010009766
  %v192 = vmul.f32 %v114, 0.010009766
  %v193 = vmul.f32 %v115, 0.010009766
  %v194 = vmul.f32 %v116, 0.010009766
  %v195 = vmul.f32 %v117, 0.010009766
  %v196 = vmul.f32 %v118, 0.010009766
  %v197 = vmul.f32 %v119, 0.010009766
  %v198 = vmul.f32 %v120, 0.010009766
  %v199 = vmul.f32 %v121, 0.010009766
  %v200 = vmul.f32 %v122, 0.010009766
  %v201 = vmul.f32 %v123, 0.010009766
  %v202 = vmul.f32 %v124, 0.010009766
  %v203 = vmul.f32 %v125, 0.010009766
  %v204 = vmul.f32 %v126, 0.010009766
  %v205 = vmul.f32 %v127, 0.010009766
  %v206 = vmul.f32 %v128, 0.010009766
  %v207 = vmul.f32 %v129, 0.010009766
  %v208 = vmul.f32 %v130, 0.010009766
  %v209 = vmul.f32 %v131, 0.010009766
  %v210 = vmul.f32 %v132, 0.010009766
  %v211 = vmul.f32 %v133, 0.010009766
  %v212 = vmul.f32 %v134, 0.010009766
  %v213 = vmul.f32 %v135, 0.010009766
  %v214 = vmul.f32 %v136, 0.010009766
  %v215 = vmul.f32 %v137, 0.010009766
  %v216 = vpack.c.bf16 %v177, %v177
  %v217 = vpack.c.bf16 %v178, %v178
  %v218 = vpack.c.bf16 %v179, %v179
  %v219 = vpack.c.bf16 %v180, %v180
  %v220 = vpack.c.bf16 %v181, %v181
  %v221 = vpack.c.bf16 %v182, %v182
  %v222 = vpack.c.bf16 %v183, %v183
  %v223 = vpack.c.bf16 %v184, %v184
  %v224 = vpack.c.bf16 %v185, %v185
  %v225 = vpack.c.bf16 %v186, %v186
  %v226 = vpack.c.bf16 %v187, %v187
  %v227 = vpack.c.bf16 %v188, %v188
  %v228 = vpack.c.bf16 %v189, %v189
  %v229 = vpack.c.bf16 %v190, %v190
  %v230 = vpack.c.bf16 %v191, %v191
  %v231 = vpack.c.bf16 %v192, %v192
  %v232 = vpack.c.bf16 %v193, %v193
  %v233 = vpack.c.bf16 %v194, %v194
  %v234 = vpack.c.bf16 %v195, %v195
  %v235 = vpack.c.bf16 %v196, %v196
  %v236 = vpack.c.bf16 %v197, %v197
  %v237 = vpack.c.bf16 %v198, %v198
  %v238 = vpack.c.bf16 %v199, %v199
  %v239 = vpack.c.bf16 %v200, %v200
  %v240 = vpack.c.bf16 %v201, %v201
  %v241 = vpack.c.bf16 %v202, %v202
  %v242 = vpack.c.bf16 %v203, %v203
  %v243 = vpack.c.bf16 %v204, %v204
  %v244 = vpack.c.bf16 %v205, %v205
  %v245 = vpack.c.bf16 %v206, %v206
  %v246 = vpack.c.bf16 %v207, %v207
  %v247 = vpack.c.bf16 %v208, %v208
  %v248 = vpack.c.bf16 %v209, %v209
  %v249 = vpack.c.bf16 %v210, %v210
  %v250 = vpack.c.bf16 %v211, %v211
  %v251 = vpack.c.bf16 %v212, %v212
  %v252 = vpack.c.bf16 %v213, %v213
  %v253 = vpack.c.bf16 %v214, %v214
  %v254 = vpack.c.bf16 %v215, %v215
  %vm255 = vmpackc.low %vm138, %vm138
  %vm256 = vmpackc.low %vm139, %vm139
  %vm257 = vmpackc.low %vm140, %vm140
  %vm258 = vmpackc.low %vm141, %vm141
  %vm259 = vmpackc.low %vm142, %vm142
  %vm260 = vmpackc.low %vm143, %vm143
  %vm261 = vmpackc.low %vm144, %vm144
  %vm262 = vmpackc.low %vm145, %vm145
  %vm263 = vmpackc.low %vm146, %vm146
  %vm264 = vmpackc.low %vm147, %vm147
  %vm265 = vmpackc.low %vm148, %vm148
  %vm266 = vmpackc.low %vm149, %vm149
  %vm267 = vmpackc.low %vm150, %vm150
  %vm268 = vmpackc.low %vm151, %vm151
  %vm269 = vmpackc.low %vm152, %vm152
  %vm270 = vmpackc.low %vm153, %vm153
  %vm271 = vmpackc.low %vm154, %vm154
  %vm272 = vmpackc.low %vm155, %vm155
  %vm273 = vmpackc.low %vm156, %vm156
  %vm274 = vmpackc.low %vm157, %vm157
  %vm275 = vmpackc.low %vm158, %vm158
  %vm276 = vmpackc.low %vm159, %vm159
  %vm277 = vmpackc.low %vm160, %vm160
  %vm278 = vmpackc.low %vm161, %vm161
  %vm279 = vmpackc.low %vm162, %vm162
  %vm280 = vmpackc.low %vm163, %vm163
  %vm281 = vmpackc.low %vm164, %vm164
  %vm282 = vmpackc.low %vm165, %vm165
  %vm283 = vmpackc.low %vm166, %vm166
  %vm284 = vmpackc.low %vm167, %vm167
  %vm285 = vmpackc.low %vm168, %vm168
  %vm286 = vmpackc.low %vm169, %vm169
  %vm287 = vmpackc.low %vm170, %vm170
  %vm288 = vmpackc.low %vm171, %vm171
  %vm289 = vmpackc.low %vm172, %vm172
  %vm290 = vmpackc.low %vm173, %vm173
  %vm291 = vmpackc.low %vm174, %vm174
  %vm292 = vmpackc.low %vm175, %vm175
  %vm293 = vmpackc.low %vm176, %vm176
  %v294 = vsel %vm255, %v60, %v216
  %v295 = vsel %vm256, %v61, %v217
  %v296 = vsel %vm257, %v62, %v218
  %v297 = vsel %vm258, %v63, %v219
  %v298 = vsel %vm259, %v64, %v220
  %v299 = vsel %vm260, %v65, %v221
  %v300 = vsel %vm261, %v66, %v222
  %v301 = vsel %vm262, %v67, %v223
  %v302 = vsel %vm263, %v68, %v224
  %v303 = vsel %vm264, %v69, %v225
  %v304 = vsel %vm265, %v70, %v226
  %v305 = vsel %vm266, %v71, %v227
  %v306 = vsel %vm267, %v72, %v228
  %v307 = vsel %vm268, %v73, %v229
  %v308 = vsel %vm269, %v74, %v230
  %v309 = vsel %vm270, %v75, %v231
  %v310 = vsel %vm271, %v76, %v232
  %v311 = vsel %vm272, %v77, %v233
  %v312 = vsel %vm273, %v78, %v234
  %v313 = vsel %vm274, %v79, %v235
  %v314 = vsel %vm275, %v80, %v236
  %v315 = vsel %vm276, %v81, %v237
  %v316 = vsel %vm277, %v82, %v238
  %v317 = vsel %vm278, %v83, %v239
  %v318 = vsel %vm279, %v84, %v240
  %v319 = vsel %vm280, %v85, %v241
  %v320 = vsel %vm281, %v86, %v242
  %v321 = vsel %vm282, %v87, %v243
  %v322 = vsel %vm283, %v88, %v244
  %v323 = vsel %vm284, %v89, %v245
  %v324 = vsel %vm285, %v90, %v246
  %v325 = vsel %vm286, %v91, %v247
  %v326 = vsel %vm287, %v92, %v248
  %v327 = vsel %vm288, %v93, %v249
  %v328 = vsel %vm289, %v94, %v250
  %v329 = vsel %vm290, %v95, %v251
  %v330 = vsel %vm291, %v96, %v252
  %v331 = vsel %vm292, %v97, %v253
  %v332 = vsel %vm293, %v98, %v254
  %v333 = vld [vmem:[#allocation2] sm:$0xff]
  %v334 = vld [vmem:[#allocation2 + $0x8] sm:$0xff]
  %v335 = vld [vmem:[#allocation2 + $0x10] sm:$0xff]
  %v336 = vld [vmem:[#allocation2 + $0x18] sm:$0xff]
  %v337 = vld [vmem:[#allocation2 + $0x20] sm:$0xff]
  %v338 = vld [vmem:[#allocation2 + $0x28] sm:$0xff]
  %v339 = vld [vmem:[#allocation2 + $0x30] sm:$0xff]
  %v340 = vld [vmem:[#allocation2 + $0x38] sm:$0xff]
  %v341 = vld [vmem:[#allocation2 + $0x40] sm:$0xff]
  %v342 = vld [vmem:[#allocation2 + $0x48] sm:$0xff]
  %v343 = vld [vmem:[#allocation2 + $0x50] sm:$0xff]
  %v344 = vld [vmem:[#allocation2 + $0x58] sm:$0xff]
  %v345 = vld [vmem:[#allocation2 + $0x60] sm:$0xff]
  %v346 = vld [vmem:[#allocation2 + $0x68] sm:$0xff]
  %v347 = vld [vmem:[#allocation2 + $0x70] sm:$0xff]
  %v348 = vld [vmem:[#allocation2 + $0x78] sm:$0xff]
  %v349 = vld [vmem:[#allocation2 + $0x80] sm:$0xff]
  %v350 = vld [vmem:[#allocation2 + $0x88] sm:$0xff]
  %v351 = vld [vmem:[#allocation2 + $0x90] sm:$0xff]
  %v352 = vld [vmem:[#allocation2 + $0x98] sm:$0xff]
  %v353 = vld [vmem:[#allocation2 + $0xa0] sm:$0xff]
  %v354 = vld [vmem:[#allocation2 + $0xa8] sm:$0xff]
  %v355 = vld [vmem:[#allocation2 + $0xb0] sm:$0xff]
  %v356 = vld [vmem:[#allocation2 + $0xb8] sm:$0xff]
  %v357 = vld [vmem:[#allocation2 + $0xc0] sm:$0xff]
  %v358 = vld [vmem:[#allocation2 + $0xc8] sm:$0xff]
  %v359 = vld [vmem:[#allocation2 + $0xd0] sm:$0xff]
  %v360 = vld [vmem:[#allocation2 + $0xd8] sm:$0xff]
  %v361 = vld [vmem:[#allocation2 + $0xe0] sm:$0xff]
  %v362 = vld [vmem:[#allocation2 + $0xe8] sm:$0xff]
  %v363 = vld [vmem:[#allocation2 + $0xf0] sm:$0xff]
  %v364 = vld [vmem:[#allocation2 + $0xf8] sm:$0xff]
  %v365 = vld [vmem:[#allocation2 + $0x100] sm:$0xff]
  %v366 = vld [vmem:[#allocation2 + $0x108] sm:$0xff]
  %v367 = vld [vmem:[#allocation2 + $0x110] sm:$0xff]
  %v368 = vld [vmem:[#allocation2 + $0x118] sm:$0xff]
  %v369 = vld [vmem:[#allocation2 + $0x120] sm:$0xff]
  %v370 = vld [vmem:[#allocation2 + $0x128] sm:$0xff]
  %v371 = vld [vmem:[#allocation2 + $0x130] sm:$0xff]
  %v372 = vld [vmem:[%s1] sm:$0xf]
  %v373 = vld [vmem:[%s1 + $0x4] sm:$0xf]
  %v374 = vld [vmem:[%s1 + $0x8] sm:$0xf]
  %v375 = vld [vmem:[%s1 + $0xc] sm:$0xf]
  %v376 = vld [vmem:[%s1 + $0x10] sm:$0xf]
  %v377 = vld [vmem:[%s1 + $0x14] sm:$0xf]
  %v378 = vld [vmem:[%s1 + $0x18] sm:$0xf]
  %v379 = vld [vmem:[%s1 + $0x1c] sm:$0xf]
  %v380 = vld [vmem:[%s1 + $0x20] sm:$0xf]
  %v381 = vld [vmem:[%s1 + $0x24] sm:$0xf]
  %v382 = vld [vmem:[%s1 + $0x28] sm:$0xf]
  %v383 = vld [vmem:[%s1 + $0x2c] sm:$0xf]
  %v384 = vld [vmem:[%s1 + $0x30] sm:$0xf]
  %v385 = vld [vmem:[%s1 + $0x34] sm:$0xf]
  %v386 = vld [vmem:[%s1 + $0x38] sm:$0xf]
  %v387 = vld [vmem:[%s1 + $0x3c] sm:$0xf]
  %v427 = vunpack.c.l.b16 %v294
  %v428 = vunpack.c.l.b16 %v295
  %v429 = vunpack.c.l.b16 %v296
  %v430 = vunpack.c.l.b16 %v297
  %v431 = vunpack.c.l.b16 %v298
  %v432 = vunpack.c.l.b16 %v299
  %v433 = vunpack.c.l.b16 %v300
  %v434 = vunpack.c.l.b16 %v301
  %v435 = vunpack.c.l.b16 %v302
  %v436 = vunpack.c.l.b16 %v303
  %v437 = vunpack.c.l.b16 %v304
  %v438 = vunpack.c.l.b16 %v305
  %v439 = vunpack.c.l.b16 %v306
  %v440 = vunpack.c.l.b16 %v307
  %v441 = vunpack.c.l.b16 %v308
  %v442 = vunpack.c.l.b16 %v309
  %v443 = vunpack.c.l.b16 %v310
  %v444 = vunpack.c.l.b16 %v311
  %v445 = vunpack.c.l.b16 %v312
  %v446 = vunpack.c.l.b16 %v313
  %v447 = vunpack.c.l.b16 %v314
  %v448 = vunpack.c.l.b16 %v315
  %v449 = vunpack.c.l.b16 %v316
  %v450 = vunpack.c.l.b16 %v317
  %v451 = vunpack.c.l.b16 %v318
  %v452 = vunpack.c.l.b16 %v319
  %v453 = vunpack.c.l.b16 %v320
  %v454 = vunpack.c.l.b16 %v321
  %v455 = vunpack.c.l.b16 %v322
  %v456 = vunpack.c.l.b16 %v323
  %v457 = vunpack.c.l.b16 %v324
  %v458 = vunpack.c.l.b16 %v325
  %v459 = vunpack.c.l.b16 %v326
  %v460 = vunpack.c.l.b16 %v327
  %v461 = vunpack.c.l.b16 %v328
  %v462 = vunpack.c.l.b16 %v329
  %v463 = vunpack.c.l.b16 %v330
  %v464 = vunpack.c.l.b16 %v331
  %v465 = vunpack.c.l.b16 %v332
  %v466 = vpack.c.b16 %v428, %v427
  %v467 = vpack.c.b16 %v430, %v429
  %v468 = vpack.c.b16 %v432, %v431
  %v469 = vpack.c.b16 %v434, %v433
  %v470 = vpack.c.b16 %v436, %v435
  %v471 = vpack.c.b16 %v438, %v437
  %v472 = vpack.c.b16 %v440, %v439
  %v473 = vpack.c.b16 %v442, %v441
  %v474 = vpack.c.b16 %v444, %v443
  %v475 = vpack.c.b16 %v446, %v445
  %v476 = vpack.c.b16 %v448, %v447
  %v477 = vpack.c.b16 %v450, %v449
  %v478 = vpack.c.b16 %v452, %v451
  %v479 = vpack.c.b16 %v454, %v453
  %v480 = vpack.c.b16 %v456, %v455
  %v481 = vpack.c.b16 %v458, %v457
  %v482 = vpack.c.b16 %v460, %v459
  %v483 = vpack.c.b16 %v462, %v461
  %v484 = vpack.c.b16 %v464, %v463
  %v485 = vpack.c.b16 %v465, %v465
  %v522 = vunpack.c.l.b16 %v372
  %v523 = vunpack.c.l.b16 %v373
  %v524 = vunpack.c.l.b16 %v374
  %v525 = vunpack.c.l.b16 %v375
  %v526 = vunpack.c.l.b16 %v376
  %v527 = vunpack.c.l.b16 %v377
  %v528 = vunpack.c.l.b16 %v378
  %v529 = vunpack.c.l.b16 %v379
  %v530 = vunpack.c.l.b16 %v380
  %v531 = vunpack.c.l.b16 %v381
  %v532 = vunpack.c.l.b16 %v382
  %v533 = vunpack.c.l.b16 %v383
  %v534 = vunpack.c.l.b16 %v384
  %v535 = vunpack.c.l.b16 %v385
  %v536 = vunpack.c.l.b16 %v386
  %v537 = vunpack.c.l.b16 %v387
  %v538 = vpack.c.b16 %v523, %v522
  %v539 = vpack.c.b16 %v525, %v524
  %v540 = vpack.c.b16 %v527, %v526
  %v541 = vpack.c.b16 %v529, %v528
  %v542 = vpack.c.b16 %v531, %v530
  %v543 = vpack.c.b16 %v533, %v532
  %v544 = vpack.c.b16 %v535, %v534
  %v545 = vpack.c.b16 %v537, %v536
  %554 = vmatpush.bf16.msra.mxu0 %v545
  %555 = vmatpush.bf16.msra.mxu0 %v544
  %556 = vmatpush.bf16.msra.mxu0 %v543
  %557 = vmatpush.bf16.msra.mxu0 %v542
  %558 = vmatpush.bf16.msra.mxu0 %v541
  %559 = vmatpush.bf16.msra.mxu0 %v540
  %560 = vmatpush.bf16.msra.mxu0 %v539
  %561 = vmatpush.bf16.msra.mxu0 %v538
  %562 = vmatmul.bf16.gmra.mxu0 %v466
  %v563 = vpop.f32.mrf.mxu0
  %v564 = vadd.f32 0.0, %v563
  %v565 = vpop.f32.mrf.mxu0
  %v566 = vadd.f32 0.0, %v565
  %567 = vmatmul.bf16.gmra.mxu0 %v467
  %v568 = vpop.f32.mrf.mxu0
  %v569 = vadd.f32 0.0, %v568
  %v570 = vpop.f32.mrf.mxu0
  %v571 = vadd.f32 0.0, %v570
  %572 = vmatmul.bf16.gmra.mxu0 %v468
  %v573 = vpop.f32.mrf.mxu0
  %v574 = vadd.f32 0.0, %v573
  %v575 = vpop.f32.mrf.mxu0
  %v576 = vadd.f32 0.0, %v575
  %577 = vmatmul.bf16.gmra.mxu0 %v469
  %v578 = vpop.f32.mrf.mxu0
  %v579 = vadd.f32 0.0, %v578
  %v580 = vpop.f32.mrf.mxu0
  %v581 = vadd.f32 0.0, %v580
  %582 = vmatmul.bf16.gmra.mxu0 %v470
  %v583 = vpop.f32.mrf.mxu0
  %v584 = vadd.f32 0.0, %v583
  %v585 = vpop.f32.mrf.mxu0
  %v586 = vadd.f32 0.0, %v585
  %587 = vmatmul.bf16.gmra.mxu0 %v471
  %v588 = vpop.f32.mrf.mxu0
  %v589 = vadd.f32 0.0, %v588
  %v590 = vpop.f32.mrf.mxu0
  %v591 = vadd.f32 0.0, %v590
  %592 = vmatmul.bf16.gmra.mxu0 %v472
  %v593 = vpop.f32.mrf.mxu0
  %v594 = vadd.f32 0.0, %v593
  %v595 = vpop.f32.mrf.mxu0
  %v596 = vadd.f32 0.0, %v595
  %597 = vmatmul.bf16.gmra.mxu0 %v473
  %v598 = vpop.f32.mrf.mxu0
  %v599 = vadd.f32 0.0, %v598
  %v600 = vpop.f32.mrf.mxu0
  %v601 = vadd.f32 0.0, %v600
  %602 = vmatmul.bf16.gmra.mxu0 %v474
  %v603 = vpop.f32.mrf.mxu0
  %v604 = vadd.f32 0.0, %v603
  %v605 = vpop.f32.mrf.mxu0
  %v606 = vadd.f32 0.0, %v605
  %607 = vmatmul.bf16.gmra.mxu0 %v475
  %v608 = vpop.f32.mrf.mxu0
  %v609 = vadd.f32 0.0, %v608
  %v610 = vpop.f32.mrf.mxu0
  %v611 = vadd.f32 0.0, %v610
  %612 = vmatmul.bf16.gmra.mxu0 %v476
  %v613 = vpop.f32.mrf.mxu0
  %v614 = vadd.f32 0.0, %v613
  %v615 = vpop.f32.mrf.mxu0
  %v616 = vadd.f32 0.0, %v615
  %617 = vmatmul.bf16.gmra.mxu0 %v477
  %v618 = vpop.f32.mrf.mxu0
  %v619 = vadd.f32 0.0, %v618
  %v620 = vpop.f32.mrf.mxu0
  %v621 = vadd.f32 0.0, %v620
  %622 = vmatmul.bf16.gmra.mxu0 %v478
  %v623 = vpop.f32.mrf.mxu0
  %v624 = vadd.f32 0.0, %v623
  %v625 = vpop.f32.mrf.mxu0
  %v626 = vadd.f32 0.0, %v625
  %627 = vmatmul.bf16.gmra.mxu0 %v479
  %v628 = vpop.f32.mrf.mxu0
  %v629 = vadd.f32 0.0, %v628
  %v630 = vpop.f32.mrf.mxu0
  %v631 = vadd.f32 0.0, %v630
  %632 = vmatmul.bf16.gmra.mxu0 %v480
  %v633 = vpop.f32.mrf.mxu0
  %v634 = vadd.f32 0.0, %v633
  %v635 = vpop.f32.mrf.mxu0
  %v636 = vadd.f32 0.0, %v635
  %637 = vmatmul.bf16.gmra.mxu0 %v481
  %v638 = vpop.f32.mrf.mxu0
  %v639 = vadd.f32 0.0, %v638
  %v640 = vpop.f32.mrf.mxu0
  %v641 = vadd.f32 0.0, %v640
  %642 = vmatmul.bf16.gmra.mxu0 %v482
  %v643 = vpop.f32.mrf.mxu0
  %v644 = vadd.f32 0.0, %v643
  %v645 = vpop.f32.mrf.mxu0
  %v646 = vadd.f32 0.0, %v645
  %647 = vmatmul.bf16.gmra.mxu0 %v483
  %v648 = vpop.f32.mrf.mxu0
  %v649 = vadd.f32 0.0, %v648
  %v650 = vpop.f32.mrf.mxu0
  %v651 = vadd.f32 0.0, %v650
  %652 = vmatmul.bf16.gmra.mxu0 %v484
  %v653 = vpop.f32.mrf.mxu0
  %v654 = vadd.f32 0.0, %v653
  %v655 = vpop.f32.mrf.mxu0
  %v656 = vadd.f32 0.0, %v655
  %657 = vmatmul.bf16.gmra.mxu0 %v485
  %v658 = vpop.f32.mrf.mxu0
  %v659 = vadd.f32 0.0, %v658
  %v660 = vpop.f32.mrf.mxu0
  %661 = vdwg.mxu0
  %v662 = vadd.f32 %v333, %v564
  %v663 = vadd.f32 %v334, %v566
  %v664 = vadd.f32 %v335, %v569
  %v665 = vadd.f32 %v336, %v571
  %v666 = vadd.f32 %v337, %v574
  %v667 = vadd.f32 %v338, %v576
  %v668 = vadd.f32 %v339, %v579
  %v669 = vadd.f32 %v340, %v581
  %v670 = vadd.f32 %v341, %v584
  %v671 = vadd.f32 %v342, %v586
  %v672 = vadd.f32 %v343, %v589
  %v673 = vadd.f32 %v344, %v591
  %v674 = vadd.f32 %v345, %v594
  %v675 = vadd.f32 %v346, %v596
  %v676 = vadd.f32 %v347, %v599
  %v677 = vadd.f32 %v348, %v601
  %v678 = vadd.f32 %v349, %v604
  %v679 = vadd.f32 %v350, %v606
  %v680 = vadd.f32 %v351, %v609
  %v681 = vadd.f32 %v352, %v611
  %v682 = vadd.f32 %v353, %v614
  %v683 = vadd.f32 %v354, %v616
  %v684 = vadd.f32 %v355, %v619
  %v685 = vadd.f32 %v356, %v621
  %v686 = vadd.f32 %v357, %v624
  %v687 = vadd.f32 %v358, %v626
  %v688 = vadd.f32 %v359, %v629
  %v689 = vadd.f32 %v360, %v631
  %v690 = vadd.f32 %v361, %v634
  %v691 = vadd.f32 %v362, %v636
  %v692 = vadd.f32 %v363, %v639
  %v693 = vadd.f32 %v364, %v641
  %v694 = vadd.f32 %v365, %v644
  %v695 = vadd.f32 %v366, %v646
  %v696 = vadd.f32 %v367, %v649
  %v697 = vadd.f32 %v368, %v651
  %v698 = vadd.f32 %v369, %v654
  %v699 = vadd.f32 %v370, %v656
  %v700 = vadd.f32 %v371, %v659
  %701 = vst [vmem:[#allocation2] sm:$0xff] %v662
  %702 = vst [vmem:[#allocation2 + $0x8] sm:$0xff] %v663
  %703 = vst [vmem:[#allocation2 + $0x10] sm:$0xff] %v664
  %704 = vst [vmem:[#allocation2 + $0x18] sm:$0xff] %v665
  %705 = vst [vmem:[#allocation2 + $0x20] sm:$0xff] %v666
  %706 = vst [vmem:[#allocation2 + $0x28] sm:$0xff] %v667
  %707 = vst [vmem:[#allocation2 + $0x30] sm:$0xff] %v668
  %708 = vst [vmem:[#allocation2 + $0x38] sm:$0xff] %v669
  %709 = vst [vmem:[#allocation2 + $0x40] sm:$0xff] %v670
  %710 = vst [vmem:[#allocation2 + $0x48] sm:$0xff] %v671
  %711 = vst [vmem:[#allocation2 + $0x50] sm:$0xff] %v672
  %712 = vst [vmem:[#allocation2 + $0x58] sm:$0xff] %v673
  %713 = vst [vmem:[#allocation2 + $0x60] sm:$0xff] %v674
  %714 = vst [vmem:[#allocation2 + $0x68] sm:$0xff] %v675
  %715 = vst [vmem:[#allocation2 + $0x70] sm:$0xff] %v676
  %716 = vst [vmem:[#allocation2 + $0x78] sm:$0xff] %v677
  %717 = vst [vmem:[#allocation2 + $0x80] sm:$0xff] %v678
  %718 = vst [vmem:[#allocation2 + $0x88] sm:$0xff] %v679
  %719 = vst [vmem:[#allocation2 + $0x90] sm:$0xff] %v680
  %720 = vst [vmem:[#allocation2 + $0x98] sm:$0xff] %v681
  %721 = vst [vmem:[#allocation2 + $0xa0] sm:$0xff] %v682
  %722 = vst [vmem:[#allocation2 + $0xa8] sm:$0xff] %v683
  %723 = vst [vmem:[#allocation2 + $0xb0] sm:$0xff] %v684
  %724 = vst [vmem:[#allocation2 + $0xb8] sm:$0xff] %v685
  %725 = vst [vmem:[#allocation2 + $0xc0] sm:$0xff] %v686
  %726 = vst [vmem:[#allocation2 + $0xc8] sm:$0xff] %v687
  %727 = vst [vmem:[#allocation2 + $0xd0] sm:$0xff] %v688
  %728 = vst [vmem:[#allocation2 + $0xd8] sm:$0xff] %v689
  %729 = vst [vmem:[#allocation2 + $0xe0] sm:$0xff] %v690
  %730 = vst [vmem:[#allocation2 + $0xe8] sm:$0xff] %v691
  %731 = vst [vmem:[#allocation2 + $0xf0] sm:$0xff] %v692
  %732 = vst [vmem:[#allocation2 + $0xf8] sm:$0xff] %v693
  %733 = vst [vmem:[#allocation2 + $0x100] sm:$0xff] %v694
  %734 = vst [vmem:[#allocation2 + $0x108] sm:$0xff] %v695
  %735 = vst [vmem:[#allocation2 + $0x110] sm:$0xff] %v696
  %736 = vst [vmem:[#allocation2 + $0x118] sm:$0xff] %v697
  %737 = vst [vmem:[#allocation2 + $0x120] sm:$0xff] %v698
  %738 = vst [vmem:[#allocation2 + $0x128] sm:$0xff] %v699
  %739 = vst [vmem:[#allocation2 + $0x130] sm:$0xff] %v700
  // Predicated region
  $region22: #{_lambda_.20} parent=0 // pred_check
    %p740 = pneg %p17
  $region23: #{_lambda_.20} parent=0 // pred_check_branch
    %742 = sbr.rel (%p740) target = $region25
  $region24: #{_lambda_.20} parent=0 // pred_region
    %v743 = vld [vmem:[#allocation2] sm:$0xff]
    %v744 = vld [vmem:[#allocation2 + $0x8] sm:$0xff]
    %v745 = vld [vmem:[#allocation2 + $0x10] sm:$0xff]
    %v746 = vld [vmem:[#allocation2 + $0x18] sm:$0xff]
    %v747 = vld [vmem:[#allocation2 + $0x20] sm:$0xff]
    %v748 = vld [vmem:[#allocation2 + $0x28] sm:$0xff]
    %v749 = vld [vmem:[#allocation2 + $0x30] sm:$0xff]
    %v750 = vld [vmem:[#allocation2 + $0x38] sm:$0xff]
    %v751 = vld [vmem:[#allocation2 + $0x40] sm:$0xff]
    %v752 = vld [vmem:[#allocation2 + $0x48] sm:$0xff]
    %v753 = vld [vmem:[#allocation2 + $0x50] sm:$0xff]
    %v754 = vld [vmem:[#allocation2 + $0x58] sm:$0xff]
    %v755 = vld [vmem:[#allocation2 + $0x60] sm:$0xff]
    %v756 = vld [vmem:[#allocation2 + $0x68] sm:$0xff]
    %v757 = vld [vmem:[#allocation2 + $0x70] sm:$0xff]
    %v758 = vld [vmem:[#allocation2 + $0x78] sm:$0xff]
    %v759 = vld [vmem:[#allocation2 + $0x80] sm:$0xff]
    %v760 = vld [vmem:[#allocation2 + $0x88] sm:$0xff]
    %v761 = vld [vmem:[#allocation2 + $0x90] sm:$0xff]
    %v762 = vld [vmem:[#allocation2 + $0x98] sm:$0xff]
    %v763 = vld [vmem:[#allocation2 + $0xa0] sm:$0xff]
    %v764 = vld [vmem:[#allocation2 + $0xa8] sm:$0xff]
    %v765 = vld [vmem:[#allocation2 + $0xb0] sm:$0xff]
    %v766 = vld [vmem:[#allocation2 + $0xb8] sm:$0xff]
    %v767 = vld [vmem:[#allocation2 + $0xc0] sm:$0xff]
    %v768 = vld [vmem:[#allocation2 + $0xc8] sm:$0xff]
    %v769 = vld [vmem:[#allocation2 + $0xd0] sm:$0xff]
    %v770 = vld [vmem:[#allocation2 + $0xd8] sm:$0xff]
    %v771 = vld [vmem:[#allocation2 + $0xe0] sm:$0xff]
    %v772 = vld [vmem:[#allocation2 + $0xe8] sm:$0xff]
    %v773 = vld [vmem:[#allocation2 + $0xf0] sm:$0xff]
    %v774 = vld [vmem:[#allocation2 + $0xf8] sm:$0xff]
    %v775 = vld [vmem:[#allocation2 + $0x100] sm:$0xff]
    %v776 = vld [vmem:[#allocation2 + $0x108] sm:$0xff]
    %v777 = vld [vmem:[#allocation2 + $0x110] sm:$0xff]
    %v778 = vld [vmem:[#allocation2 + $0x118] sm:$0xff]
    %v779 = vld [vmem:[#allocation2 + $0x120] sm:$0xff]
    %v780 = vld [vmem:[#allocation2 + $0x128] sm:$0xff]
    %v781 = vld [vmem:[#allocation2 + $0x130] sm:$0xff]
    %v782 = vld [vmem:[%s2] sm:$0x1]
    %v784 = vperm.slane %v782, 0
    %v786 = vadd.f32 %v743, %v784
    %v787 = vadd.f32 %v744, %v784
    %v788 = vadd.f32 %v745, %v784
    %v789 = vadd.f32 %v746, %v784
    %v790 = vadd.f32 %v747, %v784
    %v791 = vadd.f32 %v748, %v784
    %v792 = vadd.f32 %v749, %v784
    %v793 = vadd.f32 %v750, %v784
    %v794 = vadd.f32 %v751, %v784
    %v795 = vadd.f32 %v752, %v784
    %v796 = vadd.f32 %v753, %v784
    %v797 = vadd.f32 %v754, %v784
    %v798 = vadd.f32 %v755, %v784
    %v799 = vadd.f32 %v756, %v784
    %v800 = vadd.f32 %v757, %v784
    %v801 = vadd.f32 %v758, %v784
    %v802 = vadd.f32 %v759, %v784
    %v803 = vadd.f32 %v760, %v784
    %v804 = vadd.f32 %v761, %v784
    %v805 = vadd.f32 %v762, %v784
    %v806 = vadd.f32 %v763, %v784
    %v807 = vadd.f32 %v764, %v784
    %v808 = vadd.f32 %v765, %v784
    %v809 = vadd.f32 %v766, %v784
    %v810 = vadd.f32 %v767, %v784
    %v811 = vadd.f32 %v768, %v784
    %v812 = vadd.f32 %v769, %v784
    %v813 = vadd.f32 %v770, %v784
    %v814 = vadd.f32 %v771, %v784
    %v815 = vadd.f32 %v772, %v784
    %v816 = vadd.f32 %v773, %v784
    %v817 = vadd.f32 %v774, %v784
    %v818 = vadd.f32 %v775, %v784
    %v819 = vadd.f32 %v776, %v784
    %v820 = vadd.f32 %v777, %v784
    %v821 = vadd.f32 %v778, %v784
    %v822 = vadd.f32 %v779, %v784
    %v823 = vadd.f32 %v780, %v784
    %v824 = vadd.f32 %v781, %v784
    %v825 = vld [vmem:[%s3] sm:$0xff]
    %v826 = vld [vmem:[%s3 + $0x8] sm:$0xff]
    %v827 = vld [vmem:[%s3 + $0x10] sm:$0xff]
    %v828 = vld [vmem:[%s3 + $0x18] sm:$0xff]
    %v829 = vld [vmem:[%s3 + $0x20] sm:$0xff]
    %v830 = vld [vmem:[%s3 + $0x28] sm:$0xff]
    %v831 = vld [vmem:[%s3 + $0x30] sm:$0xff]
    %v832 = vld [vmem:[%s3 + $0x38] sm:$0xff]
    %v833 = vld [vmem:[%s3 + $0x40] sm:$0xff]
    %v834 = vld [vmem:[%s3 + $0x48] sm:$0xff]
    %v835 = vld [vmem:[%s3 + $0x50] sm:$0xff]
    %v836 = vld [vmem:[%s3 + $0x58] sm:$0xff]
    %v837 = vld [vmem:[%s3 + $0x60] sm:$0xff]
    %v838 = vld [vmem:[%s3 + $0x68] sm:$0xff]
    %v839 = vld [vmem:[%s3 + $0x70] sm:$0xff]
    %v840 = vld [vmem:[%s3 + $0x78] sm:$0xff]
    %v841 = vld [vmem:[%s3 + $0x80] sm:$0xff]
    %v842 = vld [vmem:[%s3 + $0x88] sm:$0xff]
    %v843 = vld [vmem:[%s3 + $0x90] sm:$0xff]
    %v844 = vld [vmem:[%s3 + $0x98] sm:$0xff]
    %v845 = vld [vmem:[%s3 + $0xa0] sm:$0xff]
    %v846 = vld [vmem:[%s3 + $0xa8] sm:$0xff]
    %v847 = vld [vmem:[%s3 + $0xb0] sm:$0xff]
    %v848 = vld [vmem:[%s3 + $0xb8] sm:$0xff]
    %v849 = vld [vmem:[%s3 + $0xc0] sm:$0xff]
    %v850 = vld [vmem:[%s3 + $0xc8] sm:$0xff]
    %v851 = vld [vmem:[%s3 + $0xd0] sm:$0xff]
    %v852 = vld [vmem:[%s3 + $0xd8] sm:$0xff]
    %v853 = vld [vmem:[%s3 + $0xe0] sm:$0xff]
    %v854 = vld [vmem:[%s3 + $0xe8] sm:$0xff]
    %v855 = vld [vmem:[%s3 + $0xf0] sm:$0xff]
    %v856 = vld [vmem:[%s3 + $0xf8] sm:$0xff]
    %v857 = vld [vmem:[%s3 + $0x100] sm:$0xff]
    %v858 = vld [vmem:[%s3 + $0x108] sm:$0xff]
    %v859 = vld [vmem:[%s3 + $0x110] sm:$0xff]
    %v860 = vld [vmem:[%s3 + $0x118] sm:$0xff]
    %v861 = vld [vmem:[%s3 + $0x120] sm:$0xff]
    %v862 = vld [vmem:[%s3 + $0x128] sm:$0xff]
    %v863 = vld [vmem:[%s3 + $0x130] sm:$0xff]
    %v864 = vadd.f32 %v786, %v825
    %v865 = vadd.f32 %v787, %v826
    %v866 = vadd.f32 %v788, %v827
    %v867 = vadd.f32 %v789, %v828
    %v868 = vadd.f32 %v790, %v829
    %v869 = vadd.f32 %v791, %v830
    %v870 = vadd.f32 %v792, %v831
    %v871 = vadd.f32 %v793, %v832
    %v872 = vadd.f32 %v794, %v833
    %v873 = vadd.f32 %v795, %v834
    %v874 = vadd.f32 %v796, %v835
    %v875 = vadd.f32 %v797, %v836
    %v876 = vadd.f32 %v798, %v837
    %v877 = vadd.f32 %v799, %v838
    %v878 = vadd.f32 %v800, %v839
    %v879 = vadd.f32 %v801, %v840
    %v880 = vadd.f32 %v802, %v841
    %v881 = vadd.f32 %v803, %v842
    %v882 = vadd.f32 %v804, %v843
    %v883 = vadd.f32 %v805, %v844
    %v884 = vadd.f32 %v806, %v845
    %v885 = vadd.f32 %v807, %v846
    %v886 = vadd.f32 %v808, %v847
    %v887 = vadd.f32 %v809, %v848
    %v888 = vadd.f32 %v810, %v849
    %v889 = vadd.f32 %v811, %v850
    %v890 = vadd.f32 %v812, %v851
    %v891 = vadd.f32 %v813, %v852
    %v892 = vadd.f32 %v814, %v853
    %v893 = vadd.f32 %v815, %v854
    %v894 = vadd.f32 %v816, %v855
    %v895 = vadd.f32 %v817, %v856
    %v896 = vadd.f32 %v818, %v857
    %v897 = vadd.f32 %v819, %v858
    %v898 = vadd.f32 %v820, %v859
    %v899 = vadd.f32 %v821, %v860
    %v900 = vadd.f32 %v822, %v861
    %v901 = vadd.f32 %v823, %v862
    %v902 = vadd.f32 %v824, %v863
    %903 = vst [vmem:[%s4] sm:$0xff] %v864
    %904 = vst [vmem:[%s4 + $0x8] sm:$0xff] %v865
    %905 = vst [vmem:[%s4 + $0x10] sm:$0xff] %v866
    %906 = vst [vmem:[%s4 + $0x18] sm:$0xff] %v867
    %907 = vst [vmem:[%s4 + $0x20] sm:$0xff] %v868
    %908 = vst [vmem:[%s4 + $0x28] sm:$0xff] %v869
    %909 = vst [vmem:[%s4 + $0x30] sm:$0xff] %v870
    %910 = vst [vmem:[%s4 + $0x38] sm:$0xff] %v871
    %911 = vst [vmem:[%s4 + $0x40] sm:$0xff] %v872
    %912 = vst [vmem:[%s4 + $0x48] sm:$0xff] %v873
    %913 = vst [vmem:[%s4 + $0x50] sm:$0xff] %v874
    %914 = vst [vmem:[%s4 + $0x58] sm:$0xff] %v875
    %915 = vst [vmem:[%s4 + $0x60] sm:$0xff] %v876
    %916 = vst [vmem:[%s4 + $0x68] sm:$0xff] %v877
    %917 = vst [vmem:[%s4 + $0x70] sm:$0xff] %v878
    %918 = vst [vmem:[%s4 + $0x78] sm:$0xff] %v879
    %919 = vst [vmem:[%s4 + $0x80] sm:$0xff] %v880
    %920 = vst [vmem:[%s4 + $0x88] sm:$0xff] %v881
    %921 = vst [vmem:[%s4 + $0x90] sm:$0xff] %v882
    %922 = vst [vmem:[%s4 + $0x98] sm:$0xff] %v883
    %923 = vst [vmem:[%s4 + $0xa0] sm:$0xff] %v884
    %924 = vst [vmem:[%s4 + $0xa8] sm:$0xff] %v885
    %925 = vst [vmem:[%s4 + $0xb0] sm:$0xff] %v886
    %926 = vst [vmem:[%s4 + $0xb8] sm:$0xff] %v887
    %927 = vst [vmem:[%s4 + $0xc0] sm:$0xff] %v888
    %928 = vst [vmem:[%s4 + $0xc8] sm:$0xff] %v889
    %929 = vst [vmem:[%s4 + $0xd0] sm:$0xff] %v890
    %930 = vst [vmem:[%s4 + $0xd8] sm:$0xff] %v891
    %931 = vst [vmem:[%s4 + $0xe0] sm:$0xff] %v892
    %932 = vst [vmem:[%s4 + $0xe8] sm:$0xff] %v893
    %933 = vst [vmem:[%s4 + $0xf0] sm:$0xff] %v894
    %934 = vst [vmem:[%s4 + $0xf8] sm:$0xff] %v895
    %935 = vst [vmem:[%s4 + $0x100] sm:$0xff] %v896
    %936 = vst [vmem:[%s4 + $0x108] sm:$0xff] %v897
    %937 = vst [vmem:[%s4 + $0x110] sm:$0xff] %v898
    %938 = vst [vmem:[%s4 + $0x118] sm:$0xff] %v899
    %939 = vst [vmem:[%s4 + $0x120] sm:$0xff] %v900
    %940 = vst [vmem:[%s4 + $0x128] sm:$0xff] %v901
    %941 = vst [vmem:[%s4 + $0x130] sm:$0xff] %v902
  $region25: #{_lambda_.20} parent=0 // pred_fallthru
    _
  // Predicated region
  $region26: #{_lambda_.20} parent=0 // pred_check
    _
  $region27: #{_lambda_.20} parent=0 // pred_check_branch
    %943 = sbr.rel (0) target = $region29
  $region28: #{_lambda_.20} parent=0 // pred_region
    _
  $region29: #{_lambda_.20} parent=0 // pred_fallthru
    _
  // Predicated region
  $region30: #{_lambda_.20} parent=0 // pred_check
    _
  $region31: #{_lambda_.20} parent=0 // pred_check_branch
    %945 = sbr.rel (0) target = $region33
  $region32: #{_lambda_.20} parent=0 // pred_region
    _
  $region33: #{_lambda_.20} parent=0 // pred_fallthru
    _

// kernel: _lambda_.21
$region0: #{_lambda_.21}
  #allocation0 [shape = 'u32[]', space=smem, size = 0x4, offset = 0x4, fixed_abs, tag = 'smem constant byte address 0x4 - core index']
  #allocation1 [shape = 'u32[72,128]{1,0:T(1,128)}', space=vmem, size = 0x9000, scoped, tag = 'internal scratch']
  #allocation2 [shape = 'f32[64,128]{1,0:T(8,128)}', space=vmem, size = 0x8000, scoped, tag = 'scratch operand']
  %s0 = inlined_call_operand.vmem [shape: bf16[64,128], index: 0, kind: input, shape index: {}]
  %s1 = inlined_call_operand.vmem [shape: bf16[128,128], index: 1, kind: input, shape index: {}]
  %s2 = inlined_call_operand.vmem [shape: f32[1,128], index: 2, kind: input, shape index: {}]
  %s3 = inlined_call_operand.vmem [shape: f32[64,128], index: 3, kind: output, shape index: {}]
  %s4 = sld [smem:[#allocation0]]
  $region30: #{_lambda_.21} parent=0
    _
  %s6 = ssub.s32 1, %s4
  %s7 = scalar_select 0, %s6, %s4
  // Predicated region
  $region2: #{_lambda_.21} parent=0 // pred_check
    _
  $region3: #{_lambda_.21} parent=0 // pred_check_branch
    %9 = sbr.rel (0) target = $region5
  $region4: #{_lambda_.21} parent=0 // pred_region
    _
  $region5: #{_lambda_.21} parent=0 // pred_fallthru
    _
  // Predicated region
  $region6: #{_lambda_.21} parent=0 // pred_check
    _
  $region7: #{_lambda_.21} parent=0 // pred_check_branch
    %11 = sbr.rel (0) target = $region9
  $region8: #{_lambda_.21} parent=0 // pred_region
    _
  $region9: #{_lambda_.21} parent=0 // pred_fallthru
    _
  // Predicated region
  $region10: #{_lambda_.21} parent=0 // pred_check
    _
  $region11: #{_lambda_.21} parent=0 // pred_check_branch
    %13 = sbr.rel (0) target = $region13
  $region12: #{_lambda_.21} parent=0 // pred_region
    _
  $region13: #{_lambda_.21} parent=0 // pred_fallthru
    _
  %p14 = scmp.eq.s32.totalorder 0, 0
  // Predicated region
  $region14: #{_lambda_.21} parent=0 // pred_check
    %p15 = pneg %p14
  $region15: #{_lambda_.21} parent=0 // pred_check_branch
    %17 = sbr.rel (%p15) target = $region17
  $region16: #{_lambda_.21} parent=0 // pred_region
    %18 = vst [vmem:[#allocation2] sm:$0xff] 0.0
    %19 = vst [vmem:[#allocation2 + $0x8] sm:$0xff] 0.0
    %20 = vst [vmem:[#allocation2 + $0x10] sm:$0xff] 0.0
    %21 = vst [vmem:[#allocation2 + $0x18] sm:$0xff] 0.0
    %22 = vst [vmem:[#allocation2 + $0x20] sm:$0xff] 0.0
    %23 = vst [vmem:[#allocation2 + $0x28] sm:$0xff] 0.0
    %24 = vst [vmem:[#allocation2 + $0x30] sm:$0xff] 0.0
    %25 = vst [vmem:[#allocation2 + $0x38] sm:$0xff] 0.0
  $region17: #{_lambda_.21} parent=0 // pred_fallthru
    _
  %v26 = vld [vmem:[%s0] sm:$0xf]
  %v27 = vld [vmem:[%s0 + $0x4] sm:$0xf]
  %v28 = vld [vmem:[%s0 + $0x8] sm:$0xf]
  %v29 = vld [vmem:[%s0 + $0xc] sm:$0xf]
  %v30 = vld [vmem:[%s0 + $0x10] sm:$0xf]
  %v31 = vld [vmem:[%s0 + $0x14] sm:$0xf]
  %v32 = vld [vmem:[%s0 + $0x18] sm:$0xf]
  %v33 = vld [vmem:[%s0 + $0x1c] sm:$0xf]
  %v34 = vld [vmem:[#allocation2] sm:$0xff]
  %v35 = vld [vmem:[#allocation2 + $0x8] sm:$0xff]
  %v36 = vld [vmem:[#allocation2 + $0x10] sm:$0xff]
  %v37 = vld [vmem:[#allocation2 + $0x18] sm:$0xff]
  %v38 = vld [vmem:[#allocation2 + $0x20] sm:$0xff]
  %v39 = vld [vmem:[#allocation2 + $0x28] sm:$0xff]
  %v40 = vld [vmem:[#allocation2 + $0x30] sm:$0xff]
  %v41 = vld [vmem:[#allocation2 + $0x38] sm:$0xff]
  %v42 = vld [vmem:[%s1] sm:$0xf]
  %v43 = vld [vmem:[%s1 + $0x4] sm:$0xf]
  %v44 = vld [vmem:[%s1 + $0x8] sm:$0xf]
  %v45 = vld [vmem:[%s1 + $0xc] sm:$0xf]
  %v46 = vld [vmem:[%s1 + $0x10] sm:$0xf]
  %v47 = vld [vmem:[%s1 + $0x14] sm:$0xf]
  %v48 = vld [vmem:[%s1 + $0x18] sm:$0xf]
  %v49 = vld [vmem:[%s1 + $0x1c] sm:$0xf]
  %v50 = vld [vmem:[%s1 + $0x20] sm:$0xf]
  %v51 = vld [vmem:[%s1 + $0x24] sm:$0xf]
  %v52 = vld [vmem:[%s1 + $0x28] sm:$0xf]
  %v53 = vld [vmem:[%s1 + $0x2c] sm:$0xf]
  %v54 = vld [vmem:[%s1 + $0x30] sm:$0xf]
  %v55 = vld [vmem:[%s1 + $0x34] sm:$0xf]
  %v56 = vld [vmem:[%s1 + $0x38] sm:$0xf]
  %v57 = vld [vmem:[%s1 + $0x3c] sm:$0xf]
  %v66 = vunpack.c.l.b16 %v26
  %v67 = vunpack.c.l.b16 %v27
  %v68 = vunpack.c.l.b16 %v28
  %v69 = vunpack.c.l.b16 %v29
  %v70 = vunpack.c.l.b16 %v30
  %v71 = vunpack.c.l.b16 %v31
  %v72 = vunpack.c.l.b16 %v32
  %v73 = vunpack.c.l.b16 %v33
  %v74 = vpack.c.b16 %v67, %v66
  %v75 = vpack.c.b16 %v69, %v68
  %v76 = vpack.c.b16 %v71, %v70
  %v77 = vpack.c.b16 %v73, %v72
  %v98 = vunpack.c.l.b16 %v42
  %v99 = vunpack.c.l.b16 %v43
  %v100 = vunpack.c.l.b16 %v44
  %v101 = vunpack.c.l.b16 %v45
  %v102 = vunpack.c.l.b16 %v46
  %v103 = vunpack.c.l.b16 %v47
  %v104 = vunpack.c.l.b16 %v48
  %v105 = vunpack.c.l.b16 %v49
  %v106 = vunpack.c.l.b16 %v50
  %v107 = vunpack.c.l.b16 %v51
  %v108 = vunpack.c.l.b16 %v52
  %v109 = vunpack.c.l.b16 %v53
  %v110 = vunpack.c.l.b16 %v54
  %v111 = vunpack.c.l.b16 %v55
  %v112 = vunpack.c.l.b16 %v56
  %v113 = vunpack.c.l.b16 %v57
  %v114 = vpack.c.b16 %v99, %v98
  %v115 = vpack.c.b16 %v101, %v100
  %v116 = vpack.c.b16 %v103, %v102
  %v117 = vpack.c.b16 %v105, %v104
  %v118 = vpack.c.b16 %v107, %v106
  %v119 = vpack.c.b16 %v109, %v108
  %v120 = vpack.c.b16 %v111, %v110
  %v121 = vpack.c.b16 %v113, %v112
  %130 = vmatpush.bf16.msra.mxu0 %v121
  %131 = vmatpush.bf16.msra.mxu0 %v120
  %132 = vmatpush.bf16.msra.mxu0 %v119
  %133 = vmatpush.bf16.msra.mxu0 %v118
  %134 = vmatpush.bf16.msra.mxu0 %v117
  %135 = vmatpush.bf16.msra.mxu0 %v116
  %136 = vmatpush.bf16.msra.mxu0 %v115
  %137 = vmatpush.bf16.msra.mxu0 %v114
  %138 = vmatmul.bf16.gmra.mxu0 %v74
  %v139 = vpop.f32.mrf.mxu0
  %v140 = vadd.f32 0.0, %v139
  %v141 = vpop.f32.mrf.mxu0
  %v142 = vadd.f32 0.0, %v141
  %143 = vmatmul.bf16.gmra.mxu0 %v75
  %v144 = vpop.f32.mrf.mxu0
  %v145 = vadd.f32 0.0, %v144
  %v146 = vpop.f32.mrf.mxu0
  %v147 = vadd.f32 0.0, %v146
  %148 = vmatmul.bf16.gmra.mxu0 %v76
  %v149 = vpop.f32.mrf.mxu0
  %v150 = vadd.f32 0.0, %v149
  %v151 = vpop.f32.mrf.mxu0
  %v152 = vadd.f32 0.0, %v151
  %153 = vmatmul.bf16.gmra.mxu0 %v77
  %v154 = vpop.f32.mrf.mxu0
  %v155 = vadd.f32 0.0, %v154
  %v156 = vpop.f32.mrf.mxu0
  %v157 = vadd.f32 0.0, %v156
  %158 = vdwg.mxu0
  %v159 = vadd.f32 %v34, %v140
  %v160 = vadd.f32 %v35, %v142
  %v161 = vadd.f32 %v36, %v145
  %v162 = vadd.f32 %v37, %v147
  %v163 = vadd.f32 %v38, %v150
  %v164 = vadd.f32 %v39, %v152
  %v165 = vadd.f32 %v40, %v155
  %v166 = vadd.f32 %v41, %v157
  %167 = vst [vmem:[#allocation2] sm:$0xff] %v159
  %168 = vst [vmem:[#allocation2 + $0x8] sm:$0xff] %v160
  %169 = vst [vmem:[#allocation2 + $0x10] sm:$0xff] %v161
  %170 = vst [vmem:[#allocation2 + $0x18] sm:$0xff] %v162
  %171 = vst [vmem:[#allocation2 + $0x20] sm:$0xff] %v163
  %172 = vst [vmem:[#allocation2 + $0x28] sm:$0xff] %v164
  %173 = vst [vmem:[#allocation2 + $0x30] sm:$0xff] %v165
  %174 = vst [vmem:[#allocation2 + $0x38] sm:$0xff] %v166
  // Predicated region
  $region18: #{_lambda_.21} parent=0 // pred_check
    %p175 = pneg %p14
  $region19: #{_lambda_.21} parent=0 // pred_check_branch
    %177 = sbr.rel (%p175) target = $region21
  $region20: #{_lambda_.21} parent=0 // pred_region
    %v178 = vld [vmem:[#allocation2] sm:$0xff]
    %v179 = vld [vmem:[#allocation2 + $0x8] sm:$0xff]
    %v180 = vld [vmem:[#allocation2 + $0x10] sm:$0xff]
    %v181 = vld [vmem:[#allocation2 + $0x18] sm:$0xff]
    %v182 = vld [vmem:[#allocation2 + $0x20] sm:$0xff]
    %v183 = vld [vmem:[#allocation2 + $0x28] sm:$0xff]
    %v184 = vld [vmem:[#allocation2 + $0x30] sm:$0xff]
    %v185 = vld [vmem:[#allocation2 + $0x38] sm:$0xff]
    %v186 = vld [vmem:[%s2] sm:$0x1]
    %v188 = vperm.slane %v186, 0
    %v190 = vadd.f32 %v178, %v188
    %v191 = vadd.f32 %v179, %v188
    %v192 = vadd.f32 %v180, %v188
    %v193 = vadd.f32 %v181, %v188
    %v194 = vadd.f32 %v182, %v188
    %v195 = vadd.f32 %v183, %v188
    %v196 = vadd.f32 %v184, %v188
    %v197 = vadd.f32 %v185, %v188
    %198 = vst [vmem:[%s3] sm:$0xff] %v190
    %199 = vst [vmem:[%s3 + $0x8] sm:$0xff] %v191
    %200 = vst [vmem:[%s3 + $0x10] sm:$0xff] %v192
    %201 = vst [vmem:[%s3 + $0x18] sm:$0xff] %v193
    %202 = vst [vmem:[%s3 + $0x20] sm:$0xff] %v194
    %203 = vst [vmem:[%s3 + $0x28] sm:$0xff] %v195
    %204 = vst [vmem:[%s3 + $0x30] sm:$0xff] %v196
    %205 = vst [vmem:[%s3 + $0x38] sm:$0xff] %v197
  $region21: #{_lambda_.21} parent=0 // pred_fallthru
    _
  // Predicated region
  $region22: #{_lambda_.21} parent=0 // pred_check
    _
  $region23: #{_lambda_.21} parent=0 // pred_check_branch
    %207 = sbr.rel (0) target = $region25
  $region24: #{_lambda_.21} parent=0 // pred_region
    _
  $region25: #{_lambda_.21} parent=0 // pred_fallthru
    _
  // Predicated region
  $region26: #{_lambda_.21} parent=0 // pred_check
    _
  $region27: #{_lambda_.21} parent=0 // pred_check_branch
    %209 = sbr.rel (0) target = $region29
  $region28: #{_lambda_.21} parent=0 // pred_region
    _
  $region29: #{_lambda_.21} parent=0 // pred_fallthru
    _

// kernel: _lambda_.23
$region0: #{_lambda_.23}
  #allocation0 [shape = 'u32[]', space=smem, size = 0x4, offset = 0x4, fixed_abs, tag = 'smem constant byte address 0x4 - core index']
  #allocation1 [shape = 'u32[72,128]{1,0:T(1,128)}', space=vmem, size = 0x9000, scoped, tag = 'internal scratch']
  #allocation2 [shape = 'f32[16,128]{1,0:T(8,128)}', space=vmem, size = 0x2000, scoped, tag = 'scratch operand']
  %s0 = inlined_call_operand.vmem [shape: bf16[16,128], index: 0, kind: input, shape index: {}]
  %s1 = inlined_call_operand.vmem [shape: bf16[128,128], index: 1, kind: input, shape index: {}]
  %s2 = inlined_call_operand.vmem [shape: f32[1,128], index: 2, kind: input, shape index: {}]
  %s3 = inlined_call_operand.vmem [shape: f32[16,128], index: 3, kind: output, shape index: {}]
  %s4 = sld [smem:[#allocation0]]
  $region30: #{_lambda_.23} parent=0
    _
  %s6 = ssub.s32 1, %s4
  %s7 = scalar_select 0, %s6, %s4
  // Predicated region
  $region2: #{_lambda_.23} parent=0 // pred_check
    _
  $region3: #{_lambda_.23} parent=0 // pred_check_branch
    %9 = sbr.rel (0) target = $region5
  $region4: #{_lambda_.23} parent=0 // pred_region
    _
  $region5: #{_lambda_.23} parent=0 // pred_fallthru
    _
  // Predicated region
  $region6: #{_lambda_.23} parent=0 // pred_check
    _
  $region7: #{_lambda_.23} parent=0 // pred_check_branch
    %11 = sbr.rel (0) target = $region9
  $region8: #{_lambda_.23} parent=0 // pred_region
    _
  $region9: #{_lambda_.23} parent=0 // pred_fallthru
    _
  // Predicated region
  $region10: #{_lambda_.23} parent=0 // pred_check
    _
  $region11: #{_lambda_.23} parent=0 // pred_check_branch
    %13 = sbr.rel (0) target = $region13
  $region12: #{_lambda_.23} parent=0 // pred_region
    _
  $region13: #{_lambda_.23} parent=0 // pred_fallthru
    _
  %p14 = scmp.eq.s32.totalorder 0, 0
  // Predicated region
  $region14: #{_lambda_.23} parent=0 // pred_check
    %p15 = pneg %p14
  $region15: #{_lambda_.23} parent=0 // pred_check_branch
    %17 = sbr.rel (%p15) target = $region17
  $region16: #{_lambda_.23} parent=0 // pred_region
    %18 = vst [vmem:[#allocation2] sm:$0xff] 0.0
    %19 = vst [vmem:[#allocation2 + $0x8] sm:$0xff] 0.0
  $region17: #{_lambda_.23} parent=0 // pred_fallthru
    _
  %v20 = vld [vmem:[%s0] sm:$0xf]
  %v21 = vld [vmem:[%s0 + $0x4] sm:$0xf]
  %v22 = vld [vmem:[#allocation2] sm:$0xff]
  %v23 = vld [vmem:[#allocation2 + $0x8] sm:$0xff]
  %v24 = vld [vmem:[%s1] sm:$0xf]
  %v25 = vld [vmem:[%s1 + $0x4] sm:$0xf]
  %v26 = vld [vmem:[%s1 + $0x8] sm:$0xf]
  %v27 = vld [vmem:[%s1 + $0xc] sm:$0xf]
  %v28 = vld [vmem:[%s1 + $0x10] sm:$0xf]
  %v29 = vld [vmem:[%s1 + $0x14] sm:$0xf]
  %v30 = vld [vmem:[%s1 + $0x18] sm:$0xf]
  %v31 = vld [vmem:[%s1 + $0x1c] sm:$0xf]
  %v32 = vld [vmem:[%s1 + $0x20] sm:$0xf]
  %v33 = vld [vmem:[%s1 + $0x24] sm:$0xf]
  %v34 = vld [vmem:[%s1 + $0x28] sm:$0xf]
  %v35 = vld [vmem:[%s1 + $0x2c] sm:$0xf]
  %v36 = vld [vmem:[%s1 + $0x30] sm:$0xf]
  %v37 = vld [vmem:[%s1 + $0x34] sm:$0xf]
  %v38 = vld [vmem:[%s1 + $0x38] sm:$0xf]
  %v39 = vld [vmem:[%s1 + $0x3c] sm:$0xf]
  %v42 = vunpack.c.l.b16 %v20
  %v43 = vunpack.c.l.b16 %v21
  %v44 = vpack.c.b16 %v43, %v42
  %v62 = vunpack.c.l.b16 %v24
  %v63 = vunpack.c.l.b16 %v25
  %v64 = vunpack.c.l.b16 %v26
  %v65 = vunpack.c.l.b16 %v27
  %v66 = vunpack.c.l.b16 %v28
  %v67 = vunpack.c.l.b16 %v29
  %v68 = vunpack.c.l.b16 %v30
  %v69 = vunpack.c.l.b16 %v31
  %v70 = vunpack.c.l.b16 %v32
  %v71 = vunpack.c.l.b16 %v33
  %v72 = vunpack.c.l.b16 %v34
  %v73 = vunpack.c.l.b16 %v35
  %v74 = vunpack.c.l.b16 %v36
  %v75 = vunpack.c.l.b16 %v37
  %v76 = vunpack.c.l.b16 %v38
  %v77 = vunpack.c.l.b16 %v39
  %v78 = vpack.c.b16 %v63, %v62
  %v79 = vpack.c.b16 %v65, %v64
  %v80 = vpack.c.b16 %v67, %v66
  %v81 = vpack.c.b16 %v69, %v68
  %v82 = vpack.c.b16 %v71, %v70
  %v83 = vpack.c.b16 %v73, %v72
  %v84 = vpack.c.b16 %v75, %v74
  %v85 = vpack.c.b16 %v77, %v76
  %94 = vmatpush.bf16.msra.mxu0 %v85
  %95 = vmatpush.bf16.msra.mxu0 %v84
  %96 = vmatpush.bf16.msra.mxu0 %v83
  %97 = vmatpush.bf16.msra.mxu0 %v82
  %98 = vmatpush.bf16.msra.mxu0 %v81
  %99 = vmatpush.bf16.msra.mxu0 %v80
  %100 = vmatpush.bf16.msra.mxu0 %v79
  %101 = vmatpush.bf16.msra.mxu0 %v78
  %102 = vmatmul.bf16.gmra.mxu0 %v44
  %v103 = vpop.f32.mrf.mxu0
  %v104 = vadd.f32 0.0, %v103
  %v105 = vpop.f32.mrf.mxu0
  %v106 = vadd.f32 0.0, %v105
  %107 = vdwg.mxu0
  %v108 = vadd.f32 %v22, %v104
  %v109 = vadd.f32 %v23, %v106
  %110 = vst [vmem:[#allocation2] sm:$0xff] %v108
  %111 = vst [vmem:[#allocation2 + $0x8] sm:$0xff] %v109
  // Predicated region
  $region18: #{_lambda_.23} parent=0 // pred_check
    %p112 = pneg %p14
  $region19: #{_lambda_.23} parent=0 // pred_check_branch
    %114 = sbr.rel (%p112) target = $region21
  $region20: #{_lambda_.23} parent=0 // pred_region
    %v115 = vld [vmem:[#allocation2] sm:$0xff]
    %v116 = vld [vmem:[#allocation2 + $0x8] sm:$0xff]
    %v117 = vld [vmem:[%s2] sm:$0x1]
    %v119 = vperm.slane %v117, 0
    %v121 = vadd.f32 %v115, %v119
    %v122 = vadd.f32 %v116, %v119
    %123 = vst [vmem:[%s3] sm:$0xff] %v121
    %124 = vst [vmem:[%s3 + $0x8] sm:$0xff] %v122
  $region21: #{_lambda_.23} parent=0 // pred_fallthru
    _
  // Predicated region
  $region22: #{_lambda_.23} parent=0 // pred_check
    _
  $region23: #{_lambda_.23} parent=0 // pred_check_branch
    %126 = sbr.rel (0) target = $region25
  $region24: #{_lambda_.23} parent=0 // pred_region
    _
  $region25: #{_lambda_.23} parent=0 // pred_fallthru
    _
  // Predicated region
  $region26: #{_lambda_.23} parent=0 // pred_check
    _
  $region27: #{_lambda_.23} parent=0 // pred_check_branch
    %128 = sbr.rel (0) target = $region29
  $region28: #{_lambda_.23} parent=0 // pred_region
    _
  $region29: #{_lambda_.23} parent=0 // pred_fallthru
    _

// kernel: _lambda_.22
$region0: #{_lambda_.22}
  #allocation0 [shape = 'u32[]', space=smem, size = 0x4, offset = 0x4, fixed_abs, tag = 'smem constant byte address 0x4 - core index']
  #allocation1 [shape = 'u32[72,128]{1,0:T(1,128)}', space=vmem, size = 0x9000, scoped, tag = 'internal scratch']
  #allocation2 [shape = 'f32[64,128]{1,0:T(8,128)}', space=vmem, size = 0x8000, scoped, tag = 'scratch operand']
  %s0 = inlined_call_operand.vmem [shape: bf16[64,128], index: 0, kind: input, shape index: {}]
  %s1 = inlined_call_operand.vmem [shape: bf16[128,128], index: 1, kind: input, shape index: {}]
  %s2 = inlined_call_operand.vmem [shape: f32[1,128], index: 2, kind: input, shape index: {}]
  %s3 = inlined_call_operand.vmem [shape: f32[64,128], index: 3, kind: input, shape index: {}]
  %s4 = inlined_call_operand.vmem [shape: f32[64,128], index: 4, kind: output, shape index: {}]
  %s5 = sld [smem:[#allocation0]]
  $region34: #{_lambda_.22} parent=0
    _
  %s7 = ssub.s32 1, %s5
  %s8 = scalar_select 0, %s7, %s5
  // Predicated region
  $region2: #{_lambda_.22} parent=0 // pred_check
    _
  $region3: #{_lambda_.22} parent=0 // pred_check_branch
    %10 = sbr.rel (0) target = $region5
  $region4: #{_lambda_.22} parent=0 // pred_region
    _
  $region5: #{_lambda_.22} parent=0 // pred_fallthru
    _
  // Predicated region
  $region6: #{_lambda_.22} parent=0 // pred_check
    _
  $region7: #{_lambda_.22} parent=0 // pred_check_branch
    %12 = sbr.rel (0) target = $region9
  $region8: #{_lambda_.22} parent=0 // pred_region
    _
  $region9: #{_lambda_.22} parent=0 // pred_fallthru
    _
  // Predicated region
  $region10: #{_lambda_.22} parent=0 // pred_check
    _
  $region11: #{_lambda_.22} parent=0 // pred_check_branch
    %14 = sbr.rel (0) target = $region13
  $region12: #{_lambda_.22} parent=0 // pred_region
    _
  $region13: #{_lambda_.22} parent=0 // pred_fallthru
    _
  // Predicated region
  $region14: #{_lambda_.22} parent=0 // pred_check
    _
  $region15: #{_lambda_.22} parent=0 // pred_check_branch
    %16 = sbr.rel (0) target = $region17
  $region16: #{_lambda_.22} parent=0 // pred_region
    _
  $region17: #{_lambda_.22} parent=0 // pred_fallthru
    _
  %p17 = scmp.eq.s32.totalorder 0, 0
  // Predicated region
  $region18: #{_lambda_.22} parent=0 // pred_check
    %p18 = pneg %p17
  $region19: #{_lambda_.22} parent=0 // pred_check_branch
    %20 = sbr.rel (%p18) target = $region21
  $region20: #{_lambda_.22} parent=0 // pred_region
    %21 = vst [vmem:[#allocation2] sm:$0xff] 0.0
    %22 = vst [vmem:[#allocation2 + $0x8] sm:$0xff] 0.0
    %23 = vst [vmem:[#allocation2 + $0x10] sm:$0xff] 0.0
    %24 = vst [vmem:[#allocation2 + $0x18] sm:$0xff] 0.0
    %25 = vst [vmem:[#allocation2 + $0x20] sm:$0xff] 0.0
    %26 = vst [vmem:[#allocation2 + $0x28] sm:$0xff] 0.0
    %27 = vst [vmem:[#allocation2 + $0x30] sm:$0xff] 0.0
    %28 = vst [vmem:[#allocation2 + $0x38] sm:$0xff] 0.0
  $region21: #{_lambda_.22} parent=0 // pred_fallthru
    _
  %v29 = vld [vmem:[%s0] sm:$0xf]
  %v30 = vld [vmem:[%s0 + $0x4] sm:$0xf]
  %v31 = vld [vmem:[%s0 + $0x8] sm:$0xf]
  %v32 = vld [vmem:[%s0 + $0xc] sm:$0xf]
  %v33 = vld [vmem:[%s0 + $0x10] sm:$0xf]
  %v34 = vld [vmem:[%s0 + $0x14] sm:$0xf]
  %v35 = vld [vmem:[%s0 + $0x18] sm:$0xf]
  %v36 = vld [vmem:[%s0 + $0x1c] sm:$0xf]
  %v37 = vunpack.c.l.bf16 %v29
  %v38 = vunpack.c.l.bf16 %v30
  %v39 = vunpack.c.l.bf16 %v31
  %v40 = vunpack.c.l.bf16 %v32
  %v41 = vunpack.c.l.bf16 %v33
  %v42 = vunpack.c.l.bf16 %v34
  %v43 = vunpack.c.l.bf16 %v35
  %v44 = vunpack.c.l.bf16 %v36
  %vm45 = vcmp.ge.f32.partialorder %v37, 0.0
  %vm46 = vcmp.ge.f32.partialorder %v38, 0.0
  %vm47 = vcmp.ge.f32.partialorder %v39, 0.0
  %vm48 = vcmp.ge.f32.partialorder %v40, 0.0
  %vm49 = vcmp.ge.f32.partialorder %v41, 0.0
  %vm50 = vcmp.ge.f32.partialorder %v42, 0.0
  %vm51 = vcmp.ge.f32.partialorder %v43, 0.0
  %vm52 = vcmp.ge.f32.partialorder %v44, 0.0
  %v53 = vmul.f32 %v37, 0.010009766
  %v54 = vmul.f32 %v38, 0.010009766
  %v55 = vmul.f32 %v39, 0.010009766
  %v56 = vmul.f32 %v40, 0.010009766
  %v57 = vmul.f32 %v41, 0.010009766
  %v58 = vmul.f32 %v42, 0.010009766
  %v59 = vmul.f32 %v43, 0.010009766
  %v60 = vmul.f32 %v44, 0.010009766
  %v61 = vpack.c.bf16 %v53, %v53
  %v62 = vpack.c.bf16 %v54, %v54
  %v63 = vpack.c.bf16 %v55, %v55
  %v64 = vpack.c.bf16 %v56, %v56
  %v65 = vpack.c.bf16 %v57, %v57
  %v66 = vpack.c.bf16 %v58, %v58
  %v67 = vpack.c.bf16 %v59, %v59
  %v68 = vpack.c.bf16 %v60, %v60
  %vm69 = vmpackc.low %vm45, %vm45
  %vm70 = vmpackc.low %vm46, %vm46
  %vm71 = vmpackc.low %vm47, %vm47
  %vm72 = vmpackc.low %vm48, %vm48
  %vm73 = vmpackc.low %vm49, %vm49
  %vm74 = vmpackc.low %vm50, %vm50
  %vm75 = vmpackc.low %vm51, %vm51
  %vm76 = vmpackc.low %vm52, %vm52
  %v77 = vsel %vm69, %v29, %v61
  %v78 = vsel %vm70, %v30, %v62
  %v79 = vsel %vm71, %v31, %v63
  %v80 = vsel %vm72, %v32, %v64
  %v81 = vsel %vm73, %v33, %v65
  %v82 = vsel %vm74, %v34, %v66
  %v83 = vsel %vm75, %v35, %v67
  %v84 = vsel %vm76, %v36, %v68
  %v85 = vld [vmem:[#allocation2] sm:$0xff]
  %v86 = vld [vmem:[#allocation2 + $0x8] sm:$0xff]
  %v87 = vld [vmem:[#allocation2 + $0x10] sm:$0xff]
  %v88 = vld [vmem:[#allocation2 + $0x18] sm:$0xff]
  %v89 = vld [vmem:[#allocation2 + $0x20] sm:$0xff]
  %v90 = vld [vmem:[#allocation2 + $0x28] sm:$0xff]
  %v91 = vld [vmem:[#allocation2 + $0x30] sm:$0xff]
  %v92 = vld [vmem:[#allocation2 + $0x38] sm:$0xff]
  %v93 = vld [vmem:[%s1] sm:$0xf]
  %v94 = vld [vmem:[%s1 + $0x4] sm:$0xf]
  %v95 = vld [vmem:[%s1 + $0x8] sm:$0xf]
  %v96 = vld [vmem:[%s1 + $0xc] sm:$0xf]
  %v97 = vld [vmem:[%s1 + $0x10] sm:$0xf]
  %v98 = vld [vmem:[%s1 + $0x14] sm:$0xf]
  %v99 = vld [vmem:[%s1 + $0x18] sm:$0xf]
  %v100 = vld [vmem:[%s1 + $0x1c] sm:$0xf]
  %v101 = vld [vmem:[%s1 + $0x20] sm:$0xf]
  %v102 = vld [vmem:[%s1 + $0x24] sm:$0xf]
  %v103 = vld [vmem:[%s1 + $0x28] sm:$0xf]
  %v104 = vld [vmem:[%s1 + $0x2c] sm:$0xf]
  %v105 = vld [vmem:[%s1 + $0x30] sm:$0xf]
  %v106 = vld [vmem:[%s1 + $0x34] sm:$0xf]
  %v107 = vld [vmem:[%s1 + $0x38] sm:$0xf]
  %v108 = vld [vmem:[%s1 + $0x3c] sm:$0xf]
  %v117 = vunpack.c.l.b16 %v77
  %v118 = vunpack.c.l.b16 %v78
  %v119 = vunpack.c.l.b16 %v79
  %v120 = vunpack.c.l.b16 %v80
  %v121 = vunpack.c.l.b16 %v81
  %v122 = vunpack.c.l.b16 %v82
  %v123 = vunpack.c.l.b16 %v83
  %v124 = vunpack.c.l.b16 %v84
  %v125 = vpack.c.b16 %v118, %v117
  %v126 = vpack.c.b16 %v120, %v119
  %v127 = vpack.c.b16 %v122, %v121
  %v128 = vpack.c.b16 %v124, %v123
  %v149 = vunpack.c.l.b16 %v93
  %v150 = vunpack.c.l.b16 %v94
  %v151 = vunpack.c.l.b16 %v95
  %v152 = vunpack.c.l.b16 %v96
  %v153 = vunpack.c.l.b16 %v97
  %v154 = vunpack.c.l.b16 %v98
  %v155 = vunpack.c.l.b16 %v99
  %v156 = vunpack.c.l.b16 %v100
  %v157 = vunpack.c.l.b16 %v101
  %v158 = vunpack.c.l.b16 %v102
  %v159 = vunpack.c.l.b16 %v103
  %v160 = vunpack.c.l.b16 %v104
  %v161 = vunpack.c.l.b16 %v105
  %v162 = vunpack.c.l.b16 %v106
  %v163 = vunpack.c.l.b16 %v107
  %v164 = vunpack.c.l.b16 %v108
  %v165 = vpack.c.b16 %v150, %v149
  %v166 = vpack.c.b16 %v152, %v151
  %v167 = vpack.c.b16 %v154, %v153
  %v168 = vpack.c.b16 %v156, %v155
  %v169 = vpack.c.b16 %v158, %v157
  %v170 = vpack.c.b16 %v160, %v159
  %v171 = vpack.c.b16 %v162, %v161
  %v172 = vpack.c.b16 %v164, %v163
  %181 = vmatpush.bf16.msra.mxu0 %v172
  %182 = vmatpush.bf16.msra.mxu0 %v171
  %183 = vmatpush.bf16.msra.mxu0 %v170
  %184 = vmatpush.bf16.msra.mxu0 %v169
  %185 = vmatpush.bf16.msra.mxu0 %v168
  %186 = vmatpush.bf16.msra.mxu0 %v167
  %187 = vmatpush.bf16.msra.mxu0 %v166
  %188 = vmatpush.bf16.msra.mxu0 %v165
  %189 = vmatmul.bf16.gmra.mxu0 %v125
  %v190 = vpop.f32.mrf.mxu0
  %v191 = vadd.f32 0.0, %v190
  %v192 = vpop.f32.mrf.mxu0
  %v193 = vadd.f32 0.0, %v192
  %194 = vmatmul.bf16.gmra.mxu0 %v126
  %v195 = vpop.f32.mrf.mxu0
  %v196 = vadd.f32 0.0, %v195
  %v197 = vpop.f32.mrf.mxu0
  %v198 = vadd.f32 0.0, %v197
  %199 = vmatmul.bf16.gmra.mxu0 %v127
  %v200 = vpop.f32.mrf.mxu0
  %v201 = vadd.f32 0.0, %v200
  %v202 = vpop.f32.mrf.mxu0
  %v203 = vadd.f32 0.0, %v202
  %204 = vmatmul.bf16.gmra.mxu0 %v128
  %v205 = vpop.f32.mrf.mxu0
  %v206 = vadd.f32 0.0, %v205
  %v207 = vpop.f32.mrf.mxu0
  %v208 = vadd.f32 0.0, %v207
  %209 = vdwg.mxu0
  %v210 = vadd.f32 %v85, %v191
  %v211 = vadd.f32 %v86, %v193
  %v212 = vadd.f32 %v87, %v196
  %v213 = vadd.f32 %v88, %v198
  %v214 = vadd.f32 %v89, %v201
  %v215 = vadd.f32 %v90, %v203
  %v216 = vadd.f32 %v91, %v206
  %v217 = vadd.f32 %v92, %v208
  %218 = vst [vmem:[#allocation2] sm:$0xff] %v210
  %219 = vst [vmem:[#allocation2 + $0x8] sm:$0xff] %v211
  %220 = vst [vmem:[#allocation2 + $0x10] sm:$0xff] %v212
  %221 = vst [vmem:[#allocation2 + $0x18] sm:$0xff] %v213
  %222 = vst [vmem:[#allocation2 + $0x20] sm:$0xff] %v214
  %223 = vst [vmem:[#allocation2 + $0x28] sm:$0xff] %v215
  %224 = vst [vmem:[#allocation2 + $0x30] sm:$0xff] %v216
  %225 = vst [vmem:[#allocation2 + $0x38] sm:$0xff] %v217
  // Predicated region
  $region22: #{_lambda_.22} parent=0 // pred_check
    %p226 = pneg %p17
  $region23: #{_lambda_.22} parent=0 // pred_check_branch
    %228 = sbr.rel (%p226) target = $region25
  $region24: #{_lambda_.22} parent=0 // pred_region
    %v229 = vld [vmem:[#allocation2] sm:$0xff]
    %v230 = vld [vmem:[#allocation2 + $0x8] sm:$0xff]
    %v231 = vld [vmem:[#allocation2 + $0x10] sm:$0xff]
    %v232 = vld [vmem:[#allocation2 + $0x18] sm:$0xff]
    %v233 = vld [vmem:[#allocation2 + $0x20] sm:$0xff]
    %v234 = vld [vmem:[#allocation2 + $0x28] sm:$0xff]
    %v235 = vld [vmem:[#allocation2 + $0x30] sm:$0xff]
    %v236 = vld [vmem:[#allocation2 + $0x38] sm:$0xff]
    %v237 = vld [vmem:[%s2] sm:$0x1]
    %v239 = vperm.slane %v237, 0
    %v241 = vadd.f32 %v229, %v239
    %v242 = vadd.f32 %v230, %v239
    %v243 = vadd.f32 %v231, %v239
    %v244 = vadd.f32 %v232, %v239
    %v245 = vadd.f32 %v233, %v239
    %v246 = vadd.f32 %v234, %v239
    %v247 = vadd.f32 %v235, %v239
    %v248 = vadd.f32 %v236, %v239
    %v249 = vld [vmem:[%s3] sm:$0xff]
    %v250 = vld [vmem:[%s3 + $0x8] sm:$0xff]
    %v251 = vld [vmem:[%s3 + $0x10] sm:$0xff]
    %v252 = vld [vmem:[%s3 + $0x18] sm:$0xff]
    %v253 = vld [vmem:[%s3 + $0x20] sm:$0xff]
    %v254 = vld [vmem:[%s3 + $0x28] sm:$0xff]
    %v255 = vld [vmem:[%s3 + $0x30] sm:$0xff]
    %v256 = vld [vmem:[%s3 + $0x38] sm:$0xff]
    %v257 = vadd.f32 %v241, %v249
    %v258 = vadd.f32 %v242, %v250
    %v259 = vadd.f32 %v243, %v251
    %v260 = vadd.f32 %v244, %v252
    %v261 = vadd.f32 %v245, %v253
    %v262 = vadd.f32 %v246, %v254
    %v263 = vadd.f32 %v247, %v255
    %v264 = vadd.f32 %v248, %v256
    %265 = vst [vmem:[%s4] sm:$0xff] %v257
    %266 = vst [vmem:[%s4 + $0x8] sm:$0xff] %v258
    %267 = vst [vmem:[%s4 + $0x10] sm:$0xff] %v259
    %268 = vst [vmem:[%s4 + $0x18] sm:$0xff] %v260
    %269 = vst [vmem:[%s4 + $0x20] sm:$0xff] %v261
    %270 = vst [vmem:[%s4 + $0x28] sm:$0xff] %v262
    %271 = vst [vmem:[%s4 + $0x30] sm:$0xff] %v263
    %272 = vst [vmem:[%s4 + $0x38] sm:$0xff] %v264
  $region25: #{_lambda_.22} parent=0 // pred_fallthru
    _
  // Predicated region
  $region26: #{_lambda_.22} parent=0 // pred_check
    _
  $region27: #{_lambda_.22} parent=0 // pred_check_branch
    %274 = sbr.rel (0) target = $region29
  $region28: #{_lambda_.22} parent=0 // pred_region
    _
  $region29: #{_lambda_.22} parent=0 // pred_fallthru
    _
  // Predicated region
  $region30: #{_lambda_.22} parent=0 // pred_check
    _
  $region31: #{_lambda_.22} parent=0 // pred_check_branch
    %276 = sbr.rel (0) target = $region33
  $region32: #{_lambda_.22} parent=0 // pred_region
    _
  $region33: #{_lambda_.22} parent=0 // pred_fallthru
    _

// kernel: _lambda_.24
$region0: #{_lambda_.24}
  #allocation0 [shape = 'u32[]', space=smem, size = 0x4, offset = 0x4, fixed_abs, tag = 'smem constant byte address 0x4 - core index']
  #allocation1 [shape = 'u32[72,128]{1,0:T(1,128)}', space=vmem, size = 0x9000, scoped, tag = 'internal scratch']
  #allocation2 [shape = 'f32[16,128]{1,0:T(8,128)}', space=vmem, size = 0x2000, scoped, tag = 'scratch operand']
  %s0 = inlined_call_operand.vmem [shape: bf16[16,256], index: 0, kind: input, shape index: {}]
  %s1 = inlined_call_operand.vmem [shape: bf16[256,128], index: 1, kind: input, shape index: {}]
  %s2 = inlined_call_operand.vmem [shape: f32[1,128], index: 2, kind: input, shape index: {}]
  %s3 = inlined_call_operand.vmem [shape: f32[16,128], index: 3, kind: input, shape index: {}]
  %s4 = inlined_call_operand.vmem [shape: f32[16,128], index: 4, kind: output, shape index: {}]
  %s5 = sld [smem:[#allocation0]]
  $region34: #{_lambda_.24} parent=0
    _
  %s7 = ssub.s32 1, %s5
  %s8 = scalar_select 0, %s7, %s5
  // Predicated region
  $region2: #{_lambda_.24} parent=0 // pred_check
    _
  $region3: #{_lambda_.24} parent=0 // pred_check_branch
    %10 = sbr.rel (0) target = $region5
  $region4: #{_lambda_.24} parent=0 // pred_region
    _
  $region5: #{_lambda_.24} parent=0 // pred_fallthru
    _
  // Predicated region
  $region6: #{_lambda_.24} parent=0 // pred_check
    _
  $region7: #{_lambda_.24} parent=0 // pred_check_branch
    %12 = sbr.rel (0) target = $region9
  $region8: #{_lambda_.24} parent=0 // pred_region
    _
  $region9: #{_lambda_.24} parent=0 // pred_fallthru
    _
  // Predicated region
  $region10: #{_lambda_.24} parent=0 // pred_check
    _
  $region11: #{_lambda_.24} parent=0 // pred_check_branch
    %14 = sbr.rel (0) target = $region13
  $region12: #{_lambda_.24} parent=0 // pred_region
    _
  $region13: #{_lambda_.24} parent=0 // pred_fallthru
    _
  // Predicated region
  $region14: #{_lambda_.24} parent=0 // pred_check
    _
  $region15: #{_lambda_.24} parent=0 // pred_check_branch
    %16 = sbr.rel (0) target = $region17
  $region16: #{_lambda_.24} parent=0 // pred_region
    _
  $region17: #{_lambda_.24} parent=0 // pred_fallthru
    _
  %p17 = scmp.eq.s32.totalorder 0, 0
  // Predicated region
  $region18: #{_lambda_.24} parent=0 // pred_check
    %p18 = pneg %p17
  $region19: #{_lambda_.24} parent=0 // pred_check_branch
    %20 = sbr.rel (%p18) target = $region21
  $region20: #{_lambda_.24} parent=0 // pred_region
    %21 = vst [vmem:[#allocation2] sm:$0xff] 0.0
    %22 = vst [vmem:[#allocation2 + $0x8] sm:$0xff] 0.0
  $region21: #{_lambda_.24} parent=0 // pred_fallthru
    _
  %v23 = vld [vmem:[%s0] sm:$0xff]
  %v24 = vld [vmem:[%s0 + $0x8] sm:$0xff]
  %v25 = vunpack.c.l.bf16 %v23
  %v26 = vunpack.c.h.bf16 %v23
  %v27 = vunpack.c.l.bf16 %v24
  %v28 = vunpack.c.h.bf16 %v24
  %vm29 = vcmp.ge.f32.partialorder %v25, 0.0
  %vm30 = vcmp.ge.f32.partialorder %v26, 0.0
  %vm31 = vcmp.ge.f32.partialorder %v27, 0.0
  %vm32 = vcmp.ge.f32.partialorder %v28, 0.0
  %v33 = vmul.f32 %v25, 0.010009766
  %v34 = vmul.f32 %v26, 0.010009766
  %v35 = vmul.f32 %v27, 0.010009766
  %v36 = vmul.f32 %v28, 0.010009766
  %v37 = vpack.c.bf16 %v34, %v33
  %v38 = vpack.c.bf16 %v36, %v35
  %vm39 = vmpackc.low %vm30, %vm29
  %vm40 = vmpackc.low %vm32, %vm31
  %v41 = vsel %vm39, %v23, %v37
  %v42 = vsel %vm40, %v24, %v38
  %v43 = vld [vmem:[#allocation2] sm:$0xff]
  %v44 = vld [vmem:[#allocation2 + $0x8] sm:$0xff]
  %v45 = vld [vmem:[%s1] sm:$0xf]
  %v46 = vld [vmem:[%s1 + $0x4] sm:$0xf]
  %v47 = vld [vmem:[%s1 + $0x8] sm:$0xf]
  %v48 = vld [vmem:[%s1 + $0xc] sm:$0xf]
  %v49 = vld [vmem:[%s1 + $0x10] sm:$0xf]
  %v50 = vld [vmem:[%s1 + $0x14] sm:$0xf]
  %v51 = vld [vmem:[%s1 + $0x18] sm:$0xf]
  %v52 = vld [vmem:[%s1 + $0x1c] sm:$0xf]
  %v53 = vld [vmem:[%s1 + $0x20] sm:$0xf]
  %v54 = vld [vmem:[%s1 + $0x24] sm:$0xf]
  %v55 = vld [vmem:[%s1 + $0x28] sm:$0xf]
  %v56 = vld [vmem:[%s1 + $0x2c] sm:$0xf]
  %v57 = vld [vmem:[%s1 + $0x30] sm:$0xf]
  %v58 = vld [vmem:[%s1 + $0x34] sm:$0xf]
  %v59 = vld [vmem:[%s1 + $0x38] sm:$0xf]
  %v60 = vld [vmem:[%s1 + $0x3c] sm:$0xf]
  %v61 = vld [vmem:[%s1 + $0x40] sm:$0xf]
  %v62 = vld [vmem:[%s1 + $0x44] sm:$0xf]
  %v63 = vld [vmem:[%s1 + $0x48] sm:$0xf]
  %v64 = vld [vmem:[%s1 + $0x4c] sm:$0xf]
  %v65 = vld [vmem:[%s1 + $0x50] sm:$0xf]
  %v66 = vld [vmem:[%s1 + $0x54] sm:$0xf]
  %v67 = vld [vmem:[%s1 + $0x58] sm:$0xf]
  %v68 = vld [vmem:[%s1 + $0x5c] sm:$0xf]
  %v69 = vld [vmem:[%s1 + $0x60] sm:$0xf]
  %v70 = vld [vmem:[%s1 + $0x64] sm:$0xf]
  %v71 = vld [vmem:[%s1 + $0x68] sm:$0xf]
  %v72 = vld [vmem:[%s1 + $0x6c] sm:$0xf]
  %v73 = vld [vmem:[%s1 + $0x70] sm:$0xf]
  %v74 = vld [vmem:[%s1 + $0x74] sm:$0xf]
  %v75 = vld [vmem:[%s1 + $0x78] sm:$0xf]
  %v76 = vld [vmem:[%s1 + $0x7c] sm:$0xf]
  %v79 = vunpack.c.l.b16 %v41
  %v80 = vunpack.c.h.b16 %v41
  %v81 = vunpack.c.l.b16 %v42
  %v82 = vunpack.c.h.b16 %v42
  %v83 = vpack.c.b16 %v81, %v79
  %v84 = vpack.c.b16 %v82, %v80
  %v119 = vunpack.c.l.b16 %v45
  %v120 = vunpack.c.l.b16 %v46
  %v121 = vunpack.c.l.b16 %v47
  %v122 = vunpack.c.l.b16 %v48
  %v123 = vunpack.c.l.b16 %v49
  %v124 = vunpack.c.l.b16 %v50
  %v125 = vunpack.c.l.b16 %v51
  %v126 = vunpack.c.l.b16 %v52
  %v127 = vunpack.c.l.b16 %v53
  %v128 = vunpack.c.l.b16 %v54
  %v129 = vunpack.c.l.b16 %v55
  %v130 = vunpack.c.l.b16 %v56
  %v131 = vunpack.c.l.b16 %v57
  %v132 = vunpack.c.l.b16 %v58
  %v133 = vunpack.c.l.b16 %v59
  %v134 = vunpack.c.l.b16 %v60
  %v135 = vunpack.c.l.b16 %v61
  %v136 = vunpack.c.l.b16 %v62
  %v137 = vunpack.c.l.b16 %v63
  %v138 = vunpack.c.l.b16 %v64
  %v139 = vunpack.c.l.b16 %v65
  %v140 = vunpack.c.l.b16 %v66
  %v141 = vunpack.c.l.b16 %v67
  %v142 = vunpack.c.l.b16 %v68
  %v143 = vunpack.c.l.b16 %v69
  %v144 = vunpack.c.l.b16 %v70
  %v145 = vunpack.c.l.b16 %v71
  %v146 = vunpack.c.l.b16 %v72
  %v147 = vunpack.c.l.b16 %v73
  %v148 = vunpack.c.l.b16 %v74
  %v149 = vunpack.c.l.b16 %v75
  %v150 = vunpack.c.l.b16 %v76
  %v151 = vpack.c.b16 %v120, %v119
  %v152 = vpack.c.b16 %v122, %v121
  %v153 = vpack.c.b16 %v124, %v123
  %v154 = vpack.c.b16 %v126, %v125
  %v155 = vpack.c.b16 %v128, %v127
  %v156 = vpack.c.b16 %v130, %v129
  %v157 = vpack.c.b16 %v132, %v131
  %v158 = vpack.c.b16 %v134, %v133
  %v159 = vpack.c.b16 %v136, %v135
  %v160 = vpack.c.b16 %v138, %v137
  %v161 = vpack.c.b16 %v140, %v139
  %v162 = vpack.c.b16 %v142, %v141
  %v163 = vpack.c.b16 %v144, %v143
  %v164 = vpack.c.b16 %v146, %v145
  %v165 = vpack.c.b16 %v148, %v147
  %v166 = vpack.c.b16 %v150, %v149
  %183 = vmatpush.bf16.msra.mxu0 %v158
  %184 = vmatpush.bf16.msra.mxu0 %v157
  %185 = vmatpush.bf16.msra.mxu0 %v156
  %186 = vmatpush.bf16.msra.mxu0 %v155
  %187 = vmatpush.bf16.msra.mxu0 %v154
  %188 = vmatpush.bf16.msra.mxu0 %v153
  %189 = vmatpush.bf16.msra.mxu0 %v152
  %190 = vmatpush.bf16.msra.mxu0 %v151
  %191 = vmatmul.bf16.gmra.mxu0 %v83
  %v192 = vpop.f32.mrf.mxu0
  %v193 = vadd.f32 0.0, %v192
  %v194 = vpop.f32.mrf.mxu0
  %v195 = vadd.f32 0.0, %v194
  %196 = vdwg.mxu0
  %197 = vmatpush.bf16.msra.mxu0 %v166
  %198 = vmatpush.bf16.msra.mxu0 %v165
  %199 = vmatpush.bf16.msra.mxu0 %v164
  %200 = vmatpush.bf16.msra.mxu0 %v163
  %201 = vmatpush.bf16.msra.mxu0 %v162
  %202 = vmatpush.bf16.msra.mxu0 %v161
  %203 = vmatpush.bf16.msra.mxu0 %v160
  %204 = vmatpush.bf16.msra.mxu0 %v159
  %205 = vmatmul.bf16.gmra.mxu0 %v84
  %v206 = vpop.f32.mrf.mxu0
  %v207 = vadd.f32 %v193, %v206
  %v208 = vpop.f32.mrf.mxu0
  %v209 = vadd.f32 %v195, %v208
  %210 = vdwg.mxu0
  %v211 = vadd.f32 %v43, %v207
  %v212 = vadd.f32 %v44, %v209
  %213 = vst [vmem:[#allocation2] sm:$0xff] %v211
  %214 = vst [vmem:[#allocation2 + $0x8] sm:$0xff] %v212
  // Predicated region
  $region22: #{_lambda_.24} parent=0 // pred_check
    %p215 = pneg %p17
  $region23: #{_lambda_.24} parent=0 // pred_check_branch
    %217 = sbr.rel (%p215) target = $region25
  $region24: #{_lambda_.24} parent=0 // pred_region
    %v218 = vld [vmem:[#allocation2] sm:$0xff]
    %v219 = vld [vmem:[#allocation2 + $0x8] sm:$0xff]
    %v220 = vld [vmem:[%s2] sm:$0x1]
    %v222 = vperm.slane %v220, 0
    %v224 = vadd.f32 %v218, %v222
    %v225 = vadd.f32 %v219, %v222
    %v226 = vld [vmem:[%s3] sm:$0xff]
    %v227 = vld [vmem:[%s3 + $0x8] sm:$0xff]
    %v228 = vadd.f32 %v224, %v226
    %v229 = vadd.f32 %v225, %v227
    %230 = vst [vmem:[%s4] sm:$0xff] %v228
    %231 = vst [vmem:[%s4 + $0x8] sm:$0xff] %v229
  $region25: #{_lambda_.24} parent=0 // pred_fallthru
    _
  // Predicated region
  $region26: #{_lambda_.24} parent=0 // pred_check
    _
  $region27: #{_lambda_.24} parent=0 // pred_check_branch
    %233 = sbr.rel (0) target = $region29
  $region28: #{_lambda_.24} parent=0 // pred_region
    _
  $region29: #{_lambda_.24} parent=0 // pred_fallthru
    _
  // Predicated region
  $region30: #{_lambda_.24} parent=0 // pred_check
    _
  $region31: #{_lambda_.24} parent=0 // pred_check_branch
    %235 = sbr.rel (0) target = $region33
  $region32: #{_lambda_.24} parent=0 // pred_region
    _
  $region33: #{_lambda_.24} parent=0 // pred_fallthru
    _

// kernel: _lambda_.28
$region0: #{_lambda_.28}
  #allocation0 [shape = 'u32[]', space=smem, size = 0x4, offset = 0x4, fixed_abs, tag = 'smem constant byte address 0x4 - core index']
  #allocation1 [shape = 'u32[72,128]{1,0:T(1,128)}', space=vmem, size = 0x9000, scoped, tag = 'internal scratch']
  #allocation2 [shape = 'f32[256,128]{1,0:T(8,128)}', space=vmem, size = 0x20000, scoped, tag = 'scratch operand']
  %s0 = inlined_call_operand.vmem [shape: bf16[256,128], index: 0, kind: input, shape index: {}]
  %s1 = inlined_call_operand.vmem [shape: bf16[128,128], index: 1, kind: input, shape index: {}]
  %s2 = inlined_call_operand.vmem [shape: f32[1,128], index: 2, kind: input, shape index: {}]
  %s3 = inlined_call_operand.vmem [shape: f32[256,128], index: 3, kind: output, shape index: {}]
  %s4 = sld [smem:[#allocation0]]
  $region30: #{_lambda_.28} parent=0
    _
  %s6 = ssub.s32 1, %s4
  %s7 = scalar_select 0, %s6, %s4
  // Predicated region
  $region2: #{_lambda_.28} parent=0 // pred_check
    _
  $region3: #{_lambda_.28} parent=0 // pred_check_branch
    %9 = sbr.rel (0) target = $region5
  $region4: #{_lambda_.28} parent=0 // pred_region
    _
  $region5: #{_lambda_.28} parent=0 // pred_fallthru
    _
  // Predicated region
  $region6: #{_lambda_.28} parent=0 // pred_check
    _
  $region7: #{_lambda_.28} parent=0 // pred_check_branch
    %11 = sbr.rel (0) target = $region9
  $region8: #{_lambda_.28} parent=0 // pred_region
    _
  $region9: #{_lambda_.28} parent=0 // pred_fallthru
    _
  // Predicated region
  $region10: #{_lambda_.28} parent=0 // pred_check
    _
  $region11: #{_lambda_.28} parent=0 // pred_check_branch
    %13 = sbr.rel (0) target = $region13
  $region12: #{_lambda_.28} parent=0 // pred_region
    _
  $region13: #{_lambda_.28} parent=0 // pred_fallthru
    _
  %p14 = scmp.eq.s32.totalorder 0, 0
  // Predicated region
  $region14: #{_lambda_.28} parent=0 // pred_check
    %p15 = pneg %p14
  $region15: #{_lambda_.28} parent=0 // pred_check_branch
    %17 = sbr.rel (%p15) target = $region17
  $region16: #{_lambda_.28} parent=0 // pred_region
    %18 = vst [vmem:[#allocation2] sm:$0xff] 0.0
    %19 = vst [vmem:[#allocation2 + $0x8] sm:$0xff] 0.0
    %20 = vst [vmem:[#allocation2 + $0x10] sm:$0xff] 0.0
    %21 = vst [vmem:[#allocation2 + $0x18] sm:$0xff] 0.0
    %22 = vst [vmem:[#allocation2 + $0x20] sm:$0xff] 0.0
    %23 = vst [vmem:[#allocation2 + $0x28] sm:$0xff] 0.0
    %24 = vst [vmem:[#allocation2 + $0x30] sm:$0xff] 0.0
    %25 = vst [vmem:[#allocation2 + $0x38] sm:$0xff] 0.0
    %26 = vst [vmem:[#allocation2 + $0x40] sm:$0xff] 0.0
    %27 = vst [vmem:[#allocation2 + $0x48] sm:$0xff] 0.0
    %28 = vst [vmem:[#allocation2 + $0x50] sm:$0xff] 0.0
    %29 = vst [vmem:[#allocation2 + $0x58] sm:$0xff] 0.0
    %30 = vst [vmem:[#allocation2 + $0x60] sm:$0xff] 0.0
    %31 = vst [vmem:[#allocation2 + $0x68] sm:$0xff] 0.0
    %32 = vst [vmem:[#allocation2 + $0x70] sm:$0xff] 0.0
    %33 = vst [vmem:[#allocation2 + $0x78] sm:$0xff] 0.0
    %34 = vst [vmem:[#allocation2 + $0x80] sm:$0xff] 0.0
    %35 = vst [vmem:[#allocation2 + $0x88] sm:$0xff] 0.0
    %36 = vst [vmem:[#allocation2 + $0x90] sm:$0xff] 0.0
    %37 = vst [vmem:[#allocation2 + $0x98] sm:$0xff] 0.0
    %38 = vst [vmem:[#allocation2 + $0xa0] sm:$0xff] 0.0
    %39 = vst [vmem:[#allocation2 + $0xa8] sm:$0xff] 0.0
    %40 = vst [vmem:[#allocation2 + $0xb0] sm:$0xff] 0.0
    %41 = vst [vmem:[#allocation2 + $0xb8] sm:$0xff] 0.0
    %42 = vst [vmem:[#allocation2 + $0xc0] sm:$0xff] 0.0
    %43 = vst [vmem:[#allocation2 + $0xc8] sm:$0xff] 0.0
    %44 = vst [vmem:[#allocation2 + $0xd0] sm:$0xff] 0.0
    %45 = vst [vmem:[#allocation2 + $0xd8] sm:$0xff] 0.0
    %46 = vst [vmem:[#allocation2 + $0xe0] sm:$0xff] 0.0
    %47 = vst [vmem:[#allocation2 + $0xe8] sm:$0xff] 0.0
    %48 = vst [vmem:[#allocation2 + $0xf0] sm:$0xff] 0.0
    %49 = vst [vmem:[#allocation2 + $0xf8] sm:$0xff] 0.0
  $region17: #{_lambda_.28} parent=0 // pred_fallthru
    _
  %v50 = vld [vmem:[%s0] sm:$0xf]
  %v51 = vld [vmem:[%s0 + $0x4] sm:$0xf]
  %v52 = vld [vmem:[%s0 + $0x8] sm:$0xf]
  %v53 = vld [vmem:[%s0 + $0xc] sm:$0xf]
  %v54 = vld [vmem:[%s0 + $0x10] sm:$0xf]
  %v55 = vld [vmem:[%s0 + $0x14] sm:$0xf]
  %v56 = vld [vmem:[%s0 + $0x18] sm:$0xf]
  %v57 = vld [vmem:[%s0 + $0x1c] sm:$0xf]
  %v58 = vld [vmem:[%s0 + $0x20] sm:$0xf]
  %v59 = vld [vmem:[%s0 + $0x24] sm:$0xf]
  %v60 = vld [vmem:[%s0 + $0x28] sm:$0xf]
  %v61 = vld [vmem:[%s0 + $0x2c] sm:$0xf]
  %v62 = vld [vmem:[%s0 + $0x30] sm:$0xf]
  %v63 = vld [vmem:[%s0 + $0x34] sm:$0xf]
  %v64 = vld [vmem:[%s0 + $0x38] sm:$0xf]
  %v65 = vld [vmem:[%s0 + $0x3c] sm:$0xf]
  %v66 = vld [vmem:[%s0 + $0x40] sm:$0xf]
  %v67 = vld [vmem:[%s0 + $0x44] sm:$0xf]
  %v68 = vld [vmem:[%s0 + $0x48] sm:$0xf]
  %v69 = vld [vmem:[%s0 + $0x4c] sm:$0xf]
  %v70 = vld [vmem:[%s0 + $0x50] sm:$0xf]
  %v71 = vld [vmem:[%s0 + $0x54] sm:$0xf]
  %v72 = vld [vmem:[%s0 + $0x58] sm:$0xf]
  %v73 = vld [vmem:[%s0 + $0x5c] sm:$0xf]
  %v74 = vld [vmem:[%s0 + $0x60] sm:$0xf]
  %v75 = vld [vmem:[%s0 + $0x64] sm:$0xf]
  %v76 = vld [vmem:[%s0 + $0x68] sm:$0xf]
  %v77 = vld [vmem:[%s0 + $0x6c] sm:$0xf]
  %v78 = vld [vmem:[%s0 + $0x70] sm:$0xf]
  %v79 = vld [vmem:[%s0 + $0x74] sm:$0xf]
  %v80 = vld [vmem:[%s0 + $0x78] sm:$0xf]
  %v81 = vld [vmem:[%s0 + $0x7c] sm:$0xf]
  %v82 = vld [vmem:[#allocation2] sm:$0xff]
  %v83 = vld [vmem:[#allocation2 + $0x8] sm:$0xff]
  %v84 = vld [vmem:[#allocation2 + $0x10] sm:$0xff]
  %v85 = vld [vmem:[#allocation2 + $0x18] sm:$0xff]
  %v86 = vld [vmem:[#allocation2 + $0x20] sm:$0xff]
  %v87 = vld [vmem:[#allocation2 + $0x28] sm:$0xff]
  %v88 = vld [vmem:[#allocation2 + $0x30] sm:$0xff]
  %v89 = vld [vmem:[#allocation2 + $0x38] sm:$0xff]
  %v90 = vld [vmem:[#allocation2 + $0x40] sm:$0xff]
  %v91 = vld [vmem:[#allocation2 + $0x48] sm:$0xff]
  %v92 = vld [vmem:[#allocation2 + $0x50] sm:$0xff]
  %v93 = vld [vmem:[#allocation2 + $0x58] sm:$0xff]
  %v94 = vld [vmem:[#allocation2 + $0x60] sm:$0xff]
  %v95 = vld [vmem:[#allocation2 + $0x68] sm:$0xff]
  %v96 = vld [vmem:[#allocation2 + $0x70] sm:$0xff]
  %v97 = vld [vmem:[#allocation2 + $0x78] sm:$0xff]
  %v98 = vld [vmem:[#allocation2 + $0x80] sm:$0xff]
  %v99 = vld [vmem:[#allocation2 + $0x88] sm:$0xff]
  %v100 = vld [vmem:[#allocation2 + $0x90] sm:$0xff]
  %v101 = vld [vmem:[#allocation2 + $0x98] sm:$0xff]
  %v102 = vld [vmem:[#allocation2 + $0xa0] sm:$0xff]
  %v103 = vld [vmem:[#allocation2 + $0xa8] sm:$0xff]
  %v104 = vld [vmem:[#allocation2 + $0xb0] sm:$0xff]
  %v105 = vld [vmem:[#allocation2 + $0xb8] sm:$0xff]
  %v106 = vld [vmem:[#allocation2 + $0xc0] sm:$0xff]
  %v107 = vld [vmem:[#allocation2 + $0xc8] sm:$0xff]
  %v108 = vld [vmem:[#allocation2 + $0xd0] sm:$0xff]
  %v109 = vld [vmem:[#allocation2 + $0xd8] sm:$0xff]
  %v110 = vld [vmem:[#allocation2 + $0xe0] sm:$0xff]
  %v111 = vld [vmem:[#allocation2 + $0xe8] sm:$0xff]
  %v112 = vld [vmem:[#allocation2 + $0xf0] sm:$0xff]
  %v113 = vld [vmem:[#allocation2 + $0xf8] sm:$0xff]
  %v114 = vld [vmem:[%s1] sm:$0xf]
  %v115 = vld [vmem:[%s1 + $0x4] sm:$0xf]
  %v116 = vld [vmem:[%s1 + $0x8] sm:$0xf]
  %v117 = vld [vmem:[%s1 + $0xc] sm:$0xf]
  %v118 = vld [vmem:[%s1 + $0x10] sm:$0xf]
  %v119 = vld [vmem:[%s1 + $0x14] sm:$0xf]
  %v120 = vld [vmem:[%s1 + $0x18] sm:$0xf]
  %v121 = vld [vmem:[%s1 + $0x1c] sm:$0xf]
  %v122 = vld [vmem:[%s1 + $0x20] sm:$0xf]
  %v123 = vld [vmem:[%s1 + $0x24] sm:$0xf]
  %v124 = vld [vmem:[%s1 + $0x28] sm:$0xf]
  %v125 = vld [vmem:[%s1 + $0x2c] sm:$0xf]
  %v126 = vld [vmem:[%s1 + $0x30] sm:$0xf]
  %v127 = vld [vmem:[%s1 + $0x34] sm:$0xf]
  %v128 = vld [vmem:[%s1 + $0x38] sm:$0xf]
  %v129 = vld [vmem:[%s1 + $0x3c] sm:$0xf]
  %v162 = vunpack.c.l.b16 %v50
  %v163 = vunpack.c.l.b16 %v51
  %v164 = vunpack.c.l.b16 %v52
  %v165 = vunpack.c.l.b16 %v53
  %v166 = vunpack.c.l.b16 %v54
  %v167 = vunpack.c.l.b16 %v55
  %v168 = vunpack.c.l.b16 %v56
  %v169 = vunpack.c.l.b16 %v57
  %v170 = vunpack.c.l.b16 %v58
  %v171 = vunpack.c.l.b16 %v59
  %v172 = vunpack.c.l.b16 %v60
  %v173 = vunpack.c.l.b16 %v61
  %v174 = vunpack.c.l.b16 %v62
  %v175 = vunpack.c.l.b16 %v63
  %v176 = vunpack.c.l.b16 %v64
  %v177 = vunpack.c.l.b16 %v65
  %v178 = vunpack.c.l.b16 %v66
  %v179 = vunpack.c.l.b16 %v67
  %v180 = vunpack.c.l.b16 %v68
  %v181 = vunpack.c.l.b16 %v69
  %v182 = vunpack.c.l.b16 %v70
  %v183 = vunpack.c.l.b16 %v71
  %v184 = vunpack.c.l.b16 %v72
  %v185 = vunpack.c.l.b16 %v73
  %v186 = vunpack.c.l.b16 %v74
  %v187 = vunpack.c.l.b16 %v75
  %v188 = vunpack.c.l.b16 %v76
  %v189 = vunpack.c.l.b16 %v77
  %v190 = vunpack.c.l.b16 %v78
  %v191 = vunpack.c.l.b16 %v79
  %v192 = vunpack.c.l.b16 %v80
  %v193 = vunpack.c.l.b16 %v81
  %v194 = vpack.c.b16 %v163, %v162
  %v195 = vpack.c.b16 %v165, %v164
  %v196 = vpack.c.b16 %v167, %v166
  %v197 = vpack.c.b16 %v169, %v168
  %v198 = vpack.c.b16 %v171, %v170
  %v199 = vpack.c.b16 %v173, %v172
  %v200 = vpack.c.b16 %v175, %v174
  %v201 = vpack.c.b16 %v177, %v176
  %v202 = vpack.c.b16 %v179, %v178
  %v203 = vpack.c.b16 %v181, %v180
  %v204 = vpack.c.b16 %v183, %v182
  %v205 = vpack.c.b16 %v185, %v184
  %v206 = vpack.c.b16 %v187, %v186
  %v207 = vpack.c.b16 %v189, %v188
  %v208 = vpack.c.b16 %v191, %v190
  %v209 = vpack.c.b16 %v193, %v192
  %v242 = vunpack.c.l.b16 %v114
  %v243 = vunpack.c.l.b16 %v115
  %v244 = vunpack.c.l.b16 %v116
  %v245 = vunpack.c.l.b16 %v117
  %v246 = vunpack.c.l.b16 %v118
  %v247 = vunpack.c.l.b16 %v119
  %v248 = vunpack.c.l.b16 %v120
  %v249 = vunpack.c.l.b16 %v121
  %v250 = vunpack.c.l.b16 %v122
  %v251 = vunpack.c.l.b16 %v123
  %v252 = vunpack.c.l.b16 %v124
  %v253 = vunpack.c.l.b16 %v125
  %v254 = vunpack.c.l.b16 %v126
  %v255 = vunpack.c.l.b16 %v127
  %v256 = vunpack.c.l.b16 %v128
  %v257 = vunpack.c.l.b16 %v129
  %v258 = vpack.c.b16 %v243, %v242
  %v259 = vpack.c.b16 %v245, %v244
  %v260 = vpack.c.b16 %v247, %v246
  %v261 = vpack.c.b16 %v249, %v248
  %v262 = vpack.c.b16 %v251, %v250
  %v263 = vpack.c.b16 %v253, %v252
  %v264 = vpack.c.b16 %v255, %v254
  %v265 = vpack.c.b16 %v257, %v256
  %274 = vmatpush.bf16.msra.mxu0 %v265
  %275 = vmatpush.bf16.msra.mxu0 %v264
  %276 = vmatpush.bf16.msra.mxu0 %v263
  %277 = vmatpush.bf16.msra.mxu0 %v262
  %278 = vmatpush.bf16.msra.mxu0 %v261
  %279 = vmatpush.bf16.msra.mxu0 %v260
  %280 = vmatpush.bf16.msra.mxu0 %v259
  %281 = vmatpush.bf16.msra.mxu0 %v258
  %282 = vmatmul.bf16.gmra.mxu0 %v194
  %v283 = vpop.f32.mrf.mxu0
  %v284 = vadd.f32 0.0, %v283
  %v285 = vpop.f32.mrf.mxu0
  %v286 = vadd.f32 0.0, %v285
  %287 = vmatmul.bf16.gmra.mxu0 %v195
  %v288 = vpop.f32.mrf.mxu0
  %v289 = vadd.f32 0.0, %v288
  %v290 = vpop.f32.mrf.mxu0
  %v291 = vadd.f32 0.0, %v290
  %292 = vmatmul.bf16.gmra.mxu0 %v196
  %v293 = vpop.f32.mrf.mxu0
  %v294 = vadd.f32 0.0, %v293
  %v295 = vpop.f32.mrf.mxu0
  %v296 = vadd.f32 0.0, %v295
  %297 = vmatmul.bf16.gmra.mxu0 %v197
  %v298 = vpop.f32.mrf.mxu0
  %v299 = vadd.f32 0.0, %v298
  %v300 = vpop.f32.mrf.mxu0
  %v301 = vadd.f32 0.0, %v300
  %302 = vmatmul.bf16.gmra.mxu0 %v198
  %v303 = vpop.f32.mrf.mxu0
  %v304 = vadd.f32 0.0, %v303
  %v305 = vpop.f32.mrf.mxu0
  %v306 = vadd.f32 0.0, %v305
  %307 = vmatmul.bf16.gmra.mxu0 %v199
  %v308 = vpop.f32.mrf.mxu0
  %v309 = vadd.f32 0.0, %v308
  %v310 = vpop.f32.mrf.mxu0
  %v311 = vadd.f32 0.0, %v310
  %312 = vmatmul.bf16.gmra.mxu0 %v200
  %v313 = vpop.f32.mrf.mxu0
  %v314 = vadd.f32 0.0, %v313
  %v315 = vpop.f32.mrf.mxu0
  %v316 = vadd.f32 0.0, %v315
  %317 = vmatmul.bf16.gmra.mxu0 %v201
  %v318 = vpop.f32.mrf.mxu0
  %v319 = vadd.f32 0.0, %v318
  %v320 = vpop.f32.mrf.mxu0
  %v321 = vadd.f32 0.0, %v320
  %322 = vmatmul.bf16.gmra.mxu0 %v202
  %v323 = vpop.f32.mrf.mxu0
  %v324 = vadd.f32 0.0, %v323
  %v325 = vpop.f32.mrf.mxu0
  %v326 = vadd.f32 0.0, %v325
  %327 = vmatmul.bf16.gmra.mxu0 %v203
  %v328 = vpop.f32.mrf.mxu0
  %v329 = vadd.f32 0.0, %v328
  %v330 = vpop.f32.mrf.mxu0
  %v331 = vadd.f32 0.0, %v330
  %332 = vmatmul.bf16.gmra.mxu0 %v204
  %v333 = vpop.f32.mrf.mxu0
  %v334 = vadd.f32 0.0, %v333
  %v335 = vpop.f32.mrf.mxu0
  %v336 = vadd.f32 0.0, %v335
  %337 = vmatmul.bf16.gmra.mxu0 %v205
  %v338 = vpop.f32.mrf.mxu0
  %v339 = vadd.f32 0.0, %v338
  %v340 = vpop.f32.mrf.mxu0
  %v341 = vadd.f32 0.0, %v340
  %342 = vmatmul.bf16.gmra.mxu0 %v206
  %v343 = vpop.f32.mrf.mxu0
  %v344 = vadd.f32 0.0, %v343
  %v345 = vpop.f32.mrf.mxu0
  %v346 = vadd.f32 0.0, %v345
  %347 = vmatmul.bf16.gmra.mxu0 %v207
  %v348 = vpop.f32.mrf.mxu0
  %v349 = vadd.f32 0.0, %v348
  %v350 = vpop.f32.mrf.mxu0
  %v351 = vadd.f32 0.0, %v350
  %352 = vmatmul.bf16.gmra.mxu0 %v208
  %v353 = vpop.f32.mrf.mxu0
  %v354 = vadd.f32 0.0, %v353
  %v355 = vpop.f32.mrf.mxu0
  %v356 = vadd.f32 0.0, %v355
  %357 = vmatmul.bf16.gmra.mxu0 %v209
  %v358 = vpop.f32.mrf.mxu0
  %v359 = vadd.f32 0.0, %v358
  %v360 = vpop.f32.mrf.mxu0
  %v361 = vadd.f32 0.0, %v360
  %362 = vdwg.mxu0
  %v363 = vadd.f32 %v82, %v284
  %v364 = vadd.f32 %v83, %v286
  %v365 = vadd.f32 %v84, %v289
  %v366 = vadd.f32 %v85, %v291
  %v367 = vadd.f32 %v86, %v294
  %v368 = vadd.f32 %v87, %v296
  %v369 = vadd.f32 %v88, %v299
  %v370 = vadd.f32 %v89, %v301
  %v371 = vadd.f32 %v90, %v304
  %v372 = vadd.f32 %v91, %v306
  %v373 = vadd.f32 %v92, %v309
  %v374 = vadd.f32 %v93, %v311
  %v375 = vadd.f32 %v94, %v314
  %v376 = vadd.f32 %v95, %v316
  %v377 = vadd.f32 %v96, %v319
  %v378 = vadd.f32 %v97, %v321
  %v379 = vadd.f32 %v98, %v324
  %v380 = vadd.f32 %v99, %v326
  %v381 = vadd.f32 %v100, %v329
  %v382 = vadd.f32 %v101, %v331
  %v383 = vadd.f32 %v102, %v334
  %v384 = vadd.f32 %v103, %v336
  %v385 = vadd.f32 %v104, %v339
  %v386 = vadd.f32 %v105, %v341
  %v387 = vadd.f32 %v106, %v344
  %v388 = vadd.f32 %v107, %v346
  %v389 = vadd.f32 %v108, %v349
  %v390 = vadd.f32 %v109, %v351
  %v391 = vadd.f32 %v110, %v354
  %v392 = vadd.f32 %v111, %v356
  %v393 = vadd.f32 %v112, %v359
  %v394 = vadd.f32 %v113, %v361
  %395 = vst [vmem:[#allocation2] sm:$0xff] %v363
  %396 = vst [vmem:[#allocation2 + $0x8] sm:$0xff] %v364
  %397 = vst [vmem:[#allocation2 + $0x10] sm:$0xff] %v365
  %398 = vst [vmem:[#allocation2 + $0x18] sm:$0xff] %v366
  %399 = vst [vmem:[#allocation2 + $0x20] sm:$0xff] %v367
  %400 = vst [vmem:[#allocation2 + $0x28] sm:$0xff] %v368
  %401 = vst [vmem:[#allocation2 + $0x30] sm:$0xff] %v369
  %402 = vst [vmem:[#allocation2 + $0x38] sm:$0xff] %v370
  %403 = vst [vmem:[#allocation2 + $0x40] sm:$0xff] %v371
  %404 = vst [vmem:[#allocation2 + $0x48] sm:$0xff] %v372
  %405 = vst [vmem:[#allocation2 + $0x50] sm:$0xff] %v373
  %406 = vst [vmem:[#allocation2 + $0x58] sm:$0xff] %v374
  %407 = vst [vmem:[#allocation2 + $0x60] sm:$0xff] %v375
  %408 = vst [vmem:[#allocation2 + $0x68] sm:$0xff] %v376
  %409 = vst [vmem:[#allocation2 + $0x70] sm:$0xff] %v377
  %410 = vst [vmem:[#allocation2 + $0x78] sm:$0xff] %v378
  %411 = vst [vmem:[#allocation2 + $0x80] sm:$0xff] %v379
  %412 = vst [vmem:[#allocation2 + $0x88] sm:$0xff] %v380
  %413 = vst [vmem:[#allocation2 + $0x90] sm:$0xff] %v381
  %414 = vst [vmem:[#allocation2 + $0x98] sm:$0xff] %v382
  %415 = vst [vmem:[#allocation2 + $0xa0] sm:$0xff] %v383
  %416 = vst [vmem:[#allocation2 + $0xa8] sm:$0xff] %v384
  %417 = vst [vmem:[#allocation2 + $0xb0] sm:$0xff] %v385
  %418 = vst [vmem:[#allocation2 + $0xb8] sm:$0xff] %v386
  %419 = vst [vmem:[#allocation2 + $0xc0] sm:$0xff] %v387
  %420 = vst [vmem:[#allocation2 + $0xc8] sm:$0xff] %v388
  %421 = vst [vmem:[#allocation2 + $0xd0] sm:$0xff] %v389
  %422 = vst [vmem:[#allocation2 + $0xd8] sm:$0xff] %v390
  %423 = vst [vmem:[#allocation2 + $0xe0] sm:$0xff] %v391
  %424 = vst [vmem:[#allocation2 + $0xe8] sm:$0xff] %v392
  %425 = vst [vmem:[#allocation2 + $0xf0] sm:$0xff] %v393
  %426 = vst [vmem:[#allocation2 + $0xf8] sm:$0xff] %v394
  // Predicated region
  $region18: #{_lambda_.28} parent=0 // pred_check
    %p427 = pneg %p14
  $region19: #{_lambda_.28} parent=0 // pred_check_branch
    %429 = sbr.rel (%p427) target = $region21
  $region20: #{_lambda_.28} parent=0 // pred_region
    %v430 = vld [vmem:[#allocation2] sm:$0xff]
    %v431 = vld [vmem:[#allocation2 + $0x8] sm:$0xff]
    %v432 = vld [vmem:[#allocation2 + $0x10] sm:$0xff]
    %v433 = vld [vmem:[#allocation2 + $0x18] sm:$0xff]
    %v434 = vld [vmem:[#allocation2 + $0x20] sm:$0xff]
    %v435 = vld [vmem:[#allocation2 + $0x28] sm:$0xff]
    %v436 = vld [vmem:[#allocation2 + $0x30] sm:$0xff]
    %v437 = vld [vmem:[#allocation2 + $0x38] sm:$0xff]
    %v438 = vld [vmem:[#allocation2 + $0x40] sm:$0xff]
    %v439 = vld [vmem:[#allocation2 + $0x48] sm:$0xff]
    %v440 = vld [vmem:[#allocation2 + $0x50] sm:$0xff]
    %v441 = vld [vmem:[#allocation2 + $0x58] sm:$0xff]
    %v442 = vld [vmem:[#allocation2 + $0x60] sm:$0xff]
    %v443 = vld [vmem:[#allocation2 + $0x68] sm:$0xff]
    %v444 = vld [vmem:[#allocation2 + $0x70] sm:$0xff]
    %v445 = vld [vmem:[#allocation2 + $0x78] sm:$0xff]
    %v446 = vld [vmem:[#allocation2 + $0x80] sm:$0xff]
    %v447 = vld [vmem:[#allocation2 + $0x88] sm:$0xff]
    %v448 = vld [vmem:[#allocation2 + $0x90] sm:$0xff]
    %v449 = vld [vmem:[#allocation2 + $0x98] sm:$0xff]
    %v450 = vld [vmem:[#allocation2 + $0xa0] sm:$0xff]
    %v451 = vld [vmem:[#allocation2 + $0xa8] sm:$0xff]
    %v452 = vld [vmem:[#allocation2 + $0xb0] sm:$0xff]
    %v453 = vld [vmem:[#allocation2 + $0xb8] sm:$0xff]
    %v454 = vld [vmem:[#allocation2 + $0xc0] sm:$0xff]
    %v455 = vld [vmem:[#allocation2 + $0xc8] sm:$0xff]
    %v456 = vld [vmem:[#allocation2 + $0xd0] sm:$0xff]
    %v457 = vld [vmem:[#allocation2 + $0xd8] sm:$0xff]
    %v458 = vld [vmem:[#allocation2 + $0xe0] sm:$0xff]
    %v459 = vld [vmem:[#allocation2 + $0xe8] sm:$0xff]
    %v460 = vld [vmem:[#allocation2 + $0xf0] sm:$0xff]
    %v461 = vld [vmem:[#allocation2 + $0xf8] sm:$0xff]
    %v462 = vld [vmem:[%s2] sm:$0x1]
    %v464 = vperm.slane %v462, 0
    %v466 = vadd.f32 %v430, %v464
    %v467 = vadd.f32 %v431, %v464
    %v468 = vadd.f32 %v432, %v464
    %v469 = vadd.f32 %v433, %v464
    %v470 = vadd.f32 %v434, %v464
    %v471 = vadd.f32 %v435, %v464
    %v472 = vadd.f32 %v436, %v464
    %v473 = vadd.f32 %v437, %v464
    %v474 = vadd.f32 %v438, %v464
    %v475 = vadd.f32 %v439, %v464
    %v476 = vadd.f32 %v440, %v464
    %v477 = vadd.f32 %v441, %v464
    %v478 = vadd.f32 %v442, %v464
    %v479 = vadd.f32 %v443, %v464
    %v480 = vadd.f32 %v444, %v464
    %v481 = vadd.f32 %v445, %v464
    %v482 = vadd.f32 %v446, %v464
    %v483 = vadd.f32 %v447, %v464
    %v484 = vadd.f32 %v448, %v464
    %v485 = vadd.f32 %v449, %v464
    %v486 = vadd.f32 %v450, %v464
    %v487 = vadd.f32 %v451, %v464
    %v488 = vadd.f32 %v452, %v464
    %v489 = vadd.f32 %v453, %v464
    %v490 = vadd.f32 %v454, %v464
    %v491 = vadd.f32 %v455, %v464
    %v492 = vadd.f32 %v456, %v464
    %v493 = vadd.f32 %v457, %v464
    %v494 = vadd.f32 %v458, %v464
    %v495 = vadd.f32 %v459, %v464
    %v496 = vadd.f32 %v460, %v464
    %v497 = vadd.f32 %v461, %v464
    %498 = vst [vmem:[%s3] sm:$0xff] %v466
    %499 = vst [vmem:[%s3 + $0x8] sm:$0xff] %v467
    %500 = vst [vmem:[%s3 + $0x10] sm:$0xff] %v468
    %501 = vst [vmem:[%s3 + $0x18] sm:$0xff] %v469
    %502 = vst [vmem:[%s3 + $0x20] sm:$0xff] %v470
    %503 = vst [vmem:[%s3 + $0x28] sm:$0xff] %v471
    %504 = vst [vmem:[%s3 + $0x30] sm:$0xff] %v472
    %505 = vst [vmem:[%s3 + $0x38] sm:$0xff] %v473
    %506 = vst [vmem:[%s3 + $0x40] sm:$0xff] %v474
    %507 = vst [vmem:[%s3 + $0x48] sm:$0xff] %v475
    %508 = vst [vmem:[%s3 + $0x50] sm:$0xff] %v476
    %509 = vst [vmem:[%s3 + $0x58] sm:$0xff] %v477
    %510 = vst [vmem:[%s3 + $0x60] sm:$0xff] %v478
    %511 = vst [vmem:[%s3 + $0x68] sm:$0xff] %v479
    %512 = vst [vmem:[%s3 + $0x70] sm:$0xff] %v480
    %513 = vst [vmem:[%s3 + $0x78] sm:$0xff] %v481
    %514 = vst [vmem:[%s3 + $0x80] sm:$0xff] %v482
    %515 = vst [vmem:[%s3 + $0x88] sm:$0xff] %v483
    %516 = vst [vmem:[%s3 + $0x90] sm:$0xff] %v484
    %517 = vst [vmem:[%s3 + $0x98] sm:$0xff] %v485
    %518 = vst [vmem:[%s3 + $0xa0] sm:$0xff] %v486
    %519 = vst [vmem:[%s3 + $0xa8] sm:$0xff] %v487
    %520 = vst [vmem:[%s3 + $0xb0] sm:$0xff] %v488
    %521 = vst [vmem:[%s3 + $0xb8] sm:$0xff] %v489
    %522 = vst [vmem:[%s3 + $0xc0] sm:$0xff] %v490
    %523 = vst [vmem:[%s3 + $0xc8] sm:$0xff] %v491
    %524 = vst [vmem:[%s3 + $0xd0] sm:$0xff] %v492
    %525 = vst [vmem:[%s3 + $0xd8] sm:$0xff] %v493
    %526 = vst [vmem:[%s3 + $0xe0] sm:$0xff] %v494
    %527 = vst [vmem:[%s3 + $0xe8] sm:$0xff] %v495
    %528 = vst [vmem:[%s3 + $0xf0] sm:$0xff] %v496
    %529 = vst [vmem:[%s3 + $0xf8] sm:$0xff] %v497
  $region21: #{_lambda_.28} parent=0 // pred_fallthru
    _
  // Predicated region
  $region22: #{_lambda_.28} parent=0 // pred_check
    _
  $region23: #{_lambda_.28} parent=0 // pred_check_branch
    %531 = sbr.rel (0) target = $region25
  $region24: #{_lambda_.28} parent=0 // pred_region
    _
  $region25: #{_lambda_.28} parent=0 // pred_fallthru
    _
  // Predicated region
  $region26: #{_lambda_.28} parent=0 // pred_check
    _
  $region27: #{_lambda_.28} parent=0 // pred_check_branch
    %533 = sbr.rel (0) target = $region29
  $region28: #{_lambda_.28} parent=0 // pred_region
    _
  $region29: #{_lambda_.28} parent=0 // pred_fallthru
    _

// kernel: _lambda_.29
$region0: #{_lambda_.29}
  #allocation0 [shape = 'u32[]', space=smem, size = 0x4, offset = 0x4, fixed_abs, tag = 'smem constant byte address 0x4 - core index']
  #allocation1 [shape = 'u32[72,128]{1,0:T(1,128)}', space=vmem, size = 0x9000, scoped, tag = 'internal scratch']
  #allocation2 [shape = 'f32[256,128]{1,0:T(8,128)}', space=vmem, size = 0x20000, scoped, tag = 'scratch operand']
  %s0 = inlined_call_operand.vmem [shape: bf16[256,128], index: 0, kind: input, shape index: {}]
  %s1 = inlined_call_operand.vmem [shape: bf16[128,128], index: 1, kind: input, shape index: {}]
  %s2 = inlined_call_operand.vmem [shape: f32[1,128], index: 2, kind: input, shape index: {}]
  %s3 = inlined_call_operand.vmem [shape: f32[256,128], index: 3, kind: input, shape index: {}]
  %s4 = inlined_call_operand.vmem [shape: f32[256,128], index: 4, kind: output, shape index: {}]
  %s5 = sld [smem:[#allocation0]]
  $region34: #{_lambda_.29} parent=0
    _
  %s7 = ssub.s32 1, %s5
  %s8 = scalar_select 0, %s7, %s5
  // Predicated region
  $region2: #{_lambda_.29} parent=0 // pred_check
    _
  $region3: #{_lambda_.29} parent=0 // pred_check_branch
    %10 = sbr.rel (0) target = $region5
  $region4: #{_lambda_.29} parent=0 // pred_region
    _
  $region5: #{_lambda_.29} parent=0 // pred_fallthru
    _
  // Predicated region
  $region6: #{_lambda_.29} parent=0 // pred_check
    _
  $region7: #{_lambda_.29} parent=0 // pred_check_branch
    %12 = sbr.rel (0) target = $region9
  $region8: #{_lambda_.29} parent=0 // pred_region
    _
  $region9: #{_lambda_.29} parent=0 // pred_fallthru
    _
  // Predicated region
  $region10: #{_lambda_.29} parent=0 // pred_check
    _
  $region11: #{_lambda_.29} parent=0 // pred_check_branch
    %14 = sbr.rel (0) target = $region13
  $region12: #{_lambda_.29} parent=0 // pred_region
    _
  $region13: #{_lambda_.29} parent=0 // pred_fallthru
    _
  // Predicated region
  $region14: #{_lambda_.29} parent=0 // pred_check
    _
  $region15: #{_lambda_.29} parent=0 // pred_check_branch
    %16 = sbr.rel (0) target = $region17
  $region16: #{_lambda_.29} parent=0 // pred_region
    _
  $region17: #{_lambda_.29} parent=0 // pred_fallthru
    _
  %p17 = scmp.eq.s32.totalorder 0, 0
  // Predicated region
  $region18: #{_lambda_.29} parent=0 // pred_check
    %p18 = pneg %p17
  $region19: #{_lambda_.29} parent=0 // pred_check_branch
    %20 = sbr.rel (%p18) target = $region21
  $region20: #{_lambda_.29} parent=0 // pred_region
    %21 = vst [vmem:[#allocation2] sm:$0xff] 0.0
    %22 = vst [vmem:[#allocation2 + $0x8] sm:$0xff] 0.0
    %23 = vst [vmem:[#allocation2 + $0x10] sm:$0xff] 0.0
    %24 = vst [vmem:[#allocation2 + $0x18] sm:$0xff] 0.0
    %25 = vst [vmem:[#allocation2 + $0x20] sm:$0xff] 0.0
    %26 = vst [vmem:[#allocation2 + $0x28] sm:$0xff] 0.0
    %27 = vst [vmem:[#allocation2 + $0x30] sm:$0xff] 0.0
    %28 = vst [vmem:[#allocation2 + $0x38] sm:$0xff] 0.0
    %29 = vst [vmem:[#allocation2 + $0x40] sm:$0xff] 0.0
    %30 = vst [vmem:[#allocation2 + $0x48] sm:$0xff] 0.0
    %31 = vst [vmem:[#allocation2 + $0x50] sm:$0xff] 0.0
    %32 = vst [vmem:[#allocation2 + $0x58] sm:$0xff] 0.0
    %33 = vst [vmem:[#allocation2 + $0x60] sm:$0xff] 0.0
    %34 = vst [vmem:[#allocation2 + $0x68] sm:$0xff] 0.0
    %35 = vst [vmem:[#allocation2 + $0x70] sm:$0xff] 0.0
    %36 = vst [vmem:[#allocation2 + $0x78] sm:$0xff] 0.0
    %37 = vst [vmem:[#allocation2 + $0x80] sm:$0xff] 0.0
    %38 = vst [vmem:[#allocation2 + $0x88] sm:$0xff] 0.0
    %39 = vst [vmem:[#allocation2 + $0x90] sm:$0xff] 0.0
    %40 = vst [vmem:[#allocation2 + $0x98] sm:$0xff] 0.0
    %41 = vst [vmem:[#allocation2 + $0xa0] sm:$0xff] 0.0
    %42 = vst [vmem:[#allocation2 + $0xa8] sm:$0xff] 0.0
    %43 = vst [vmem:[#allocation2 + $0xb0] sm:$0xff] 0.0
    %44 = vst [vmem:[#allocation2 + $0xb8] sm:$0xff] 0.0
    %45 = vst [vmem:[#allocation2 + $0xc0] sm:$0xff] 0.0
    %46 = vst [vmem:[#allocation2 + $0xc8] sm:$0xff] 0.0
    %47 = vst [vmem:[#allocation2 + $0xd0] sm:$0xff] 0.0
    %48 = vst [vmem:[#allocation2 + $0xd8] sm:$0xff] 0.0
    %49 = vst [vmem:[#allocation2 + $0xe0] sm:$0xff] 0.0
    %50 = vst [vmem:[#allocation2 + $0xe8] sm:$0xff] 0.0
    %51 = vst [vmem:[#allocation2 + $0xf0] sm:$0xff] 0.0
    %52 = vst [vmem:[#allocation2 + $0xf8] sm:$0xff] 0.0
  $region21: #{_lambda_.29} parent=0 // pred_fallthru
    _
  %v53 = vld [vmem:[%s0] sm:$0xf]
  %v54 = vld [vmem:[%s0 + $0x4] sm:$0xf]
  %v55 = vld [vmem:[%s0 + $0x8] sm:$0xf]
  %v56 = vld [vmem:[%s0 + $0xc] sm:$0xf]
  %v57 = vld [vmem:[%s0 + $0x10] sm:$0xf]
  %v58 = vld [vmem:[%s0 + $0x14] sm:$0xf]
  %v59 = vld [vmem:[%s0 + $0x18] sm:$0xf]
  %v60 = vld [vmem:[%s0 + $0x1c] sm:$0xf]
  %v61 = vld [vmem:[%s0 + $0x20] sm:$0xf]
  %v62 = vld [vmem:[%s0 + $0x24] sm:$0xf]
  %v63 = vld [vmem:[%s0 + $0x28] sm:$0xf]
  %v64 = vld [vmem:[%s0 + $0x2c] sm:$0xf]
  %v65 = vld [vmem:[%s0 + $0x30] sm:$0xf]
  %v66 = vld [vmem:[%s0 + $0x34] sm:$0xf]
  %v67 = vld [vmem:[%s0 + $0x38] sm:$0xf]
  %v68 = vld [vmem:[%s0 + $0x3c] sm:$0xf]
  %v69 = vld [vmem:[%s0 + $0x40] sm:$0xf]
  %v70 = vld [vmem:[%s0 + $0x44] sm:$0xf]
  %v71 = vld [vmem:[%s0 + $0x48] sm:$0xf]
  %v72 = vld [vmem:[%s0 + $0x4c] sm:$0xf]
  %v73 = vld [vmem:[%s0 + $0x50] sm:$0xf]
  %v74 = vld [vmem:[%s0 + $0x54] sm:$0xf]
  %v75 = vld [vmem:[%s0 + $0x58] sm:$0xf]
  %v76 = vld [vmem:[%s0 + $0x5c] sm:$0xf]
  %v77 = vld [vmem:[%s0 + $0x60] sm:$0xf]
  %v78 = vld [vmem:[%s0 + $0x64] sm:$0xf]
  %v79 = vld [vmem:[%s0 + $0x68] sm:$0xf]
  %v80 = vld [vmem:[%s0 + $0x6c] sm:$0xf]
  %v81 = vld [vmem:[%s0 + $0x70] sm:$0xf]
  %v82 = vld [vmem:[%s0 + $0x74] sm:$0xf]
  %v83 = vld [vmem:[%s0 + $0x78] sm:$0xf]
  %v84 = vld [vmem:[%s0 + $0x7c] sm:$0xf]
  %v85 = vunpack.c.l.bf16 %v53
  %v86 = vunpack.c.l.bf16 %v54
  %v87 = vunpack.c.l.bf16 %v55
  %v88 = vunpack.c.l.bf16 %v56
  %v89 = vunpack.c.l.bf16 %v57
  %v90 = vunpack.c.l.bf16 %v58
  %v91 = vunpack.c.l.bf16 %v59
  %v92 = vunpack.c.l.bf16 %v60
  %v93 = vunpack.c.l.bf16 %v61
  %v94 = vunpack.c.l.bf16 %v62
  %v95 = vunpack.c.l.bf16 %v63
  %v96 = vunpack.c.l.bf16 %v64
  %v97 = vunpack.c.l.bf16 %v65
  %v98 = vunpack.c.l.bf16 %v66
  %v99 = vunpack.c.l.bf16 %v67
  %v100 = vunpack.c.l.bf16 %v68
  %v101 = vunpack.c.l.bf16 %v69
  %v102 = vunpack.c.l.bf16 %v70
  %v103 = vunpack.c.l.bf16 %v71
  %v104 = vunpack.c.l.bf16 %v72
  %v105 = vunpack.c.l.bf16 %v73
  %v106 = vunpack.c.l.bf16 %v74
  %v107 = vunpack.c.l.bf16 %v75
  %v108 = vunpack.c.l.bf16 %v76
  %v109 = vunpack.c.l.bf16 %v77
  %v110 = vunpack.c.l.bf16 %v78
  %v111 = vunpack.c.l.bf16 %v79
  %v112 = vunpack.c.l.bf16 %v80
  %v113 = vunpack.c.l.bf16 %v81
  %v114 = vunpack.c.l.bf16 %v82
  %v115 = vunpack.c.l.bf16 %v83
  %v116 = vunpack.c.l.bf16 %v84
  %vm117 = vcmp.ge.f32.partialorder %v85, 0.0
  %vm118 = vcmp.ge.f32.partialorder %v86, 0.0
  %vm119 = vcmp.ge.f32.partialorder %v87, 0.0
  %vm120 = vcmp.ge.f32.partialorder %v88, 0.0
  %vm121 = vcmp.ge.f32.partialorder %v89, 0.0
  %vm122 = vcmp.ge.f32.partialorder %v90, 0.0
  %vm123 = vcmp.ge.f32.partialorder %v91, 0.0
  %vm124 = vcmp.ge.f32.partialorder %v92, 0.0
  %vm125 = vcmp.ge.f32.partialorder %v93, 0.0
  %vm126 = vcmp.ge.f32.partialorder %v94, 0.0
  %vm127 = vcmp.ge.f32.partialorder %v95, 0.0
  %vm128 = vcmp.ge.f32.partialorder %v96, 0.0
  %vm129 = vcmp.ge.f32.partialorder %v97, 0.0
  %vm130 = vcmp.ge.f32.partialorder %v98, 0.0
  %vm131 = vcmp.ge.f32.partialorder %v99, 0.0
  %vm132 = vcmp.ge.f32.partialorder %v100, 0.0
  %vm133 = vcmp.ge.f32.partialorder %v101, 0.0
  %vm134 = vcmp.ge.f32.partialorder %v102, 0.0
  %vm135 = vcmp.ge.f32.partialorder %v103, 0.0
  %vm136 = vcmp.ge.f32.partialorder %v104, 0.0
  %vm137 = vcmp.ge.f32.partialorder %v105, 0.0
  %vm138 = vcmp.ge.f32.partialorder %v106, 0.0
  %vm139 = vcmp.ge.f32.partialorder %v107, 0.0
  %vm140 = vcmp.ge.f32.partialorder %v108, 0.0
  %vm141 = vcmp.ge.f32.partialorder %v109, 0.0
  %vm142 = vcmp.ge.f32.partialorder %v110, 0.0
  %vm143 = vcmp.ge.f32.partialorder %v111, 0.0
  %vm144 = vcmp.ge.f32.partialorder %v112, 0.0
  %vm145 = vcmp.ge.f32.partialorder %v113, 0.0
  %vm146 = vcmp.ge.f32.partialorder %v114, 0.0
  %vm147 = vcmp.ge.f32.partialorder %v115, 0.0
  %vm148 = vcmp.ge.f32.partialorder %v116, 0.0
  %v149 = vmul.f32 %v85, 0.010009766
  %v150 = vmul.f32 %v86, 0.010009766
  %v151 = vmul.f32 %v87, 0.010009766
  %v152 = vmul.f32 %v88, 0.010009766
  %v153 = vmul.f32 %v89, 0.010009766
  %v154 = vmul.f32 %v90, 0.010009766
  %v155 = vmul.f32 %v91, 0.010009766
  %v156 = vmul.f32 %v92, 0.010009766
  %v157 = vmul.f32 %v93, 0.010009766
  %v158 = vmul.f32 %v94, 0.010009766
  %v159 = vmul.f32 %v95, 0.010009766
  %v160 = vmul.f32 %v96, 0.010009766
  %v161 = vmul.f32 %v97, 0.010009766
  %v162 = vmul.f32 %v98, 0.010009766
  %v163 = vmul.f32 %v99, 0.010009766
  %v164 = vmul.f32 %v100, 0.010009766
  %v165 = vmul.f32 %v101, 0.010009766
  %v166 = vmul.f32 %v102, 0.010009766
  %v167 = vmul.f32 %v103, 0.010009766
  %v168 = vmul.f32 %v104, 0.010009766
  %v169 = vmul.f32 %v105, 0.010009766
  %v170 = vmul.f32 %v106, 0.010009766
  %v171 = vmul.f32 %v107, 0.010009766
  %v172 = vmul.f32 %v108, 0.010009766
  %v173 = vmul.f32 %v109, 0.010009766
  %v174 = vmul.f32 %v110, 0.010009766
  %v175 = vmul.f32 %v111, 0.010009766
  %v176 = vmul.f32 %v112, 0.010009766
  %v177 = vmul.f32 %v113, 0.010009766
  %v178 = vmul.f32 %v114, 0.010009766
  %v179 = vmul.f32 %v115, 0.010009766
  %v180 = vmul.f32 %v116, 0.010009766
  %v181 = vpack.c.bf16 %v149, %v149
  %v182 = vpack.c.bf16 %v150, %v150
  %v183 = vpack.c.bf16 %v151, %v151
  %v184 = vpack.c.bf16 %v152, %v152
  %v185 = vpack.c.bf16 %v153, %v153
  %v186 = vpack.c.bf16 %v154, %v154
  %v187 = vpack.c.bf16 %v155, %v155
  %v188 = vpack.c.bf16 %v156, %v156
  %v189 = vpack.c.bf16 %v157, %v157
  %v190 = vpack.c.bf16 %v158, %v158
  %v191 = vpack.c.bf16 %v159, %v159
  %v192 = vpack.c.bf16 %v160, %v160
  %v193 = vpack.c.bf16 %v161, %v161
  %v194 = vpack.c.bf16 %v162, %v162
  %v195 = vpack.c.bf16 %v163, %v163
  %v196 = vpack.c.bf16 %v164, %v164
  %v197 = vpack.c.bf16 %v165, %v165
  %v198 = vpack.c.bf16 %v166, %v166
  %v199 = vpack.c.bf16 %v167, %v167
  %v200 = vpack.c.bf16 %v168, %v168
  %v201 = vpack.c.bf16 %v169, %v169
  %v202 = vpack.c.bf16 %v170, %v170
  %v203 = vpack.c.bf16 %v171, %v171
  %v204 = vpack.c.bf16 %v172, %v172
  %v205 = vpack.c.bf16 %v173, %v173
  %v206 = vpack.c.bf16 %v174, %v174
  %v207 = vpack.c.bf16 %v175, %v175
  %v208 = vpack.c.bf16 %v176, %v176
  %v209 = vpack.c.bf16 %v177, %v177
  %v210 = vpack.c.bf16 %v178, %v178
  %v211 = vpack.c.bf16 %v179, %v179
  %v212 = vpack.c.bf16 %v180, %v180
  %vm213 = vmpackc.low %vm117, %vm117
  %vm214 = vmpackc.low %vm118, %vm118
  %vm215 = vmpackc.low %vm119, %vm119
  %vm216 = vmpackc.low %vm120, %vm120
  %vm217 = vmpackc.low %vm121, %vm121
  %vm218 = vmpackc.low %vm122, %vm122
  %vm219 = vmpackc.low %vm123, %vm123
  %vm220 = vmpackc.low %vm124, %vm124
  %vm221 = vmpackc.low %vm125, %vm125
  %vm222 = vmpackc.low %vm126, %vm126
  %vm223 = vmpackc.low %vm127, %vm127
  %vm224 = vmpackc.low %vm128, %vm128
  %vm225 = vmpackc.low %vm129, %vm129
  %vm226 = vmpackc.low %vm130, %vm130
  %vm227 = vmpackc.low %vm131, %vm131
  %vm228 = vmpackc.low %vm132, %vm132
  %vm229 = vmpackc.low %vm133, %vm133
  %vm230 = vmpackc.low %vm134, %vm134
  %vm231 = vmpackc.low %vm135, %vm135
  %vm232 = vmpackc.low %vm136, %vm136
  %vm233 = vmpackc.low %vm137, %vm137
  %vm234 = vmpackc.low %vm138, %vm138
  %vm235 = vmpackc.low %vm139, %vm139
  %vm236 = vmpackc.low %vm140, %vm140
  %vm237 = vmpackc.low %vm141, %vm141
  %vm238 = vmpackc.low %vm142, %vm142
  %vm239 = vmpackc.low %vm143, %vm143
  %vm240 = vmpackc.low %vm144, %vm144
  %vm241 = vmpackc.low %vm145, %vm145
  %vm242 = vmpackc.low %vm146, %vm146
  %vm243 = vmpackc.low %vm147, %vm147
  %vm244 = vmpackc.low %vm148, %vm148
  %v245 = vsel %vm213, %v53, %v181
  %v246 = vsel %vm214, %v54, %v182
  %v247 = vsel %vm215, %v55, %v183
  %v248 = vsel %vm216, %v56, %v184
  %v249 = vsel %vm217, %v57, %v185
  %v250 = vsel %vm218, %v58, %v186
  %v251 = vsel %vm219, %v59, %v187
  %v252 = vsel %vm220, %v60, %v188
  %v253 = vsel %vm221, %v61, %v189
  %v254 = vsel %vm222, %v62, %v190
  %v255 = vsel %vm223, %v63, %v191
  %v256 = vsel %vm224, %v64, %v192
  %v257 = vsel %vm225, %v65, %v193
  %v258 = vsel %vm226, %v66, %v194
  %v259 = vsel %vm227, %v67, %v195
  %v260 = vsel %vm228, %v68, %v196
  %v261 = vsel %vm229, %v69, %v197
  %v262 = vsel %vm230, %v70, %v198
  %v263 = vsel %vm231, %v71, %v199
  %v264 = vsel %vm232, %v72, %v200
  %v265 = vsel %vm233, %v73, %v201
  %v266 = vsel %vm234, %v74, %v202
  %v267 = vsel %vm235, %v75, %v203
  %v268 = vsel %vm236, %v76, %v204
  %v269 = vsel %vm237, %v77, %v205
  %v270 = vsel %vm238, %v78, %v206
  %v271 = vsel %vm239, %v79, %v207
  %v272 = vsel %vm240, %v80, %v208
  %v273 = vsel %vm241, %v81, %v209
  %v274 = vsel %vm242, %v82, %v210
  %v275 = vsel %vm243, %v83, %v211
  %v276 = vsel %vm244, %v84, %v212
  %v277 = vld [vmem:[#allocation2] sm:$0xff]
  %v278 = vld [vmem:[#allocation2 + $0x8] sm:$0xff]
  %v279 = vld [vmem:[#allocation2 + $0x10] sm:$0xff]
  %v280 = vld [vmem:[#allocation2 + $0x18] sm:$0xff]
  %v281 = vld [vmem:[#allocation2 + $0x20] sm:$0xff]
  %v282 = vld [vmem:[#allocation2 + $0x28] sm:$0xff]
  %v283 = vld [vmem:[#allocation2 + $0x30] sm:$0xff]
  %v284 = vld [vmem:[#allocation2 + $0x38] sm:$0xff]
  %v285 = vld [vmem:[#allocation2 + $0x40] sm:$0xff]
  %v286 = vld [vmem:[#allocation2 + $0x48] sm:$0xff]
  %v287 = vld [vmem:[#allocation2 + $0x50] sm:$0xff]
  %v288 = vld [vmem:[#allocation2 + $0x58] sm:$0xff]
  %v289 = vld [vmem:[#allocation2 + $0x60] sm:$0xff]
  %v290 = vld [vmem:[#allocation2 + $0x68] sm:$0xff]
  %v291 = vld [vmem:[#allocation2 + $0x70] sm:$0xff]
  %v292 = vld [vmem:[#allocation2 + $0x78] sm:$0xff]
  %v293 = vld [vmem:[#allocation2 + $0x80] sm:$0xff]
  %v294 = vld [vmem:[#allocation2 + $0x88] sm:$0xff]
  %v295 = vld [vmem:[#allocation2 + $0x90] sm:$0xff]
  %v296 = vld [vmem:[#allocation2 + $0x98] sm:$0xff]
  %v297 = vld [vmem:[#allocation2 + $0xa0] sm:$0xff]
  %v298 = vld [vmem:[#allocation2 + $0xa8] sm:$0xff]
  %v299 = vld [vmem:[#allocation2 + $0xb0] sm:$0xff]
  %v300 = vld [vmem:[#allocation2 + $0xb8] sm:$0xff]
  %v301 = vld [vmem:[#allocation2 + $0xc0] sm:$0xff]
  %v302 = vld [vmem:[#allocation2 + $0xc8] sm:$0xff]
  %v303 = vld [vmem:[#allocation2 + $0xd0] sm:$0xff]
  %v304 = vld [vmem:[#allocation2 + $0xd8] sm:$0xff]
  %v305 = vld [vmem:[#allocation2 + $0xe0] sm:$0xff]
  %v306 = vld [vmem:[#allocation2 + $0xe8] sm:$0xff]
  %v307 = vld [vmem:[#allocation2 + $0xf0] sm:$0xff]
  %v308 = vld [vmem:[#allocation2 + $0xf8] sm:$0xff]
  %v309 = vld [vmem:[%s1] sm:$0xf]
  %v310 = vld [vmem:[%s1 + $0x4] sm:$0xf]
  %v311 = vld [vmem:[%s1 + $0x8] sm:$0xf]
  %v312 = vld [vmem:[%s1 + $0xc] sm:$0xf]
  %v313 = vld [vmem:[%s1 + $0x10] sm:$0xf]
  %v314 = vld [vmem:[%s1 + $0x14] sm:$0xf]
  %v315 = vld [vmem:[%s1 + $0x18] sm:$0xf]
  %v316 = vld [vmem:[%s1 + $0x1c] sm:$0xf]
  %v317 = vld [vmem:[%s1 + $0x20] sm:$0xf]
  %v318 = vld [vmem:[%s1 + $0x24] sm:$0xf]
  %v319 = vld [vmem:[%s1 + $0x28] sm:$0xf]
  %v320 = vld [vmem:[%s1 + $0x2c] sm:$0xf]
  %v321 = vld [vmem:[%s1 + $0x30] sm:$0xf]
  %v322 = vld [vmem:[%s1 + $0x34] sm:$0xf]
  %v323 = vld [vmem:[%s1 + $0x38] sm:$0xf]
  %v324 = vld [vmem:[%s1 + $0x3c] sm:$0xf]
  %v357 = vunpack.c.l.b16 %v245
  %v358 = vunpack.c.l.b16 %v246
  %v359 = vunpack.c.l.b16 %v247
  %v360 = vunpack.c.l.b16 %v248
  %v361 = vunpack.c.l.b16 %v249
  %v362 = vunpack.c.l.b16 %v250
  %v363 = vunpack.c.l.b16 %v251
  %v364 = vunpack.c.l.b16 %v252
  %v365 = vunpack.c.l.b16 %v253
  %v366 = vunpack.c.l.b16 %v254
  %v367 = vunpack.c.l.b16 %v255
  %v368 = vunpack.c.l.b16 %v256
  %v369 = vunpack.c.l.b16 %v257
  %v370 = vunpack.c.l.b16 %v258
  %v371 = vunpack.c.l.b16 %v259
  %v372 = vunpack.c.l.b16 %v260
  %v373 = vunpack.c.l.b16 %v261
  %v374 = vunpack.c.l.b16 %v262
  %v375 = vunpack.c.l.b16 %v263
  %v376 = vunpack.c.l.b16 %v264
  %v377 = vunpack.c.l.b16 %v265
  %v378 = vunpack.c.l.b16 %v266
  %v379 = vunpack.c.l.b16 %v267
  %v380 = vunpack.c.l.b16 %v268
  %v381 = vunpack.c.l.b16 %v269
  %v382 = vunpack.c.l.b16 %v270
  %v383 = vunpack.c.l.b16 %v271
  %v384 = vunpack.c.l.b16 %v272
  %v385 = vunpack.c.l.b16 %v273
  %v386 = vunpack.c.l.b16 %v274
  %v387 = vunpack.c.l.b16 %v275
  %v388 = vunpack.c.l.b16 %v276
  %v389 = vpack.c.b16 %v358, %v357
  %v390 = vpack.c.b16 %v360, %v359
  %v391 = vpack.c.b16 %v362, %v361
  %v392 = vpack.c.b16 %v364, %v363
  %v393 = vpack.c.b16 %v366, %v365
  %v394 = vpack.c.b16 %v368, %v367
  %v395 = vpack.c.b16 %v370, %v369
  %v396 = vpack.c.b16 %v372, %v371
  %v397 = vpack.c.b16 %v374, %v373
  %v398 = vpack.c.b16 %v376, %v375
  %v399 = vpack.c.b16 %v378, %v377
  %v400 = vpack.c.b16 %v380, %v379
  %v401 = vpack.c.b16 %v382, %v381
  %v402 = vpack.c.b16 %v384, %v383
  %v403 = vpack.c.b16 %v386, %v385
  %v404 = vpack.c.b16 %v388, %v387
  %v437 = vunpack.c.l.b16 %v309
  %v438 = vunpack.c.l.b16 %v310
  %v439 = vunpack.c.l.b16 %v311
  %v440 = vunpack.c.l.b16 %v312
  %v441 = vunpack.c.l.b16 %v313
  %v442 = vunpack.c.l.b16 %v314
  %v443 = vunpack.c.l.b16 %v315
  %v444 = vunpack.c.l.b16 %v316
  %v445 = vunpack.c.l.b16 %v317
  %v446 = vunpack.c.l.b16 %v318
  %v447 = vunpack.c.l.b16 %v319
  %v448 = vunpack.c.l.b16 %v320
  %v449 = vunpack.c.l.b16 %v321
  %v450 = vunpack.c.l.b16 %v322
  %v451 = vunpack.c.l.b16 %v323
  %v452 = vunpack.c.l.b16 %v324
  %v453 = vpack.c.b16 %v438, %v437
  %v454 = vpack.c.b16 %v440, %v439
  %v455 = vpack.c.b16 %v442, %v441
  %v456 = vpack.c.b16 %v444, %v443
  %v457 = vpack.c.b16 %v446, %v445
  %v458 = vpack.c.b16 %v448, %v447
  %v459 = vpack.c.b16 %v450, %v449
  %v460 = vpack.c.b16 %v452, %v451
  %469 = vmatpush.bf16.msra.mxu0 %v460
  %470 = vmatpush.bf16.msra.mxu0 %v459
  %471 = vmatpush.bf16.msra.mxu0 %v458
  %472 = vmatpush.bf16.msra.mxu0 %v457
  %473 = vmatpush.bf16.msra.mxu0 %v456
  %474 = vmatpush.bf16.msra.mxu0 %v455
  %475 = vmatpush.bf16.msra.mxu0 %v454
  %476 = vmatpush.bf16.msra.mxu0 %v453
  %477 = vmatmul.bf16.gmra.mxu0 %v389
  %v478 = vpop.f32.mrf.mxu0
  %v479 = vadd.f32 0.0, %v478
  %v480 = vpop.f32.mrf.mxu0
  %v481 = vadd.f32 0.0, %v480
  %482 = vmatmul.bf16.gmra.mxu0 %v390
  %v483 = vpop.f32.mrf.mxu0
  %v484 = vadd.f32 0.0, %v483
  %v485 = vpop.f32.mrf.mxu0
  %v486 = vadd.f32 0.0, %v485
  %487 = vmatmul.bf16.gmra.mxu0 %v391
  %v488 = vpop.f32.mrf.mxu0
  %v489 = vadd.f32 0.0, %v488
  %v490 = vpop.f32.mrf.mxu0
  %v491 = vadd.f32 0.0, %v490
  %492 = vmatmul.bf16.gmra.mxu0 %v392
  %v493 = vpop.f32.mrf.mxu0
  %v494 = vadd.f32 0.0, %v493
  %v495 = vpop.f32.mrf.mxu0
  %v496 = vadd.f32 0.0, %v495
  %497 = vmatmul.bf16.gmra.mxu0 %v393
  %v498 = vpop.f32.mrf.mxu0
  %v499 = vadd.f32 0.0, %v498
  %v500 = vpop.f32.mrf.mxu0
  %v501 = vadd.f32 0.0, %v500
  %502 = vmatmul.bf16.gmra.mxu0 %v394
  %v503 = vpop.f32.mrf.mxu0
  %v504 = vadd.f32 0.0, %v503
  %v505 = vpop.f32.mrf.mxu0
  %v506 = vadd.f32 0.0, %v505
  %507 = vmatmul.bf16.gmra.mxu0 %v395
  %v508 = vpop.f32.mrf.mxu0
  %v509 = vadd.f32 0.0, %v508
  %v510 = vpop.f32.mrf.mxu0
  %v511 = vadd.f32 0.0, %v510
  %512 = vmatmul.bf16.gmra.mxu0 %v396
  %v513 = vpop.f32.mrf.mxu0
  %v514 = vadd.f32 0.0, %v513
  %v515 = vpop.f32.mrf.mxu0
  %v516 = vadd.f32 0.0, %v515
  %517 = vmatmul.bf16.gmra.mxu0 %v397
  %v518 = vpop.f32.mrf.mxu0
  %v519 = vadd.f32 0.0, %v518
  %v520 = vpop.f32.mrf.mxu0
  %v521 = vadd.f32 0.0, %v520
  %522 = vmatmul.bf16.gmra.mxu0 %v398
  %v523 = vpop.f32.mrf.mxu0
  %v524 = vadd.f32 0.0, %v523
  %v525 = vpop.f32.mrf.mxu0
  %v526 = vadd.f32 0.0, %v525
  %527 = vmatmul.bf16.gmra.mxu0 %v399
  %v528 = vpop.f32.mrf.mxu0
  %v529 = vadd.f32 0.0, %v528
  %v530 = vpop.f32.mrf.mxu0
  %v531 = vadd.f32 0.0, %v530
  %532 = vmatmul.bf16.gmra.mxu0 %v400
  %v533 = vpop.f32.mrf.mxu0
  %v534 = vadd.f32 0.0, %v533
  %v535 = vpop.f32.mrf.mxu0
  %v536 = vadd.f32 0.0, %v535
  %537 = vmatmul.bf16.gmra.mxu0 %v401
  %v538 = vpop.f32.mrf.mxu0
  %v539 = vadd.f32 0.0, %v538
  %v540 = vpop.f32.mrf.mxu0
  %v541 = vadd.f32 0.0, %v540
  %542 = vmatmul.bf16.gmra.mxu0 %v402
  %v543 = vpop.f32.mrf.mxu0
  %v544 = vadd.f32 0.0, %v543
  %v545 = vpop.f32.mrf.mxu0
  %v546 = vadd.f32 0.0, %v545
  %547 = vmatmul.bf16.gmra.mxu0 %v403
  %v548 = vpop.f32.mrf.mxu0
  %v549 = vadd.f32 0.0, %v548
  %v550 = vpop.f32.mrf.mxu0
  %v551 = vadd.f32 0.0, %v550
  %552 = vmatmul.bf16.gmra.mxu0 %v404
  %v553 = vpop.f32.mrf.mxu0
  %v554 = vadd.f32 0.0, %v553
  %v555 = vpop.f32.mrf.mxu0
  %v556 = vadd.f32 0.0, %v555
  %557 = vdwg.mxu0
  %v558 = vadd.f32 %v277, %v479
  %v559 = vadd.f32 %v278, %v481
  %v560 = vadd.f32 %v279, %v484
  %v561 = vadd.f32 %v280, %v486
  %v562 = vadd.f32 %v281, %v489
  %v563 = vadd.f32 %v282, %v491
  %v564 = vadd.f32 %v283, %v494
  %v565 = vadd.f32 %v284, %v496
  %v566 = vadd.f32 %v285, %v499
  %v567 = vadd.f32 %v286, %v501
  %v568 = vadd.f32 %v287, %v504
  %v569 = vadd.f32 %v288, %v506
  %v570 = vadd.f32 %v289, %v509
  %v571 = vadd.f32 %v290, %v511
  %v572 = vadd.f32 %v291, %v514
  %v573 = vadd.f32 %v292, %v516
  %v574 = vadd.f32 %v293, %v519
  %v575 = vadd.f32 %v294, %v521
  %v576 = vadd.f32 %v295, %v524
  %v577 = vadd.f32 %v296, %v526
  %v578 = vadd.f32 %v297, %v529
  %v579 = vadd.f32 %v298, %v531
  %v580 = vadd.f32 %v299, %v534
  %v581 = vadd.f32 %v300, %v536
  %v582 = vadd.f32 %v301, %v539
  %v583 = vadd.f32 %v302, %v541
  %v584 = vadd.f32 %v303, %v544
  %v585 = vadd.f32 %v304, %v546
  %v586 = vadd.f32 %v305, %v549
  %v587 = vadd.f32 %v306, %v551
  %v588 = vadd.f32 %v307, %v554
  %v589 = vadd.f32 %v308, %v556
  %590 = vst [vmem:[#allocation2] sm:$0xff] %v558
  %591 = vst [vmem:[#allocation2 + $0x8] sm:$0xff] %v559
  %592 = vst [vmem:[#allocation2 + $0x10] sm:$0xff] %v560
  %593 = vst [vmem:[#allocation2 + $0x18] sm:$0xff] %v561
  %594 = vst [vmem:[#allocation2 + $0x20] sm:$0xff] %v562
  %595 = vst [vmem:[#allocation2 + $0x28] sm:$0xff] %v563
  %596 = vst [vmem:[#allocation2 + $0x30] sm:$0xff] %v564
  %597 = vst [vmem:[#allocation2 + $0x38] sm:$0xff] %v565
  %598 = vst [vmem:[#allocation2 + $0x40] sm:$0xff] %v566
  %599 = vst [vmem:[#allocation2 + $0x48] sm:$0xff] %v567
  %600 = vst [vmem:[#allocation2 + $0x50] sm:$0xff] %v568
  %601 = vst [vmem:[#allocation2 + $0x58] sm:$0xff] %v569
  %602 = vst [vmem:[#allocation2 + $0x60] sm:$0xff] %v570
  %603 = vst [vmem:[#allocation2 + $0x68] sm:$0xff] %v571
  %604 = vst [vmem:[#allocation2 + $0x70] sm:$0xff] %v572
  %605 = vst [vmem:[#allocation2 + $0x78] sm:$0xff] %v573
  %606 = vst [vmem:[#allocation2 + $0x80] sm:$0xff] %v574
  %607 = vst [vmem:[#allocation2 + $0x88] sm:$0xff] %v575
  %608 = vst [vmem:[#allocation2 + $0x90] sm:$0xff] %v576
  %609 = vst [vmem:[#allocation2 + $0x98] sm:$0xff] %v577
  %610 = vst [vmem:[#allocation2 + $0xa0] sm:$0xff] %v578
  %611 = vst [vmem:[#allocation2 + $0xa8] sm:$0xff] %v579
  %612 = vst [vmem:[#allocation2 + $0xb0] sm:$0xff] %v580
  %613 = vst [vmem:[#allocation2 + $0xb8] sm:$0xff] %v581
  %614 = vst [vmem:[#allocation2 + $0xc0] sm:$0xff] %v582
  %615 = vst [vmem:[#allocation2 + $0xc8] sm:$0xff] %v583
  %616 = vst [vmem:[#allocation2 + $0xd0] sm:$0xff] %v584
  %617 = vst [vmem:[#allocation2 + $0xd8] sm:$0xff] %v585
  %618 = vst [vmem:[#allocation2 + $0xe0] sm:$0xff] %v586
  %619 = vst [vmem:[#allocation2 + $0xe8] sm:$0xff] %v587
  %620 = vst [vmem:[#allocation2 + $0xf0] sm:$0xff] %v588
  %621 = vst [vmem:[#allocation2 + $0xf8] sm:$0xff] %v589
  // Predicated region
  $region22: #{_lambda_.29} parent=0 // pred_check
    %p622 = pneg %p17
  $region23: #{_lambda_.29} parent=0 // pred_check_branch
    %624 = sbr.rel (%p622) target = $region25
  $region24: #{_lambda_.29} parent=0 // pred_region
    %v625 = vld [vmem:[#allocation2] sm:$0xff]
    %v626 = vld [vmem:[#allocation2 + $0x8] sm:$0xff]
    %v627 = vld [vmem:[#allocation2 + $0x10] sm:$0xff]
    %v628 = vld [vmem:[#allocation2 + $0x18] sm:$0xff]
    %v629 = vld [vmem:[#allocation2 + $0x20] sm:$0xff]
    %v630 = vld [vmem:[#allocation2 + $0x28] sm:$0xff]
    %v631 = vld [vmem:[#allocation2 + $0x30] sm:$0xff]
    %v632 = vld [vmem:[#allocation2 + $0x38] sm:$0xff]
    %v633 = vld [vmem:[#allocation2 + $0x40] sm:$0xff]
    %v634 = vld [vmem:[#allocation2 + $0x48] sm:$0xff]
    %v635 = vld [vmem:[#allocation2 + $0x50] sm:$0xff]
    %v636 = vld [vmem:[#allocation2 + $0x58] sm:$0xff]
    %v637 = vld [vmem:[#allocation2 + $0x60] sm:$0xff]
    %v638 = vld [vmem:[#allocation2 + $0x68] sm:$0xff]
    %v639 = vld [vmem:[#allocation2 + $0x70] sm:$0xff]
    %v640 = vld [vmem:[#allocation2 + $0x78] sm:$0xff]
    %v641 = vld [vmem:[#allocation2 + $0x80] sm:$0xff]
    %v642 = vld [vmem:[#allocation2 + $0x88] sm:$0xff]
    %v643 = vld [vmem:[#allocation2 + $0x90] sm:$0xff]
    %v644 = vld [vmem:[#allocation2 + $0x98] sm:$0xff]
    %v645 = vld [vmem:[#allocation2 + $0xa0] sm:$0xff]
    %v646 = vld [vmem:[#allocation2 + $0xa8] sm:$0xff]
    %v647 = vld [vmem:[#allocation2 + $0xb0] sm:$0xff]
    %v648 = vld [vmem:[#allocation2 + $0xb8] sm:$0xff]
    %v649 = vld [vmem:[#allocation2 + $0xc0] sm:$0xff]
    %v650 = vld [vmem:[#allocation2 + $0xc8] sm:$0xff]
    %v651 = vld [vmem:[#allocation2 + $0xd0] sm:$0xff]
    %v652 = vld [vmem:[#allocation2 + $0xd8] sm:$0xff]
    %v653 = vld [vmem:[#allocation2 + $0xe0] sm:$0xff]
    %v654 = vld [vmem:[#allocation2 + $0xe8] sm:$0xff]
    %v655 = vld [vmem:[#allocation2 + $0xf0] sm:$0xff]
    %v656 = vld [vmem:[#allocation2 + $0xf8] sm:$0xff]
    %v657 = vld [vmem:[%s2] sm:$0x1]
    %v659 = vperm.slane %v657, 0
    %v661 = vadd.f32 %v625, %v659
    %v662 = vadd.f32 %v626, %v659
    %v663 = vadd.f32 %v627, %v659
    %v664 = vadd.f32 %v628, %v659
    %v665 = vadd.f32 %v629, %v659
    %v666 = vadd.f32 %v630, %v659
    %v667 = vadd.f32 %v631, %v659
    %v668 = vadd.f32 %v632, %v659
    %v669 = vadd.f32 %v633, %v659
    %v670 = vadd.f32 %v634, %v659
    %v671 = vadd.f32 %v635, %v659
    %v672 = vadd.f32 %v636, %v659
    %v673 = vadd.f32 %v637, %v659
    %v674 = vadd.f32 %v638, %v659
    %v675 = vadd.f32 %v639, %v659
    %v676 = vadd.f32 %v640, %v659
    %v677 = vadd.f32 %v641, %v659
    %v678 = vadd.f32 %v642, %v659
    %v679 = vadd.f32 %v643, %v659
    %v680 = vadd.f32 %v644, %v659
    %v681 = vadd.f32 %v645, %v659
    %v682 = vadd.f32 %v646, %v659
    %v683 = vadd.f32 %v647, %v659
    %v684 = vadd.f32 %v648, %v659
    %v685 = vadd.f32 %v649, %v659
    %v686 = vadd.f32 %v650, %v659
    %v687 = vadd.f32 %v651, %v659
    %v688 = vadd.f32 %v652, %v659
    %v689 = vadd.f32 %v653, %v659
    %v690 = vadd.f32 %v654, %v659
    %v691 = vadd.f32 %v655, %v659
    %v692 = vadd.f32 %v656, %v659
    %v693 = vld [vmem:[%s3] sm:$0xff]
    %v694 = vld [vmem:[%s3 + $0x8] sm:$0xff]
    %v695 = vld [vmem:[%s3 + $0x10] sm:$0xff]
    %v696 = vld [vmem:[%s3 + $0x18] sm:$0xff]
    %v697 = vld [vmem:[%s3 + $0x20] sm:$0xff]
    %v698 = vld [vmem:[%s3 + $0x28] sm:$0xff]
    %v699 = vld [vmem:[%s3 + $0x30] sm:$0xff]
    %v700 = vld [vmem:[%s3 + $0x38] sm:$0xff]
    %v701 = vld [vmem:[%s3 + $0x40] sm:$0xff]
    %v702 = vld [vmem:[%s3 + $0x48] sm:$0xff]
    %v703 = vld [vmem:[%s3 + $0x50] sm:$0xff]
    %v704 = vld [vmem:[%s3 + $0x58] sm:$0xff]
    %v705 = vld [vmem:[%s3 + $0x60] sm:$0xff]
    %v706 = vld [vmem:[%s3 + $0x68] sm:$0xff]
    %v707 = vld [vmem:[%s3 + $0x70] sm:$0xff]
    %v708 = vld [vmem:[%s3 + $0x78] sm:$0xff]
    %v709 = vld [vmem:[%s3 + $0x80] sm:$0xff]
    %v710 = vld [vmem:[%s3 + $0x88] sm:$0xff]
    %v711 = vld [vmem:[%s3 + $0x90] sm:$0xff]
    %v712 = vld [vmem:[%s3 + $0x98] sm:$0xff]
    %v713 = vld [vmem:[%s3 + $0xa0] sm:$0xff]
    %v714 = vld [vmem:[%s3 + $0xa8] sm:$0xff]
    %v715 = vld [vmem:[%s3 + $0xb0] sm:$0xff]
    %v716 = vld [vmem:[%s3 + $0xb8] sm:$0xff]
    %v717 = vld [vmem:[%s3 + $0xc0] sm:$0xff]
    %v718 = vld [vmem:[%s3 + $0xc8] sm:$0xff]
    %v719 = vld [vmem:[%s3 + $0xd0] sm:$0xff]
    %v720 = vld [vmem:[%s3 + $0xd8] sm:$0xff]
    %v721 = vld [vmem:[%s3 + $0xe0] sm:$0xff]
    %v722 = vld [vmem:[%s3 + $0xe8] sm:$0xff]
    %v723 = vld [vmem:[%s3 + $0xf0] sm:$0xff]
    %v724 = vld [vmem:[%s3 + $0xf8] sm:$0xff]
    %v725 = vadd.f32 %v661, %v693
    %v726 = vadd.f32 %v662, %v694
    %v727 = vadd.f32 %v663, %v695
    %v728 = vadd.f32 %v664, %v696
    %v729 = vadd.f32 %v665, %v697
    %v730 = vadd.f32 %v666, %v698
    %v731 = vadd.f32 %v667, %v699
    %v732 = vadd.f32 %v668, %v700
    %v733 = vadd.f32 %v669, %v701
    %v734 = vadd.f32 %v670, %v702
    %v735 = vadd.f32 %v671, %v703
    %v736 = vadd.f32 %v672, %v704
    %v737 = vadd.f32 %v673, %v705
    %v738 = vadd.f32 %v674, %v706
    %v739 = vadd.f32 %v675, %v707
    %v740 = vadd.f32 %v676, %v708
    %v741 = vadd.f32 %v677, %v709
    %v742 = vadd.f32 %v678, %v710
    %v743 = vadd.f32 %v679, %v711
    %v744 = vadd.f32 %v680, %v712
    %v745 = vadd.f32 %v681, %v713
    %v746 = vadd.f32 %v682, %v714
    %v747 = vadd.f32 %v683, %v715
    %v748 = vadd.f32 %v684, %v716
    %v749 = vadd.f32 %v685, %v717
    %v750 = vadd.f32 %v686, %v718
    %v751 = vadd.f32 %v687, %v719
    %v752 = vadd.f32 %v688, %v720
    %v753 = vadd.f32 %v689, %v721
    %v754 = vadd.f32 %v690, %v722
    %v755 = vadd.f32 %v691, %v723
    %v756 = vadd.f32 %v692, %v724
    %757 = vst [vmem:[%s4] sm:$0xff] %v725
    %758 = vst [vmem:[%s4 + $0x8] sm:$0xff] %v726
    %759 = vst [vmem:[%s4 + $0x10] sm:$0xff] %v727
    %760 = vst [vmem:[%s4 + $0x18] sm:$0xff] %v728
    %761 = vst [vmem:[%s4 + $0x20] sm:$0xff] %v729
    %762 = vst [vmem:[%s4 + $0x28] sm:$0xff] %v730
    %763 = vst [vmem:[%s4 + $0x30] sm:$0xff] %v731
    %764 = vst [vmem:[%s4 + $0x38] sm:$0xff] %v732
    %765 = vst [vmem:[%s4 + $0x40] sm:$0xff] %v733
    %766 = vst [vmem:[%s4 + $0x48] sm:$0xff] %v734
    %767 = vst [vmem:[%s4 + $0x50] sm:$0xff] %v735
    %768 = vst [vmem:[%s4 + $0x58] sm:$0xff] %v736
    %769 = vst [vmem:[%s4 + $0x60] sm:$0xff] %v737
    %770 = vst [vmem:[%s4 + $0x68] sm:$0xff] %v738
    %771 = vst [vmem:[%s4 + $0x70] sm:$0xff] %v739
    %772 = vst [vmem:[%s4 + $0x78] sm:$0xff] %v740
    %773 = vst [vmem:[%s4 + $0x80] sm:$0xff] %v741
    %774 = vst [vmem:[%s4 + $0x88] sm:$0xff] %v742
    %775 = vst [vmem:[%s4 + $0x90] sm:$0xff] %v743
    %776 = vst [vmem:[%s4 + $0x98] sm:$0xff] %v744
    %777 = vst [vmem:[%s4 + $0xa0] sm:$0xff] %v745
    %778 = vst [vmem:[%s4 + $0xa8] sm:$0xff] %v746
    %779 = vst [vmem:[%s4 + $0xb0] sm:$0xff] %v747
    %780 = vst [vmem:[%s4 + $0xb8] sm:$0xff] %v748
    %781 = vst [vmem:[%s4 + $0xc0] sm:$0xff] %v749
    %782 = vst [vmem:[%s4 + $0xc8] sm:$0xff] %v750
    %783 = vst [vmem:[%s4 + $0xd0] sm:$0xff] %v751
    %784 = vst [vmem:[%s4 + $0xd8] sm:$0xff] %v752
    %785 = vst [vmem:[%s4 + $0xe0] sm:$0xff] %v753
    %786 = vst [vmem:[%s4 + $0xe8] sm:$0xff] %v754
    %787 = vst [vmem:[%s4 + $0xf0] sm:$0xff] %v755
    %788 = vst [vmem:[%s4 + $0xf8] sm:$0xff] %v756
  $region25: #{_lambda_.29} parent=0 // pred_fallthru
    _
  // Predicated region
  $region26: #{_lambda_.29} parent=0 // pred_check
    _
  $region27: #{_lambda_.29} parent=0 // pred_check_branch
    %790 = sbr.rel (0) target = $region29
  $region28: #{_lambda_.29} parent=0 // pred_region
    _
  $region29: #{_lambda_.29} parent=0 // pred_fallthru
    _
  // Predicated region
  $region30: #{_lambda_.29} parent=0 // pred_check
    _
  $region31: #{_lambda_.29} parent=0 // pred_check_branch
    %792 = sbr.rel (0) target = $region33
  $region32: #{_lambda_.29} parent=0 // pred_region
    _
  $region33: #{_lambda_.29} parent=0 // pred_fallthru
    _

// kernel: _lambda_.32
$region0: #{_lambda_.32}
  #allocation0 [shape = 'u32[]', space=smem, size = 0x4, offset = 0x4, fixed_abs, tag = 'smem constant byte address 0x4 - core index']
  #allocation1 [shape = 'u32[72,128]{1,0:T(1,128)}', space=vmem, size = 0x9000, scoped, tag = 'internal scratch']
  %s0 = inlined_call_operand.vmem [shape: f32[8,128], index: 0, kind: input, shape index: {}]
  %s1 = inlined_call_operand.vmem [shape: f32[8,128], index: 1, kind: input, shape index: {}]
  %s2 = inlined_call_operand.vmem [shape: f32[8,128], index: 2, kind: input, shape index: {}]
  %s3 = inlined_call_operand.vmem [shape: f32[8,128], index: 3, kind: output, shape index: {0}]
  %s4 = inlined_call_operand.vmem [shape: f32[8,128], index: 4, kind: output, shape index: {1}]
  %5 = xla_tuple %s3, %s4
  %s6 = sld [smem:[#allocation0]]
  $region30: #{_lambda_.32} parent=0
    _
  %s8 = ssub.s32 1, %s6
  %s9 = scalar_select 0, %s8, %s6
  // Predicated region
  $region2: #{_lambda_.32} parent=0 // pred_check
    _
  $region3: #{_lambda_.32} parent=0 // pred_check_branch
    %11 = sbr.rel (0) target = $region5
  $region4: #{_lambda_.32} parent=0 // pred_region
    _
  $region5: #{_lambda_.32} parent=0 // pred_fallthru
    _
  // Predicated region
  $region6: #{_lambda_.32} parent=0 // pred_check
    _
  $region7: #{_lambda_.32} parent=0 // pred_check_branch
    %13 = sbr.rel (0) target = $region9
  $region8: #{_lambda_.32} parent=0 // pred_region
    _
  $region9: #{_lambda_.32} parent=0 // pred_fallthru
    _
  // Predicated region
  $region10: #{_lambda_.32} parent=0 // pred_check
    _
  $region11: #{_lambda_.32} parent=0 // pred_check_branch
    %15 = sbr.rel (0) target = $region13
  $region12: #{_lambda_.32} parent=0 // pred_region
    _
  $region13: #{_lambda_.32} parent=0 // pred_fallthru
    _
  %v16 = vld [vmem:[%s0] sm:$0xff]
  %vm17 = vcmp.gt.f32.partialorder %v16, 20.0
  %v18 = vmin.f32 %v16, 20.0
  %v19 = vmul.f32 %v18, 1.442695
  %v20 = vpow.pop %v19
  %v21 = vadd.f32 %v20, 1.0
  %v22 = vlog2.pop %v21
  %v23 = vmul.f32 %v22, 0.6931472
  %v24 = vmul.f32 -0.5, %v20
  %v25 = vadd.f32 %v24, 1.0
  %v26 = vmul.f32 %v25, %v20
  %v27 = vand.u32 2147483647, %v20
  %vm28 = vcmp.lt.f32.partialorder %v27, 0.0004427343
  %v29 = vsel %vm28, %v26, %v23
  %v30 = vsel %vm17, %v16, %v29
  %v31 = vld [vmem:[%s1] sm:$0xff]
  %v32 = vmul.f32 %v30, %v31
  %33 = vst [vmem:[%s3] sm:$0xff] %v32
  %v34 = vld [vmem:[%s2] sm:$0xff]
  %v35 = vmul.f32 %v30, %v34
  %36 = vst [vmem:[%s4] sm:$0xff] %v35
  // Predicated region
  $region14: #{_lambda_.32} parent=0 // pred_check
    _
  $region15: #{_lambda_.32} parent=0 // pred_check_branch
    %38 = sbr.rel (0) target = $region17
  $region16: #{_lambda_.32} parent=0 // pred_region
    _
  $region17: #{_lambda_.32} parent=0 // pred_fallthru
    _
  // Predicated region
  $region18: #{_lambda_.32} parent=0 // pred_check
    _
  $region19: #{_lambda_.32} parent=0 // pred_check_branch
    %40 = sbr.rel (0) target = $region21
  $region20: #{_lambda_.32} parent=0 // pred_region
    _
  $region21: #{_lambda_.32} parent=0 // pred_fallthru
    _
  // Predicated region
  $region22: #{_lambda_.32} parent=0 // pred_check
    _
  $region23: #{_lambda_.32} parent=0 // pred_check_branch
    %42 = sbr.rel (0) target = $region25
  $region24: #{_lambda_.32} parent=0 // pred_region
    _
  $region25: #{_lambda_.32} parent=0 // pred_fallthru
    _
  // Predicated region
  $region26: #{_lambda_.32} parent=0 // pred_check
    _
  $region27: #{_lambda_.32} parent=0 // pred_check_branch
    %44 = sbr.rel (0) target = $region29
  $region28: #{_lambda_.32} parent=0 // pred_region
    _
  $region29: #{_lambda_.32} parent=0 // pred_fallthru
    _

</llo_original>
